<compile_context>
chip_gen: v5e
topology: v5e:2x2
jax: 0.10.0
libtpu: 0.0.40
codegen_flags: <defaults>
</compile_context>

<pallas_src>
import jax
import jax.numpy as jnp
from jax import lax
from jax.experimental import pallas as pl
from jax.experimental.pallas import tpu as pltpu

NEG_INF = -1e9


def _round_up(x, m):
    return (x + m - 1) // m * m


def _vmem_capacity_bytes():
    try:
        info = pltpu.get_tpu_info()
        for attr in ("vmem_capacity_bytes", "vmem_bytes", "vmem_size_bytes"):
            v = getattr(info, attr, None)
            if v:
                return int(v)
    except Exception:
        pass
    return 64 * 1024 * 1024  # conservative default (v7x per-TC VMEM)


# ----------------------------- fused Pallas kernel ---------------------------

def crf_fused_kernel(x_ref, lab_ref, mask_ref, w_ref, b_ref, start_ref, end_ref,
                     trans_ref, llh_ref, emis_ref):
    # x_ref    : (Bb, S, Dp)  batch-major features for this batch block (Dp lane-dense)
    # lab_ref  : (S, Bb, 1)   int32 gold tags (time-major)
    # mask_ref : (S, Bb, 1)   float mask (1.0 = valid token)
    # w_ref    : (Dp, Tp)     emission weights (padded rows/cols are 0)
    # b_ref    : (1, Tp)      emission bias   (padded = 0)
    # start_ref/end_ref: (1, Tp)   (padded = -1e9)
    # trans_ref: (Tp, Tp)     transitions[prev, cur] (padded = -1e9)
    # llh_ref  : (Bb, 128)    per-row log-likelihood broadcast across lanes (output)
    # emis_ref : (S, Bb, Tp)  time-major VMEM scratch for emissions
    Bb, S, Dp = x_ref.shape
    Tp = w_ref.shape[1]
    HIGH = lax.Precision.HIGHEST

    w = w_ref[...]
    bias = b_ref[...]

    # ---- emission projection on the MXU, streamed per time-chunk into the scratch ----
    # (never holds a full (S,Bb,Tp) value live; transpose to time-major uses the XLU)
    CHUNK = S if S <= 64 else 64
    for c0 in range(0, S, CHUNK):
        cs = min(CHUNK, S - c0)
        xb = x_ref[:, c0:c0 + cs, :]                                   # (Bb, cs, Dp)
        e2 = jnp.dot(xb.reshape(Bb * cs, Dp), w,
                     preferred_element_type=jnp.float32, precision=HIGH) + bias
        emis_ref[c0:c0 + cs] = jnp.transpose(e2.reshape(Bb, cs, Tp), (1, 0, 2))

    start = start_ref[...]          # (1, Tp)
    end = end_ref[...]              # (1, Tp)
    trans = trans_ref[...]          # (Tp, Tp)

    # Stabilised exp(transitions): subtract per-column max, add it back after the log.
    # Padded columns end up ~ -1e9 (finite) instead of -inf -> no inf/NaN hazards.
    col_max = jnp.max(trans, axis=0, keepdims=True)                    # (1, Tp)
    exp_trans = jnp.exp(trans - col_max)                               # (Tp, Tp)

    tag_iota = lax.broadcasted_iota(jnp.int32, (Bb, Tp), 1)            # hoisted

    # ---- init at t = 0 (torchcrf assumes mask[:, 0] == True) ----
    emis0 = emis_ref[0]                                                # (Bb, Tp)
    oh0 = (tag_iota == lab_ref[0]).astype(jnp.float32)                 # (Bb, Tp)
    alpha0 = start + emis0                                             # (Bb, Tp)
    score0 = jnp.sum((start + emis0) * oh0, axis=1, keepdims=True)     # (Bb, 1)

    def body(i, carry):
        alpha, score, last_oh = carry
        emis_i = emis_ref[i]                                           # (Bb, Tp)
        m_i = mask_ref[i]                                              # (Bb, 1)
        cur_oh = (tag_iota == lab_ref[i]).astype(jnp.float32)          # (Bb, Tp)

        # ---- gold-path (numerator), fused into the latency-bound loop (free filler) ----
        emit_t = jnp.sum(emis_i * cur_oh, axis=1, keepdims=True)       # (Bb, 1)
        t_row = jnp.dot(last_oh, trans,
                        preferred_element_type=jnp.float32, precision=HIGH)  # (Bb, Tp)
        trans_t = jnp.sum(t_row * cur_oh, axis=1, keepdims=True)       # (Bb, 1)
        score = score + m_i * (emit_t + trans_t)
        last_oh = jnp.where(m_i > 0.0, cur_oh, last_oh)

        # ---- log-partition forward recursion as a scaled exp-matmul ----
        mrow = jnp.max(alpha, axis=1, keepdims=True)                   # (Bb, 1)
        e = jnp.exp(alpha - mrow)                                      # (Bb, Tp)
        s = jnp.dot(e, exp_trans,
                    preferred_element_type=jnp.float32, precision=HIGH)  # MXU
        nxt = jnp.log(s) + mrow + col_max + emis_i                     # (Bb, Tp)
        alpha = jnp.where(m_i > 0.0, nxt, alpha)
        return alpha, score, last_oh

    unroll = max(1, min(8, S - 1))
    alpha, score, last_oh = lax.fori_loop(1, S, body, (alpha0, score0, oh0),
                                          unroll=unroll)

    end_term = jnp.sum(last_oh * end, axis=1, keepdims=True)           # (Bb, 1)
    a_end = alpha + end
    mx = jnp.max(a_end, axis=1, keepdims=True)
    denom = jnp.log(jnp.sum(jnp.exp(a_end - mx), axis=1, keepdims=True)) + mx  # (Bb, 1)

    llh = score + end_term - denom                                     # (Bb, 1)
    llh_ref[...] = jnp.broadcast_to(llh, (Bb, llh_ref.shape[1]))


# ----------------------------- wrapper ---------------------------------------

@jax.jit
def crf_tagger_forward(x, labels, mask, params):
    """x: (B,S,D) f32, labels: (B,S) int32, mask: (B,S) bool -> scalar mean NLL."""
    W, b, start_t, end_t, trans = params
    B, S, D = x.shape
    T = W.shape[0]
    f32 = jnp.float32

    Tp = _round_up(T, 128)                      # lane-dense tag dimension
    Dp = _round_up(D, 128)                      # lane-dense feature (K) dimension
    CHUNK = S if S <= 64 else 64

    # ---- VMEM-aware batch-block sizing (total footprint, not just the scratch) ----
    vmem_cap = _vmem_capacity_bytes()
    vmem_budget = int(vmem_cap * 0.55)          # headroom for compiler temporaries
    vmem_limit = min(int(vmem_cap * 0.75), 112 * 1024 * 1024)

    def footprint(bblk):
        x_blk = 2 * bblk * S * Dp * 4                       # double-buffered x block
        lab_msk = 2 * 2 * S * bblk * 4                      # labels + mask blocks
        emis = S * bblk * Tp * 4                            # emission scratch
        params_b = 2 * (Dp * Tp + 3 * Tp + Tp * Tp) * 4     # W, b, start, end, trans
        out = 2 * bblk * 128 * 4
        temps = 8 * bblk * Tp * 4 + 3 * bblk * CHUNK * Tp * 4 + Tp * Tp * 4
        return x_blk + lab_msk + emis + params_b + out + temps

    B8 = _round_up(B, 8)
    cap = min(512, B8)
    if B8 >= 16:
        cap = min(cap, max(8, (B8 // 2) // 8 * 8))  # >=2 blocks: both v7x TCs get work
    bblk = cap
    while bblk > 8 and footprint(bblk) > vmem_budget:
        bblk -= 8
    B_BLK = max(8, bblk)
    B_pad = _round_up(B8, B_BLK)

    # ---- pad parameters (padded tags: -1e9 scores, 0 emissions; padded features: 0) ----
    W_pad = jnp.zeros((Dp, Tp), f32).at[:D, :T].set(W.T.astype(f32))
    b_pad = jnp.zeros((1, Tp), f32).at[:, :T].set(b.astype(f32)[None, :])
    start_pad = jnp.full((1, Tp), NEG_INF, f32).at[:, :T].set(start_t.astype(f32)[None, :])
    end_pad = jnp.full((1, Tp), NEG_INF, f32).at[:, :T].set(end_t.astype(f32)[None, :])
    trans_pad = jnp.full((Tp, Tp), NEG_INF, f32).at[:T, :T].set(trans.astype(f32))

    # ---- inputs: x stays batch-major (no HBM transpose); labels/mask are tiny ----
    pad_b = B_pad - B
    x_p = jnp.pad(x.astype(f32), ((0, pad_b), (0, 0), (0, Dp - D)))            # (Bp,S,Dp)
    lab_t = jnp.pad(labels.astype(jnp.int32).T, ((0, 0), (0, pad_b)))[:, :, None]  # (S,Bp,1)
    mask_t = jnp.pad(mask.astype(f32).T, ((0, 0), (0, pad_b)))[:, :, None]         # (S,Bp,1)

    grid = (B_pad // B_BLK,)

    llh = pl.pallas_call(
        crf_fused_kernel,
        out_shape=jax.ShapeDtypeStruct((B_pad, 128), jnp.float32),
        grid_spec=pltpu.PrefetchScalarGridSpec(
            num_scalar_prefetch=0,
            grid=grid,
            in_specs=[
                pl.BlockSpec((B_BLK, S, Dp), lambda i: (i, 0, 0)),   # x (batch-major)
                pl.BlockSpec((S, B_BLK, 1), lambda i: (0, i, 0)),    # labels
                pl.BlockSpec((S, B_BLK, 1), lambda i: (0, i, 0)),    # mask
                pl.BlockSpec((Dp, Tp), lambda i: (0, 0)),            # W
                pl.BlockSpec((1, Tp), lambda i: (0, 0)),             # bias
                pl.BlockSpec((1, Tp), lambda i: (0, 0)),             # start
                pl.BlockSpec((1, Tp), lambda i: (0, 0)),             # end
                pl.BlockSpec((Tp, Tp), lambda i: (0, 0)),            # transitions
            ],
            out_specs=pl.BlockSpec((B_BLK, 128), lambda i: (i, 0)),
            scratch_shapes=[pltpu.VMEM((S, B_BLK, Tp), jnp.float32)],
        ),
        compiler_params=pltpu.CompilerParams(
            dimension_semantics=("parallel",),       # batch axis megacore-shardable
            vmem_limit_bytes=vmem_limit,
        ),
    )(x_p, lab_t, mask_t, W_pad, b_pad, start_pad, end_pad, trans_pad)

    # reduction='mean' over the real batch rows
    return -jnp.sum(llh[:B, 0]) / B


# ----------------------------- reference (pure JAX) ---------------------------

def ref_forward(x, labels, mask, params):
    W, b, start, end, trans = params
    emis = jnp.einsum("bsd,td->bst", x, W, precision=lax.Precision.HIGHEST) + b
    emis = jnp.transpose(emis, (1, 0, 2))                               # (S,B,T)
    tags = labels.T                                                     # (S,B)
    m = mask.T.astype(jnp.float32)                                      # (S,B)
    B, S = x.shape[0], x.shape[1]
    ar = jnp.arange(B)

    score = start[tags[0]] + emis[0, ar, tags[0]]
    for i in range(1, S):
        score = score + trans[tags[i - 1], tags[i]] * m[i]
        score = score + emis[i, ar, tags[i]] * m[i]
    seq_ends = m.sum(0).astype(jnp.int32) - 1
    last_tags = tags[seq_ends, ar]
    score = score + end[last_tags]

    alpha = start[None, :] + emis[0]
    for i in range(1, S):
        nxt = jax.nn.logsumexp(
            alpha[:, :, None] + trans[None, :, :] + emis[i][:, None, :], axis=1)
        alpha = jnp.where(m[i][:, None] > 0, nxt, alpha)
    denom = jax.nn.logsumexp(alpha + end[None, :], axis=1)
    return -jnp.mean(score - denom)


# ----------------------------- main -------------------------------------------

if __name__ == "__main__":
    B, S, D, T = 2, 8, 32, 8   # batch, seq, input_dim, num_tags

    key = jax.random.PRNGKey(0)
    kx, kl, kw, kb, ks, ke, kt = jax.random.split(key, 7)

    x = jax.random.normal(kx, (B, S, D), dtype=jnp.float32)
    labels = jax.random.randint(kl, (B, S), 0, T, dtype=jnp.int32)
    lengths = jnp.array([S, 5], dtype=jnp.int32)          # first timestep always valid
    mask = jnp.arange(S)[None, :] < lengths[:, None]      # (B, S) bool

    # parameter init (shapes from nn.Linear(input_dim, num_tags) + CRF(num_tags))
    bound = 1.0 / jnp.sqrt(D)
    W = jax.random.uniform(kw, (T, D), jnp.float32, -bound, bound)
    b = jax.random.uniform(kb, (T,), jnp.float32, -bound, bound)
    start_t = jax.random.uniform(ks, (T,), jnp.float32, -0.1, 0.1)
    end_t = jax.random.uniform(ke, (T,), jnp.float32, -0.1, 0.1)
    trans = jax.random.uniform(kt, (T, T), jnp.float32, -0.1, 0.1)
    params = (W, b, start_t, end_t, trans)

    loss = crf_tagger_forward(x, labels, mask, params)
    jax.block_until_ready(loss)

    ref = ref_forward(x, labels, mask, params)
    assert jnp.allclose(loss, ref, rtol=1e-4, atol=1e-4), (loss, ref)

    # TODO(synk): CRF.decode (Viterbi best-path) is not implemented; only the training forward (NLL) is.
    print("KERNEL_OK")
</pallas_src>

<mosaic_0001>
module attributes {stable_mosaic.version = 11 : i64} {
  func.func @crf_fused_kernel(%arg0: i32, %arg1: memref<8x8x128xf32, #tpu.memory_space<vmem>>, %arg2: memref<8x8x1xi32, #tpu.memory_space<vmem>>, %arg3: memref<8x8x1xf32, #tpu.memory_space<vmem>>, %arg4: memref<128x128xf32, #tpu.memory_space<vmem>>, %arg5: memref<1x128xf32, #tpu.memory_space<vmem>>, %arg6: memref<1x128xf32, #tpu.memory_space<vmem>>, %arg7: memref<1x128xf32, #tpu.memory_space<vmem>>, %arg8: memref<128x128xf32, #tpu.memory_space<vmem>>, %arg9: memref<8x128xf32, #tpu.memory_space<vmem>>, %arg10: memref<8x8x128xf32, #tpu.memory_space<vmem>>) attributes {dimension_semantics = [#tpu.dimension_semantics<parallel>], iteration_bounds = array<i64: 1>, scalar_prefetch = 0 : i64, scratch_operands = 1 : i64, tpu.core_type = #tpu.core_type<tc>, window_params = [{transform_indices = @transform_0, window_bounds = array<i64: 8, 8, 128>}, {transform_indices = @transform_1, window_bounds = array<i64: 8, 8, 1>}, {transform_indices = @transform_2, window_bounds = array<i64: 8, 8, 1>}, {pipeline_mode = #tpu.pipeline_mode<synchronous>, transform_indices = @transform_3, window_bounds = array<i64: 128, 128>}, {pipeline_mode = #tpu.pipeline_mode<synchronous>, transform_indices = @transform_4, window_bounds = array<i64: 1, 128>}, {pipeline_mode = #tpu.pipeline_mode<synchronous>, transform_indices = @transform_5, window_bounds = array<i64: 1, 128>}, {pipeline_mode = #tpu.pipeline_mode<synchronous>, transform_indices = @transform_6, window_bounds = array<i64: 1, 128>}, {pipeline_mode = #tpu.pipeline_mode<synchronous>, transform_indices = @transform_7, window_bounds = array<i64: 128, 128>}, {transform_indices = @transform_8, window_bounds = array<i64: 8, 128>}]} {
    %c0 = arith.constant 0 : index
    %c0_0 = arith.constant 0 : index
    %0 = vector.load %arg4[%c0, %c0_0] : memref<128x128xf32, #tpu.memory_space<vmem>>, vector<128x128xf32>
    %c0_1 = arith.constant 0 : index
    %c0_2 = arith.constant 0 : index
    %1 = vector.load %arg5[%c0_1, %c0_2] : memref<1x128xf32, #tpu.memory_space<vmem>>, vector<1x128xf32>
    %c0_3 = arith.constant 0 : index
    %c0_4 = arith.constant 0 : index
    %c0_5 = arith.constant 0 : index
    %2 = vector.load %arg1[%c0_3, %c0_4, %c0_5] : memref<8x8x128xf32, #tpu.memory_space<vmem>>, vector<8x8x128xf32>
    %3 = vector.shape_cast %2 : vector<8x8x128xf32> to vector<64x128xf32>
    %cst = arith.constant dense<0.000000e+00> : vector<64x128xf32>
    %4 = tpu.matmul %3, %0, %cst {dimension_numbers = #tpu.dot_dimension_numbers<[1], [0], [0], [1], [0, 0, 1, 1], [], []>, precision = #tpu.contract_precision<fp32>} : vector<64x128xf32>, vector<128x128xf32>, vector<64x128xf32> -> vector<64x128xf32>
    %5 = vector.broadcast %1 : vector<1x128xf32> to vector<64x128xf32>
    %6 = arith.addf %4, %5 : vector<64x128xf32>
    %7 = vector.shape_cast %6 : vector<64x128xf32> to vector<8x8x128xf32>
    %8 = tpu.transpose %7, [1, 0, 2] : vector<8x8x128xf32> -> vector<8x8x128xf32>
    %c0_6 = arith.constant 0 : index
    %c0_7 = arith.constant 0 : index
    %c0_8 = arith.constant 0 : index
    %9 = vector.load %arg10[%c0_6, %c0_7, %c0_8] : memref<8x8x128xf32, #tpu.memory_space<vmem>>, vector<8x8x128xf32>
    tpu.vector_store %arg10[%c0_6, %c0_7, %c0_8], %8 {strides = array<i32>} : memref<8x8x128xf32, #tpu.memory_space<vmem>>, vector<8x8x128xf32>,
    %c0_9 = arith.constant 0 : index
    %c0_10 = arith.constant 0 : index
    %10 = vector.load %arg6[%c0_9, %c0_10] : memref<1x128xf32, #tpu.memory_space<vmem>>, vector<1x128xf32>
    %c0_11 = arith.constant 0 : index
    %c0_12 = arith.constant 0 : index
    %11 = vector.load %arg7[%c0_11, %c0_12] : memref<1x128xf32, #tpu.memory_space<vmem>>, vector<1x128xf32>
    %c0_13 = arith.constant 0 : index
    %c0_14 = arith.constant 0 : index
    %12 = vector.load %arg8[%c0_13, %c0_14] : memref<128x128xf32, #tpu.memory_space<vmem>>, vector<128x128xf32>
    %cst_15 = arith.constant dense<0xFF800000> : vector<128xf32>
    %13 = vector.multi_reduction <maximumf>, %12, %cst_15 [0] : vector<128x128xf32> to vector<128xf32>
    %14 = vector.shape_cast %13 : vector<128xf32> to vector<1x128xf32>
    %15 = vector.broadcast %14 : vector<1x128xf32> to vector<128x128xf32>
    %16 = arith.subf %12, %15 : vector<128x128xf32>
    %17 = math.exp %16 : vector<128x128xf32>
    %18 = tpu.iota {dimensions = array<i32: 1>} : vector<8x128xi32>
    %c0_16 = arith.constant 0 : index
    %c0_17 = arith.constant 0 : index
    %c0_18 = arith.constant 0 : index
    %19 = vector.load %arg10[%c0_16, %c0_17, %c0_18] : memref<8x8x128xf32, #tpu.memory_space<vmem>>, vector<1x8x128xf32>
    %20 = vector.shape_cast %19 : vector<1x8x128xf32> to vector<8x128xf32>
    %c0_19 = arith.constant 0 : index
    %c0_20 = arith.constant 0 : index
    %c0_21 = arith.constant 0 : index
    %21 = vector.load %arg2[%c0_19, %c0_20, %c0_21] : memref<8x8x1xi32, #tpu.memory_space<vmem>>, vector<1x8x1xi32>
    %22 = vector.shape_cast %21 : vector<1x8x1xi32> to vector<8x1xi32>
    %23 = vector.broadcast %22 : vector<8x1xi32> to vector<8x128xi32>
    %24 = arith.cmpi eq, %18, %23 : vector<8x128xi32>
    %25 = arith.extui %24 : vector<8x128xi1> to vector<8x128xi32>
    %26 = arith.sitofp %25 : vector<8x128xi32> to vector<8x128xf32>
    %27 = vector.broadcast %10 : vector<1x128xf32> to vector<8x128xf32>
    %28 = arith.addf %27, %20 : vector<8x128xf32>
    %29 = vector.broadcast %10 : vector<1x128xf32> to vector<8x128xf32>
    %30 = arith.addf %29, %20 : vector<8x128xf32>
    %31 = arith.mulf %30, %26 : vector<8x128xf32>
    %cst_22 = arith.constant dense<0.000000e+00> : vector<8xf32>
    %32 = vector.multi_reduction <add>, %31, %cst_22 [1] : vector<8x128xf32> to vector<8xf32>
    %33 = vector.shape_cast %32 : vector<8xf32> to vector<8x1xf32>
    %c1_i32 = arith.constant 1 : i32
    %34 = arith.index_cast %c1_i32 : i32 to index
    %c0_23 = arith.constant 0 : index
    %c0_24 = arith.constant 0 : index
    %35 = vector.load %arg10[%34, %c0_23, %c0_24] : memref<8x8x128xf32, #tpu.memory_space<vmem>>, vector<1x8x128xf32>
    %36 = vector.shape_cast %35 : vector<1x8x128xf32> to vector<8x128xf32>
    %37 = arith.index_cast %c1_i32 : i32 to index
    %c0_25 = arith.constant 0 : index
    %c0_26 = arith.constant 0 : index
    %38 = vector.load %arg3[%37, %c0_25, %c0_26] : memref<8x8x1xf32, #tpu.memory_space<vmem>>, vector<1x8x1xf32>
    %39 = vector.shape_cast %38 : vector<1x8x1xf32> to vector<8x1xf32>
    %40 = arith.index_cast %c1_i32 : i32 to index
    %c0_27 = arith.constant 0 : index
    %c0_28 = arith.constant 0 : index
    %41 = vector.load %arg2[%40, %c0_27, %c0_28] : memref<8x8x1xi32, #tpu.memory_space<vmem>>, vector<1x8x1xi32>
    %42 = vector.shape_cast %41 : vector<1x8x1xi32> to vector<8x1xi32>
    %43 = vector.broadcast %42 : vector<8x1xi32> to vector<8x128xi32>
    %44 = arith.cmpi eq, %18, %43 : vector<8x128xi32>
    %45 = arith.extui %44 : vector<8x128xi1> to vector<8x128xi32>
    %46 = arith.sitofp %45 : vector<8x128xi32> to vector<8x128xf32>
    %47 = arith.mulf %36, %46 : vector<8x128xf32>
    %cst_29 = arith.constant dense<0.000000e+00> : vector<8xf32>
    %48 = vector.multi_reduction <add>, %47, %cst_29 [1] : vector<8x128xf32> to vector<8xf32>
    %49 = vector.shape_cast %48 : vector<8xf32> to vector<8x1xf32>
    %cst_30 = arith.constant dense<0.000000e+00> : vector<8x128xf32>
    %50 = tpu.matmul %26, %12, %cst_30 {dimension_numbers = #tpu.dot_dimension_numbers<[1], [0], [0], [1], [0, 0, 1, 1], [], []>, precision = #tpu.contract_precision<fp32>} : vector<8x128xf32>, vector<128x128xf32>, vector<8x128xf32> -> vector<8x128xf32>
    %51 = arith.mulf %50, %46 : vector<8x128xf32>
    %cst_31 = arith.constant dense<0.000000e+00> : vector<8xf32>
    %52 = vector.multi_reduction <add>, %51, %cst_31 [1] : vector<8x128xf32> to vector<8xf32>
    %53 = vector.shape_cast %52 : vector<8xf32> to vector<8x1xf32>
    %54 = arith.addf %49, %53 : vector<8x1xf32>
    %55 = arith.mulf %39, %54 : vector<8x1xf32>
    %56 = arith.addf %33, %55 : vector<8x1xf32>
    %cst_32 = arith.constant 0.000000e+00 : f32
    %57 = vector.broadcast %cst_32 : f32 to vector<8x1xf32>
    %58 = arith.cmpf ogt, %39, %57 : vector<8x1xf32>
    %59 = vector.shape_cast %58 : vector<8x1xi1> to vector<8x1xi1>
    %60 = vector.broadcast %59 : vector<8x1xi1> to vector<8x128xi1>
    %61 = arith.select %60, %46, %26 : vector<8x128xi1>, vector<8x128xf32>
    %cst_33 = arith.constant dense<0xFF800000> : vector<8xf32>
    %62 = vector.multi_reduction <maximumf>, %28, %cst_33 [1] : vector<8x128xf32> to vector<8xf32>
    %63 = vector.shape_cast %62 : vector<8xf32> to vector<8x1xf32>
    %64 = vector.broadcast %63 : vector<8x1xf32> to vector<8x128xf32>
    %65 = arith.subf %28, %64 : vector<8x128xf32>
    %66 = math.exp %65 : vector<8x128xf32>
    %cst_34 = arith.constant dense<0.000000e+00> : vector<8x128xf32>
    %67 = tpu.matmul %66, %17, %cst_34 {dimension_numbers = #tpu.dot_dimension_numbers<[1], [0], [0], [1], [0, 0, 1, 1], [], []>, precision = #tpu.contract_precision<fp32>} : vector<8x128xf32>, vector<128x128xf32>, vector<8x128xf32> -> vector<8x128xf32>
    %68 = math.log %67 : vector<8x128xf32>
    %69 = vector.broadcast %63 : vector<8x1xf32> to vector<8x128xf32>
    %70 = arith.addf %68, %69 : vector<8x128xf32>
    %71 = vector.broadcast %14 : vector<1x128xf32> to vector<8x128xf32>
    %72 = arith.addf %70, %71 : vector<8x128xf32>
    %73 = arith.addf %72, %36 : vector<8x128xf32>
    %cst_35 = arith.constant 0.000000e+00 : f32
    %74 = vector.broadcast %cst_35 : f32 to vector<8x1xf32>
    %75 = arith.cmpf ogt, %39, %74 : vector<8x1xf32>
    %76 = vector.shape_cast %75 : vector<8x1xi1> to vector<8x1xi1>
    %77 = vector.broadcast %76 : vector<8x1xi1> to vector<8x128xi1>
    %78 = arith.select %77, %73, %28 : vector<8x128xi1>, vector<8x128xf32>
    %c2_i32 = arith.constant 2 : i32
    %79 = arith.index_cast %c2_i32 : i32 to index
    %c0_36 = arith.constant 0 : index
    %c0_37 = arith.constant 0 : index
    %80 = vector.load %arg10[%79, %c0_36, %c0_37] : memref<8x8x128xf32, #tpu.memory_space<vmem>>, vector<1x8x128xf32>
    %81 = vector.shape_cast %80 : vector<1x8x128xf32> to vector<8x128xf32>
    %82 = arith.index_cast %c2_i32 : i32 to index
    %c0_38 = arith.constant 0 : index
    %c0_39 = arith.constant 0 : index
    %83 = vector.load %arg3[%82, %c0_38, %c0_39] : memref<8x8x1xf32, #tpu.memory_space<vmem>>, vector<1x8x1xf32>
    %84 = vector.shape_cast %83 : vector<1x8x1xf32> to vector<8x1xf32>
    %85 = arith.index_cast %c2_i32 : i32 to index
    %c0_40 = arith.constant 0 : index
    %c0_41 = arith.constant 0 : index
    %86 = vector.load %arg2[%85, %c0_40, %c0_41] : memref<8x8x1xi32, #tpu.memory_space<vmem>>, vector<1x8x1xi32>
    %87 = vector.shape_cast %86 : vector<1x8x1xi32> to vector<8x1xi32>
    %88 = vector.broadcast %87 : vector<8x1xi32> to vector<8x128xi32>
    %89 = arith.cmpi eq, %18, %88 : vector<8x128xi32>
    %90 = arith.extui %89 : vector<8x128xi1> to vector<8x128xi32>
    %91 = arith.sitofp %90 : vector<8x128xi32> to vector<8x128xf32>
    %92 = arith.mulf %81, %91 : vector<8x128xf32>
    %cst_42 = arith.constant dense<0.000000e+00> : vector<8xf32>
    %93 = vector.multi_reduction <add>, %92, %cst_42 [1] : vector<8x128xf32> to vector<8xf32>
    %94 = vector.shape_cast %93 : vector<8xf32> to vector<8x1xf32>
    %cst_43 = arith.constant dense<0.000000e+00> : vector<8x128xf32>
    %95 = tpu.matmul %61, %12, %cst_43 {dimension_numbers = #tpu.dot_dimension_numbers<[1], [0], [0], [1], [0, 0, 1, 1], [], []>, precision = #tpu.contract_precision<fp32>} : vector<8x128xf32>, vector<128x128xf32>, vector<8x128xf32> -> vector<8x128xf32>
    %96 = arith.mulf %95, %91 : vector<8x128xf32>
    %cst_44 = arith.constant dense<0.000000e+00> : vector<8xf32>
    %97 = vector.multi_reduction <add>, %96, %cst_44 [1] : vector<8x128xf32> to vector<8xf32>
    %98 = vector.shape_cast %97 : vector<8xf32> to vector<8x1xf32>
    %99 = arith.addf %94, %98 : vector<8x1xf32>
    %100 = arith.mulf %84, %99 : vector<8x1xf32>
    %101 = arith.addf %56, %100 : vector<8x1xf32>
    %cst_45 = arith.constant 0.000000e+00 : f32
    %102 = vector.broadcast %cst_45 : f32 to vector<8x1xf32>
    %103 = arith.cmpf ogt, %84, %102 : vector<8x1xf32>
    %104 = vector.shape_cast %103 : vector<8x1xi1> to vector<8x1xi1>
    %105 = vector.broadcast %104 : vector<8x1xi1> to vector<8x128xi1>
    %106 = arith.select %105, %91, %61 : vector<8x128xi1>, vector<8x128xf32>
    %cst_46 = arith.constant dense<0xFF800000> : vector<8xf32>
    %107 = vector.multi_reduction <maximumf>, %78, %cst_46 [1] : vector<8x128xf32> to vector<8xf32>
    %108 = vector.shape_cast %107 : vector<8xf32> to vector<8x1xf32>
    %109 = vector.broadcast %108 : vector<8x1xf32> to vector<8x128xf32>
    %110 = arith.subf %78, %109 : vector<8x128xf32>
    %111 = math.exp %110 : vector<8x128xf32>
    %cst_47 = arith.constant dense<0.000000e+00> : vector<8x128xf32>
    %112 = tpu.matmul %111, %17, %cst_47 {dimension_numbers = #tpu.dot_dimension_numbers<[1], [0], [0], [1], [0, 0, 1, 1], [], []>, precision = #tpu.contract_precision<fp32>} : vector<8x128xf32>, vector<128x128xf32>, vector<8x128xf32> -> vector<8x128xf32>
    %113 = math.log %112 : vector<8x128xf32>
    %114 = vector.broadcast %108 : vector<8x1xf32> to vector<8x128xf32>
    %115 = arith.addf %113, %114 : vector<8x128xf32>
    %116 = vector.broadcast %14 : vector<1x128xf32> to vector<8x128xf32>
    %117 = arith.addf %115, %116 : vector<8x128xf32>
    %118 = arith.addf %117, %81 : vector<8x128xf32>
    %cst_48 = arith.constant 0.000000e+00 : f32
    %119 = vector.broadcast %cst_48 : f32 to vector<8x1xf32>
    %120 = arith.cmpf ogt, %84, %119 : vector<8x1xf32>
    %121 = vector.shape_cast %120 : vector<8x1xi1> to vector<8x1xi1>
    %122 = vector.broadcast %121 : vector<8x1xi1> to vector<8x128xi1>
    %123 = arith.select %122, %118, %78 : vector<8x128xi1>, vector<8x128xf32>
    %c3_i32 = arith.constant 3 : i32
    %124 = arith.index_cast %c3_i32 : i32 to index
    %c0_49 = arith.constant 0 : index
    %c0_50 = arith.constant 0 : index
    %125 = vector.load %arg10[%124, %c0_49, %c0_50] : memref<8x8x128xf32, #tpu.memory_space<vmem>>, vector<1x8x128xf32>
    %126 = vector.shape_cast %125 : vector<1x8x128xf32> to vector<8x128xf32>
    %127 = arith.index_cast %c3_i32 : i32 to index
    %c0_51 = arith.constant 0 : index
    %c0_52 = arith.constant 0 : index
    %128 = vector.load %arg3[%127, %c0_51, %c0_52] : memref<8x8x1xf32, #tpu.memory_space<vmem>>, vector<1x8x1xf32>
    %129 = vector.shape_cast %128 : vector<1x8x1xf32> to vector<8x1xf32>
    %130 = arith.index_cast %c3_i32 : i32 to index
    %c0_53 = arith.constant 0 : index
    %c0_54 = arith.constant 0 : index
    %131 = vector.load %arg2[%130, %c0_53, %c0_54] : memref<8x8x1xi32, #tpu.memory_space<vmem>>, vector<1x8x1xi32>
    %132 = vector.shape_cast %131 : vector<1x8x1xi32> to vector<8x1xi32>
    %133 = vector.broadcast %132 : vector<8x1xi32> to vector<8x128xi32>
    %134 = arith.cmpi eq, %18, %133 : vector<8x128xi32>
    %135 = arith.extui %134 : vector<8x128xi1> to vector<8x128xi32>
    %136 = arith.sitofp %135 : vector<8x128xi32> to vector<8x128xf32>
    %137 = arith.mulf %126, %136 : vector<8x128xf32>
    %cst_55 = arith.constant dense<0.000000e+00> : vector<8xf32>
    %138 = vector.multi_reduction <add>, %137, %cst_55 [1] : vector<8x128xf32> to vector<8xf32>
    %139 = vector.shape_cast %138 : vector<8xf32> to vector<8x1xf32>
    %cst_56 = arith.constant dense<0.000000e+00> : vector<8x128xf32>
    %140 = tpu.matmul %106, %12, %cst_56 {dimension_numbers = #tpu.dot_dimension_numbers<[1], [0], [0], [1], [0, 0, 1, 1], [], []>, precision = #tpu.contract_precision<fp32>} : vector<8x128xf32>, vector<128x128xf32>, vector<8x128xf32> -> vector<8x128xf32>
    %141 = arith.mulf %140, %136 : vector<8x128xf32>
    %cst_57 = arith.constant dense<0.000000e+00> : vector<8xf32>
    %142 = vector.multi_reduction <add>, %141, %cst_57 [1] : vector<8x128xf32> to vector<8xf32>
    %143 = vector.shape_cast %142 : vector<8xf32> to vector<8x1xf32>
    %144 = arith.addf %139, %143 : vector<8x1xf32>
    %145 = arith.mulf %129, %144 : vector<8x1xf32>
    %146 = arith.addf %101, %145 : vector<8x1xf32>
    %cst_58 = arith.constant 0.000000e+00 : f32
    %147 = vector.broadcast %cst_58 : f32 to vector<8x1xf32>
    %148 = arith.cmpf ogt, %129, %147 : vector<8x1xf32>
    %149 = vector.shape_cast %148 : vector<8x1xi1> to vector<8x1xi1>
    %150 = vector.broadcast %149 : vector<8x1xi1> to vector<8x128xi1>
    %151 = arith.select %150, %136, %106 : vector<8x128xi1>, vector<8x128xf32>
    %cst_59 = arith.constant dense<0xFF800000> : vector<8xf32>
    %152 = vector.multi_reduction <maximumf>, %123, %cst_59 [1] : vector<8x128xf32> to vector<8xf32>
    %153 = vector.shape_cast %152 : vector<8xf32> to vector<8x1xf32>
    %154 = vector.broadcast %153 : vector<8x1xf32> to vector<8x128xf32>
    %155 = arith.subf %123, %154 : vector<8x128xf32>
    %156 = math.exp %155 : vector<8x128xf32>
    %cst_60 = arith.constant dense<0.000000e+00> : vector<8x128xf32>
    %157 = tpu.matmul %156, %17, %cst_60 {dimension_numbers = #tpu.dot_dimension_numbers<[1], [0], [0], [1], [0, 0, 1, 1], [], []>, precision = #tpu.contract_precision<fp32>} : vector<8x128xf32>, vector<128x128xf32>, vector<8x128xf32> -> vector<8x128xf32>
    %158 = math.log %157 : vector<8x128xf32>
    %159 = vector.broadcast %153 : vector<8x1xf32> to vector<8x128xf32>
    %160 = arith.addf %158, %159 : vector<8x128xf32>
    %161 = vector.broadcast %14 : vector<1x128xf32> to vector<8x128xf32>
    %162 = arith.addf %160, %161 : vector<8x128xf32>
    %163 = arith.addf %162, %126 : vector<8x128xf32>
    %cst_61 = arith.constant 0.000000e+00 : f32
    %164 = vector.broadcast %cst_61 : f32 to vector<8x1xf32>
    %165 = arith.cmpf ogt, %129, %164 : vector<8x1xf32>
    %166 = vector.shape_cast %165 : vector<8x1xi1> to vector<8x1xi1>
    %167 = vector.broadcast %166 : vector<8x1xi1> to vector<8x128xi1>
    %168 = arith.select %167, %163, %123 : vector<8x128xi1>, vector<8x128xf32>
    %c4_i32 = arith.constant 4 : i32
    %169 = arith.index_cast %c4_i32 : i32 to index
    %c0_62 = arith.constant 0 : index
    %c0_63 = arith.constant 0 : index
    %170 = vector.load %arg10[%169, %c0_62, %c0_63] : memref<8x8x128xf32, #tpu.memory_space<vmem>>, vector<1x8x128xf32>
    %171 = vector.shape_cast %170 : vector<1x8x128xf32> to vector<8x128xf32>
    %172 = arith.index_cast %c4_i32 : i32 to index
    %c0_64 = arith.constant 0 : index
    %c0_65 = arith.constant 0 : index
    %173 = vector.load %arg3[%172, %c0_64, %c0_65] : memref<8x8x1xf32, #tpu.memory_space<vmem>>, vector<1x8x1xf32>
    %174 = vector.shape_cast %173 : vector<1x8x1xf32> to vector<8x1xf32>
    %175 = arith.index_cast %c4_i32 : i32 to index
    %c0_66 = arith.constant 0 : index
    %c0_67 = arith.constant 0 : index
    %176 = vector.load %arg2[%175, %c0_66, %c0_67] : memref<8x8x1xi32, #tpu.memory_space<vmem>>, vector<1x8x1xi32>
    %177 = vector.shape_cast %176 : vector<1x8x1xi32> to vector<8x1xi32>
    %178 = vector.broadcast %177 : vector<8x1xi32> to vector<8x128xi32>
    %179 = arith.cmpi eq, %18, %178 : vector<8x128xi32>
    %180 = arith.extui %179 : vector<8x128xi1> to vector<8x128xi32>
    %181 = arith.sitofp %180 : vector<8x128xi32> to vector<8x128xf32>
    %182 = arith.mulf %171, %181 : vector<8x128xf32>
    %cst_68 = arith.constant dense<0.000000e+00> : vector<8xf32>
    %183 = vector.multi_reduction <add>, %182, %cst_68 [1] : vector<8x128xf32> to vector<8xf32>
    %184 = vector.shape_cast %183 : vector<8xf32> to vector<8x1xf32>
    %cst_69 = arith.constant dense<0.000000e+00> : vector<8x128xf32>
    %185 = tpu.matmul %151, %12, %cst_69 {dimension_numbers = #tpu.dot_dimension_numbers<[1], [0], [0], [1], [0, 0, 1, 1], [], []>, precision = #tpu.contract_precision<fp32>} : vector<8x128xf32>, vector<128x128xf32>, vector<8x128xf32> -> vector<8x128xf32>
    %186 = arith.mulf %185, %181 : vector<8x128xf32>
    %cst_70 = arith.constant dense<0.000000e+00> : vector<8xf32>
    %187 = vector.multi_reduction <add>, %186, %cst_70 [1] : vector<8x128xf32> to vector<8xf32>
    %188 = vector.shape_cast %187 : vector<8xf32> to vector<8x1xf32>
    %189 = arith.addf %184, %188 : vector<8x1xf32>
    %190 = arith.mulf %174, %189 : vector<8x1xf32>
    %191 = arith.addf %146, %190 : vector<8x1xf32>
    %cst_71 = arith.constant 0.000000e+00 : f32
    %192 = vector.broadcast %cst_71 : f32 to vector<8x1xf32>
    %193 = arith.cmpf ogt, %174, %192 : vector<8x1xf32>
    %194 = vector.shape_cast %193 : vector<8x1xi1> to vector<8x1xi1>
    %195 = vector.broadcast %194 : vector<8x1xi1> to vector<8x128xi1>
    %196 = arith.select %195, %181, %151 : vector<8x128xi1>, vector<8x128xf32>
    %cst_72 = arith.constant dense<0xFF800000> : vector<8xf32>
    %197 = vector.multi_reduction <maximumf>, %168, %cst_72 [1] : vector<8x128xf32> to vector<8xf32>
    %198 = vector.shape_cast %197 : vector<8xf32> to vector<8x1xf32>
    %199 = vector.broadcast %198 : vector<8x1xf32> to vector<8x128xf32>
    %200 = arith.subf %168, %199 : vector<8x128xf32>
    %201 = math.exp %200 : vector<8x128xf32>
    %cst_73 = arith.constant dense<0.000000e+00> : vector<8x128xf32>
    %202 = tpu.matmul %201, %17, %cst_73 {dimension_numbers = #tpu.dot_dimension_numbers<[1], [0], [0], [1], [0, 0, 1, 1], [], []>, precision = #tpu.contract_precision<fp32>} : vector<8x128xf32>, vector<128x128xf32>, vector<8x128xf32> -> vector<8x128xf32>
    %203 = math.log %202 : vector<8x128xf32>
    %204 = vector.broadcast %198 : vector<8x1xf32> to vector<8x128xf32>
    %205 = arith.addf %203, %204 : vector<8x128xf32>
    %206 = vector.broadcast %14 : vector<1x128xf32> to vector<8x128xf32>
    %207 = arith.addf %205, %206 : vector<8x128xf32>
    %208 = arith.addf %207, %171 : vector<8x128xf32>
    %cst_74 = arith.constant 0.000000e+00 : f32
    %209 = vector.broadcast %cst_74 : f32 to vector<8x1xf32>
    %210 = arith.cmpf ogt, %174, %209 : vector<8x1xf32>
    %211 = vector.shape_cast %210 : vector<8x1xi1> to vector<8x1xi1>
    %212 = vector.broadcast %211 : vector<8x1xi1> to vector<8x128xi1>
    %213 = arith.select %212, %208, %168 : vector<8x128xi1>, vector<8x128xf32>
    %c5_i32 = arith.constant 5 : i32
    %214 = arith.index_cast %c5_i32 : i32 to index
    %c0_75 = arith.constant 0 : index
    %c0_76 = arith.constant 0 : index
    %215 = vector.load %arg10[%214, %c0_75, %c0_76] : memref<8x8x128xf32, #tpu.memory_space<vmem>>, vector<1x8x128xf32>
    %216 = vector.shape_cast %215 : vector<1x8x128xf32> to vector<8x128xf32>
    %217 = arith.index_cast %c5_i32 : i32 to index
    %c0_77 = arith.constant 0 : index
    %c0_78 = arith.constant 0 : index
    %218 = vector.load %arg3[%217, %c0_77, %c0_78] : memref<8x8x1xf32, #tpu.memory_space<vmem>>, vector<1x8x1xf32>
    %219 = vector.shape_cast %218 : vector<1x8x1xf32> to vector<8x1xf32>
    %220 = arith.index_cast %c5_i32 : i32 to index
    %c0_79 = arith.constant 0 : index
    %c0_80 = arith.constant 0 : index
    %221 = vector.load %arg2[%220, %c0_79, %c0_80] : memref<8x8x1xi32, #tpu.memory_space<vmem>>, vector<1x8x1xi32>
    %222 = vector.shape_cast %221 : vector<1x8x1xi32> to vector<8x1xi32>
    %223 = vector.broadcast %222 : vector<8x1xi32> to vector<8x128xi32>
    %224 = arith.cmpi eq, %18, %223 : vector<8x128xi32>
    %225 = arith.extui %224 : vector<8x128xi1> to vector<8x128xi32>
    %226 = arith.sitofp %225 : vector<8x128xi32> to vector<8x128xf32>
    %227 = arith.mulf %216, %226 : vector<8x128xf32>
    %cst_81 = arith.constant dense<0.000000e+00> : vector<8xf32>
    %228 = vector.multi_reduction <add>, %227, %cst_81 [1] : vector<8x128xf32> to vector<8xf32>
    %229 = vector.shape_cast %228 : vector<8xf32> to vector<8x1xf32>
    %cst_82 = arith.constant dense<0.000000e+00> : vector<8x128xf32>
    %230 = tpu.matmul %196, %12, %cst_82 {dimension_numbers = #tpu.dot_dimension_numbers<[1], [0], [0], [1], [0, 0, 1, 1], [], []>, precision = #tpu.contract_precision<fp32>} : vector<8x128xf32>, vector<128x128xf32>, vector<8x128xf32> -> vector<8x128xf32>
    %231 = arith.mulf %230, %226 : vector<8x128xf32>
    %cst_83 = arith.constant dense<0.000000e+00> : vector<8xf32>
    %232 = vector.multi_reduction <add>, %231, %cst_83 [1] : vector<8x128xf32> to vector<8xf32>
    %233 = vector.shape_cast %232 : vector<8xf32> to vector<8x1xf32>
    %234 = arith.addf %229, %233 : vector<8x1xf32>
    %235 = arith.mulf %219, %234 : vector<8x1xf32>
    %236 = arith.addf %191, %235 : vector<8x1xf32>
    %cst_84 = arith.constant 0.000000e+00 : f32
    %237 = vector.broadcast %cst_84 : f32 to vector<8x1xf32>
    %238 = arith.cmpf ogt, %219, %237 : vector<8x1xf32>
    %239 = vector.shape_cast %238 : vector<8x1xi1> to vector<8x1xi1>
    %240 = vector.broadcast %239 : vector<8x1xi1> to vector<8x128xi1>
    %241 = arith.select %240, %226, %196 : vector<8x128xi1>, vector<8x128xf32>
    %cst_85 = arith.constant dense<0xFF800000> : vector<8xf32>
    %242 = vector.multi_reduction <maximumf>, %213, %cst_85 [1] : vector<8x128xf32> to vector<8xf32>
    %243 = vector.shape_cast %242 : vector<8xf32> to vector<8x1xf32>
    %244 = vector.broadcast %243 : vector<8x1xf32> to vector<8x128xf32>
    %245 = arith.subf %213, %244 : vector<8x128xf32>
    %246 = math.exp %245 : vector<8x128xf32>
    %cst_86 = arith.constant dense<0.000000e+00> : vector<8x128xf32>
    %247 = tpu.matmul %246, %17, %cst_86 {dimension_numbers = #tpu.dot_dimension_numbers<[1], [0], [0], [1], [0, 0, 1, 1], [], []>, precision = #tpu.contract_precision<fp32>} : vector<8x128xf32>, vector<128x128xf32>, vector<8x128xf32> -> vector<8x128xf32>
    %248 = math.log %247 : vector<8x128xf32>
    %249 = vector.broadcast %243 : vector<8x1xf32> to vector<8x128xf32>
    %250 = arith.addf %248, %249 : vector<8x128xf32>
    %251 = vector.broadcast %14 : vector<1x128xf32> to vector<8x128xf32>
    %252 = arith.addf %250, %251 : vector<8x128xf32>
    %253 = arith.addf %252, %216 : vector<8x128xf32>
    %cst_87 = arith.constant 0.000000e+00 : f32
    %254 = vector.broadcast %cst_87 : f32 to vector<8x1xf32>
    %255 = arith.cmpf ogt, %219, %254 : vector<8x1xf32>
    %256 = vector.shape_cast %255 : vector<8x1xi1> to vector<8x1xi1>
    %257 = vector.broadcast %256 : vector<8x1xi1> to vector<8x128xi1>
    %258 = arith.select %257, %253, %213 : vector<8x128xi1>, vector<8x128xf32>
    %c6_i32 = arith.constant 6 : i32
    %259 = arith.index_cast %c6_i32 : i32 to index
    %c0_88 = arith.constant 0 : index
    %c0_89 = arith.constant 0 : index
    %260 = vector.load %arg10[%259, %c0_88, %c0_89] : memref<8x8x128xf32, #tpu.memory_space<vmem>>, vector<1x8x128xf32>
    %261 = vector.shape_cast %260 : vector<1x8x128xf32> to vector<8x128xf32>
    %262 = arith.index_cast %c6_i32 : i32 to index
    %c0_90 = arith.constant 0 : index
    %c0_91 = arith.constant 0 : index
    %263 = vector.load %arg3[%262, %c0_90, %c0_91] : memref<8x8x1xf32, #tpu.memory_space<vmem>>, vector<1x8x1xf32>
    %264 = vector.shape_cast %263 : vector<1x8x1xf32> to vector<8x1xf32>
    %265 = arith.index_cast %c6_i32 : i32 to index
    %c0_92 = arith.constant 0 : index
    %c0_93 = arith.constant 0 : index
    %266 = vector.load %arg2[%265, %c0_92, %c0_93] : memref<8x8x1xi32, #tpu.memory_space<vmem>>, vector<1x8x1xi32>
    %267 = vector.shape_cast %266 : vector<1x8x1xi32> to vector<8x1xi32>
    %268 = vector.broadcast %267 : vector<8x1xi32> to vector<8x128xi32>
    %269 = arith.cmpi eq, %18, %268 : vector<8x128xi32>
    %270 = arith.extui %269 : vector<8x128xi1> to vector<8x128xi32>
    %271 = arith.sitofp %270 : vector<8x128xi32> to vector<8x128xf32>
    %272 = arith.mulf %261, %271 : vector<8x128xf32>
    %cst_94 = arith.constant dense<0.000000e+00> : vector<8xf32>
    %273 = vector.multi_reduction <add>, %272, %cst_94 [1] : vector<8x128xf32> to vector<8xf32>
    %274 = vector.shape_cast %273 : vector<8xf32> to vector<8x1xf32>
    %cst_95 = arith.constant dense<0.000000e+00> : vector<8x128xf32>
    %275 = tpu.matmul %241, %12, %cst_95 {dimension_numbers = #tpu.dot_dimension_numbers<[1], [0], [0], [1], [0, 0, 1, 1], [], []>, precision = #tpu.contract_precision<fp32>} : vector<8x128xf32>, vector<128x128xf32>, vector<8x128xf32> -> vector<8x128xf32>
    %276 = arith.mulf %275, %271 : vector<8x128xf32>
    %cst_96 = arith.constant dense<0.000000e+00> : vector<8xf32>
    %277 = vector.multi_reduction <add>, %276, %cst_96 [1] : vector<8x128xf32> to vector<8xf32>
    %278 = vector.shape_cast %277 : vector<8xf32> to vector<8x1xf32>
    %279 = arith.addf %274, %278 : vector<8x1xf32>
    %280 = arith.mulf %264, %279 : vector<8x1xf32>
    %281 = arith.addf %236, %280 : vector<8x1xf32>
    %cst_97 = arith.constant 0.000000e+00 : f32
    %282 = vector.broadcast %cst_97 : f32 to vector<8x1xf32>
    %283 = arith.cmpf ogt, %264, %282 : vector<8x1xf32>
    %284 = vector.shape_cast %283 : vector<8x1xi1> to vector<8x1xi1>
    %285 = vector.broadcast %284 : vector<8x1xi1> to vector<8x128xi1>
    %286 = arith.select %285, %271, %241 : vector<8x128xi1>, vector<8x128xf32>
    %cst_98 = arith.constant dense<0xFF800000> : vector<8xf32>
    %287 = vector.multi_reduction <maximumf>, %258, %cst_98 [1] : vector<8x128xf32> to vector<8xf32>
    %288 = vector.shape_cast %287 : vector<8xf32> to vector<8x1xf32>
    %289 = vector.broadcast %288 : vector<8x1xf32> to vector<8x128xf32>
    %290 = arith.subf %258, %289 : vector<8x128xf32>
    %291 = math.exp %290 : vector<8x128xf32>
    %cst_99 = arith.constant dense<0.000000e+00> : vector<8x128xf32>
    %292 = tpu.matmul %291, %17, %cst_99 {dimension_numbers = #tpu.dot_dimension_numbers<[1], [0], [0], [1], [0, 0, 1, 1], [], []>, precision = #tpu.contract_precision<fp32>} : vector<8x128xf32>, vector<128x128xf32>, vector<8x128xf32> -> vector<8x128xf32>
    %293 = math.log %292 : vector<8x128xf32>
    %294 = vector.broadcast %288 : vector<8x1xf32> to vector<8x128xf32>
    %295 = arith.addf %293, %294 : vector<8x128xf32>
    %296 = vector.broadcast %14 : vector<1x128xf32> to vector<8x128xf32>
    %297 = arith.addf %295, %296 : vector<8x128xf32>
    %298 = arith.addf %297, %261 : vector<8x128xf32>
    %cst_100 = arith.constant 0.000000e+00 : f32
    %299 = vector.broadcast %cst_100 : f32 to vector<8x1xf32>
    %300 = arith.cmpf ogt, %264, %299 : vector<8x1xf32>
    %301 = vector.shape_cast %300 : vector<8x1xi1> to vector<8x1xi1>
    %302 = vector.broadcast %301 : vector<8x1xi1> to vector<8x128xi1>
    %303 = arith.select %302, %298, %258 : vector<8x128xi1>, vector<8x128xf32>
    %c7_i32 = arith.constant 7 : i32
    %304 = arith.index_cast %c7_i32 : i32 to index
    %c0_101 = arith.constant 0 : index
    %c0_102 = arith.constant 0 : index
    %305 = vector.load %arg10[%304, %c0_101, %c0_102] : memref<8x8x128xf32, #tpu.memory_space<vmem>>, vector<1x8x128xf32>
    %306 = vector.shape_cast %305 : vector<1x8x128xf32> to vector<8x128xf32>
    %307 = arith.index_cast %c7_i32 : i32 to index
    %c0_103 = arith.constant 0 : index
    %c0_104 = arith.constant 0 : index
    %308 = vector.load %arg3[%307, %c0_103, %c0_104] : memref<8x8x1xf32, #tpu.memory_space<vmem>>, vector<1x8x1xf32>
    %309 = vector.shape_cast %308 : vector<1x8x1xf32> to vector<8x1xf32>
    %310 = arith.index_cast %c7_i32 : i32 to index
    %c0_105 = arith.constant 0 : index
    %c0_106 = arith.constant 0 : index
    %311 = vector.load %arg2[%310, %c0_105, %c0_106] : memref<8x8x1xi32, #tpu.memory_space<vmem>>, vector<1x8x1xi32>
    %312 = vector.shape_cast %311 : vector<1x8x1xi32> to vector<8x1xi32>
    %313 = vector.broadcast %312 : vector<8x1xi32> to vector<8x128xi32>
    %314 = arith.cmpi eq, %18, %313 : vector<8x128xi32>
    %315 = arith.extui %314 : vector<8x128xi1> to vector<8x128xi32>
    %316 = arith.sitofp %315 : vector<8x128xi32> to vector<8x128xf32>
    %317 = arith.mulf %306, %316 : vector<8x128xf32>
    %cst_107 = arith.constant dense<0.000000e+00> : vector<8xf32>
    %318 = vector.multi_reduction <add>, %317, %cst_107 [1] : vector<8x128xf32> to vector<8xf32>
    %319 = vector.shape_cast %318 : vector<8xf32> to vector<8x1xf32>
    %cst_108 = arith.constant dense<0.000000e+00> : vector<8x128xf32>
    %320 = tpu.matmul %286, %12, %cst_108 {dimension_numbers = #tpu.dot_dimension_numbers<[1], [0], [0], [1], [0, 0, 1, 1], [], []>, precision = #tpu.contract_precision<fp32>} : vector<8x128xf32>, vector<128x128xf32>, vector<8x128xf32> -> vector<8x128xf32>
    %321 = arith.mulf %320, %316 : vector<8x128xf32>
    %cst_109 = arith.constant dense<0.000000e+00> : vector<8xf32>
    %322 = vector.multi_reduction <add>, %321, %cst_109 [1] : vector<8x128xf32> to vector<8xf32>
    %323 = vector.shape_cast %322 : vector<8xf32> to vector<8x1xf32>
    %324 = arith.addf %319, %323 : vector<8x1xf32>
    %325 = arith.mulf %309, %324 : vector<8x1xf32>
    %326 = arith.addf %281, %325 : vector<8x1xf32>
    %cst_110 = arith.constant 0.000000e+00 : f32
    %327 = vector.broadcast %cst_110 : f32 to vector<8x1xf32>
    %328 = arith.cmpf ogt, %309, %327 : vector<8x1xf32>
    %329 = vector.shape_cast %328 : vector<8x1xi1> to vector<8x1xi1>
    %330 = vector.broadcast %329 : vector<8x1xi1> to vector<8x128xi1>
    %331 = arith.select %330, %316, %286 : vector<8x128xi1>, vector<8x128xf32>
    %cst_111 = arith.constant dense<0xFF800000> : vector<8xf32>
    %332 = vector.multi_reduction <maximumf>, %303, %cst_111 [1] : vector<8x128xf32> to vector<8xf32>
    %333 = vector.shape_cast %332 : vector<8xf32> to vector<8x1xf32>
    %334 = vector.broadcast %333 : vector<8x1xf32> to vector<8x128xf32>
    %335 = arith.subf %303, %334 : vector<8x128xf32>
    %336 = math.exp %335 : vector<8x128xf32>
    %cst_112 = arith.constant dense<0.000000e+00> : vector<8x128xf32>
    %337 = tpu.matmul %336, %17, %cst_112 {dimension_numbers = #tpu.dot_dimension_numbers<[1], [0], [0], [1], [0, 0, 1, 1], [], []>, precision = #tpu.contract_precision<fp32>} : vector<8x128xf32>, vector<128x128xf32>, vector<8x128xf32> -> vector<8x128xf32>
    %338 = math.log %337 : vector<8x128xf32>
    %339 = vector.broadcast %333 : vector<8x1xf32> to vector<8x128xf32>
    %340 = arith.addf %338, %339 : vector<8x128xf32>
    %341 = vector.broadcast %14 : vector<1x128xf32> to vector<8x128xf32>
    %342 = arith.addf %340, %341 : vector<8x128xf32>
    %343 = arith.addf %342, %306 : vector<8x128xf32>
    %cst_113 = arith.constant 0.000000e+00 : f32
    %344 = vector.broadcast %cst_113 : f32 to vector<8x1xf32>
    %345 = arith.cmpf ogt, %309, %344 : vector<8x1xf32>
    %346 = vector.shape_cast %345 : vector<8x1xi1> to vector<8x1xi1>
    %347 = vector.broadcast %346 : vector<8x1xi1> to vector<8x128xi1>
    %348 = arith.select %347, %343, %303 : vector<8x128xi1>, vector<8x128xf32>
    %c7_i32_114 = arith.constant 7 : i32
    %349 = vector.broadcast %11 : vector<1x128xf32> to vector<8x128xf32>
    %350 = arith.mulf %331, %349 : vector<8x128xf32>
    %cst_115 = arith.constant dense<0.000000e+00> : vector<8xf32>
    %351 = vector.multi_reduction <add>, %350, %cst_115 [1] : vector<8x128xf32> to vector<8xf32>
    %352 = vector.shape_cast %351 : vector<8xf32> to vector<8x1xf32>
    %353 = vector.broadcast %11 : vector<1x128xf32> to vector<8x128xf32>
    %354 = arith.addf %348, %353 : vector<8x128xf32>
    %cst_116 = arith.constant dense<0xFF800000> : vector<8xf32>
    %355 = vector.multi_reduction <maximumf>, %354, %cst_116 [1] : vector<8x128xf32> to vector<8xf32>
    %356 = vector.shape_cast %355 : vector<8xf32> to vector<8x1xf32>
    %357 = vector.broadcast %356 : vector<8x1xf32> to vector<8x128xf32>
    %358 = arith.subf %354, %357 : vector<8x128xf32>
    %359 = math.exp %358 : vector<8x128xf32>
    %cst_117 = arith.constant dense<0.000000e+00> : vector<8xf32>
    %360 = vector.multi_reduction <add>, %359, %cst_117 [1] : vector<8x128xf32> to vector<8xf32>
    %361 = vector.shape_cast %360 : vector<8xf32> to vector<8x1xf32>
    %362 = math.log %361 : vector<8x1xf32>
    %363 = arith.addf %362, %356 : vector<8x1xf32>
    %364 = arith.addf %326, %352 : vector<8x1xf32>
    %365 = arith.subf %364, %363 : vector<8x1xf32>
    %366 = vector.shape_cast %365 : vector<8x1xf32> to vector<8x1xf32>
    %367 = vector.broadcast %366 : vector<8x1xf32> to vector<8x128xf32>
    %c0_118 = arith.constant 0 : index
    %c0_119 = arith.constant 0 : index
    %368 = vector.load %arg9[%c0_118, %c0_119] : memref<8x128xf32, #tpu.memory_space<vmem>>, vector<8x128xf32>
    tpu.vector_store %arg9[%c0_118, %c0_119], %367 {strides = array<i32>} : memref<8x128xf32, #tpu.memory_space<vmem>>, vector<8x128xf32>,
    return
  }
  func.func @transform_0(%arg0: i32) -> (i32, i32, i32) {
    %c0_i32 = arith.constant 0 : i32
    %c0_i32_0 = arith.constant 0 : i32
    %c0_i32_1 = arith.constant 0 : i32
    return %arg0, %c0_i32, %c0_i32_0 : i32, i32, i32
  }
  func.func @transform_1(%arg0: i32) -> (i32, i32, i32) {
    %c0_i32 = arith.constant 0 : i32
    %c0_i32_0 = arith.constant 0 : i32
    %c0_i32_1 = arith.constant 0 : i32
    return %c0_i32, %arg0, %c0_i32_0 : i32, i32, i32
  }
  func.func @transform_2(%arg0: i32) -> (i32, i32, i32) {
    %c0_i32 = arith.constant 0 : i32
    %c0_i32_0 = arith.constant 0 : i32
    %c0_i32_1 = arith.constant 0 : i32
    return %c0_i32, %arg0, %c0_i32_0 : i32, i32, i32
  }
  func.func @transform_3(%arg0: i32) -> (i32, i32) {
    %c0_i32 = arith.constant 0 : i32
    %c0_i32_0 = arith.constant 0 : i32
    %c0_i32_1 = arith.constant 0 : i32
    return %c0_i32, %c0_i32_0 : i32, i32
  }
  func.func @transform_4(%arg0: i32) -> (i32, i32) {
    %c0_i32 = arith.constant 0 : i32
    %c0_i32_0 = arith.constant 0 : i32
    %c0_i32_1 = arith.constant 0 : i32
    return %c0_i32, %c0_i32_0 : i32, i32
  }
  func.func @transform_5(%arg0: i32) -> (i32, i32) {
    %c0_i32 = arith.constant 0 : i32
    %c0_i32_0 = arith.constant 0 : i32
    %c0_i32_1 = arith.constant 0 : i32
    return %c0_i32, %c0_i32_0 : i32, i32
  }
  func.func @transform_6(%arg0: i32) -> (i32, i32) {
    %c0_i32 = arith.constant 0 : i32
    %c0_i32_0 = arith.constant 0 : i32
    %c0_i32_1 = arith.constant 0 : i32
    return %c0_i32, %c0_i32_0 : i32, i32
  }
  func.func @transform_7(%arg0: i32) -> (i32, i32) {
    %c0_i32 = arith.constant 0 : i32
    %c0_i32_0 = arith.constant 0 : i32
    %c0_i32_1 = arith.constant 0 : i32
    return %c0_i32, %c0_i32_0 : i32, i32
  }
  func.func @transform_8(%arg0: i32) -> (i32, i32) {
    %c0_i32 = arith.constant 0 : i32
    %c0_i32_0 = arith.constant 0 : i32
    return %arg0, %c0_i32 : i32, i32
  }
}

</mosaic_0001>

<llo_original>
// kernel: crf_tagger_forward.1
$region0: #{crf_tagger_forward.1}
  #allocation0 [shape = 'u32[]', space=smem, size = 0x4, offset = 0x4, fixed_abs, tag = 'smem constant byte address 0x4 - core index']
  #allocation1 [shape = 'u32[72,128]{1,0:T(1,128)}', space=vmem, size = 0x9000, scoped, tag = 'internal scratch']
  #allocation2 [shape = 'f32[8,8,128]{2,1,0:T(8,128)}', space=vmem, size = 0x8000, scoped, tag = 'scratch operand']
  %s0 = inlined_call_operand.vmem [shape: f32[8,8,128], index: 0, kind: input, shape index: {}]
  %s1 = inlined_call_operand.vmem [shape: s32[8,8,1], index: 1, kind: input, shape index: {}]
  %s2 = inlined_call_operand.vmem [shape: f32[8,8,1], index: 2, kind: input, shape index: {}]
  %s3 = inlined_call_operand.vmem [shape: f32[128,128], index: 3, kind: input, shape index: {}]
  %s4 = inlined_call_operand.vmem [shape: f32[1,128], index: 4, kind: input, shape index: {}]
  %s5 = inlined_call_operand.vmem [shape: f32[1,128], index: 5, kind: input, shape index: {}]
  %s6 = inlined_call_operand.vmem [shape: f32[1,128], index: 6, kind: input, shape index: {}]
  %s7 = inlined_call_operand.vmem [shape: f32[128,128], index: 7, kind: input, shape index: {}]
  %s8 = inlined_call_operand.vmem [shape: f32[8,128], index: 8, kind: output, shape index: {}]
  %s9 = sld [smem:[#allocation0]]
  $region42: #{crf_tagger_forward.1} parent=0
    _
  %s11 = ssub.s32 1, %s9
  %s12 = scalar_select 0, %s11, %s9
  // Predicated region
  $region2: #{crf_tagger_forward.1} parent=0 // pred_check
    _
  $region3: #{crf_tagger_forward.1} parent=0 // pred_check_branch
    %14 = sbr.rel (0) target = $region5
  $region4: #{crf_tagger_forward.1} parent=0 // pred_region
    _
  $region5: #{crf_tagger_forward.1} parent=0 // pred_fallthru
    _
  // Predicated region
  $region6: #{crf_tagger_forward.1} parent=0 // pred_check
    _
  $region7: #{crf_tagger_forward.1} parent=0 // pred_check_branch
    %16 = sbr.rel (0) target = $region9
  $region8: #{crf_tagger_forward.1} parent=0 // pred_region
    _
  $region9: #{crf_tagger_forward.1} parent=0 // pred_fallthru
    _
  // Predicated region
  $region10: #{crf_tagger_forward.1} parent=0 // pred_check
    _
  $region11: #{crf_tagger_forward.1} parent=0 // pred_check_branch
    %18 = sbr.rel (0) target = $region13
  $region12: #{crf_tagger_forward.1} parent=0 // pred_region
    _
  $region13: #{crf_tagger_forward.1} parent=0 // pred_fallthru
    _
  // Predicated region
  $region14: #{crf_tagger_forward.1} parent=0 // pred_check
    _
  $region15: #{crf_tagger_forward.1} parent=0 // pred_check_branch
    %20 = sbr.rel (0) target = $region17
  $region16: #{crf_tagger_forward.1} parent=0 // pred_region
    _
  $region17: #{crf_tagger_forward.1} parent=0 // pred_fallthru
    _
  // Predicated region
  $region18: #{crf_tagger_forward.1} parent=0 // pred_check
    _
  $region19: #{crf_tagger_forward.1} parent=0 // pred_check_branch
    %22 = sbr.rel (0) target = $region21
  $region20: #{crf_tagger_forward.1} parent=0 // pred_region
    _
  $region21: #{crf_tagger_forward.1} parent=0 // pred_fallthru
    _
  // Predicated region
  $region22: #{crf_tagger_forward.1} parent=0 // pred_check
    _
  $region23: #{crf_tagger_forward.1} parent=0 // pred_check_branch
    %24 = sbr.rel (0) target = $region25
  $region24: #{crf_tagger_forward.1} parent=0 // pred_region
    _
  $region25: #{crf_tagger_forward.1} parent=0 // pred_fallthru
    _
  // Predicated region
  $region26: #{crf_tagger_forward.1} parent=0 // pred_check
    _
  $region27: #{crf_tagger_forward.1} parent=0 // pred_check_branch
    %26 = sbr.rel (0) target = $region29
  $region28: #{crf_tagger_forward.1} parent=0 // pred_region
    _
  $region29: #{crf_tagger_forward.1} parent=0 // pred_fallthru
    _
  // Predicated region
  $region30: #{crf_tagger_forward.1} parent=0 // pred_check
    _
  $region31: #{crf_tagger_forward.1} parent=0 // pred_check_branch
    %28 = sbr.rel (0) target = $region33
  $region32: #{crf_tagger_forward.1} parent=0 // pred_region
    _
  $region33: #{crf_tagger_forward.1} parent=0 // pred_fallthru
    _
  %v29 = vld [vmem:[%s3] sm:$0xff]
  %v30 = vld [vmem:[%s3 + $0x8] sm:$0xff]
  %v31 = vld [vmem:[%s3 + $0x10] sm:$0xff]
  %v32 = vld [vmem:[%s3 + $0x18] sm:$0xff]
  %v33 = vld [vmem:[%s3 + $0x20] sm:$0xff]
  %v34 = vld [vmem:[%s3 + $0x28] sm:$0xff]
  %v35 = vld [vmem:[%s3 + $0x30] sm:$0xff]
  %v36 = vld [vmem:[%s3 + $0x38] sm:$0xff]
  %v37 = vld [vmem:[%s3 + $0x40] sm:$0xff]
  %v38 = vld [vmem:[%s3 + $0x48] sm:$0xff]
  %v39 = vld [vmem:[%s3 + $0x50] sm:$0xff]
  %v40 = vld [vmem:[%s3 + $0x58] sm:$0xff]
  %v41 = vld [vmem:[%s3 + $0x60] sm:$0xff]
  %v42 = vld [vmem:[%s3 + $0x68] sm:$0xff]
  %v43 = vld [vmem:[%s3 + $0x70] sm:$0xff]
  %v44 = vld [vmem:[%s3 + $0x78] sm:$0xff]
  %v45 = vld [vmem:[%s4] sm:$0x1]
  %v46 = vld [vmem:[%s0] sm:$0xff]
  %v47 = vld [vmem:[%s0 + $0x8] sm:$0xff]
  %v48 = vld [vmem:[%s0 + $0x10] sm:$0xff]
  %v49 = vld [vmem:[%s0 + $0x18] sm:$0xff]
  %v50 = vld [vmem:[%s0 + $0x20] sm:$0xff]
  %v51 = vld [vmem:[%s0 + $0x28] sm:$0xff]
  %v52 = vld [vmem:[%s0 + $0x30] sm:$0xff]
  %v53 = vld [vmem:[%s0 + $0x38] sm:$0xff]
  %v55 = vperm.slane %v45, 0
  %v57 = vand.u32 %v44, 4294901760
  %58 = vmatpush.msra.mxu0 %v57
  %v59 = vand.u32 %v43, 4294901760
  %60 = vmatpush.msra.mxu0 %v59
  %v61 = vand.u32 %v42, 4294901760
  %62 = vmatpush.msra.mxu0 %v61
  %v63 = vand.u32 %v41, 4294901760
  %64 = vmatpush.msra.mxu0 %v63
  %v65 = vand.u32 %v40, 4294901760
  %66 = vmatpush.msra.mxu0 %v65
  %v67 = vand.u32 %v39, 4294901760
  %68 = vmatpush.msra.mxu0 %v67
  %v69 = vand.u32 %v38, 4294901760
  %70 = vmatpush.msra.mxu0 %v69
  %v71 = vand.u32 %v37, 4294901760
  %72 = vmatpush.msra.mxu0 %v71
  %v73 = vand.u32 %v36, 4294901760
  %74 = vmatpush.msra.mxu0 %v73
  %v75 = vand.u32 %v35, 4294901760
  %76 = vmatpush.msra.mxu0 %v75
  %v77 = vand.u32 %v34, 4294901760
  %78 = vmatpush.msra.mxu0 %v77
  %v79 = vand.u32 %v33, 4294901760
  %80 = vmatpush.msra.mxu0 %v79
  %v81 = vand.u32 %v32, 4294901760
  %82 = vmatpush.msra.mxu0 %v81
  %v83 = vand.u32 %v31, 4294901760
  %84 = vmatpush.msra.mxu0 %v83
  %v85 = vand.u32 %v30, 4294901760
  %86 = vmatpush.msra.mxu0 %v85
  %v87 = vand.u32 %v29, 4294901760
  %88 = vmatpush.msra.mxu0 %v87
  %v89 = vand.u32 %v46, 4294901760
  %v90 = vsub.f32 %v46, %v89
  %v91 = vand.u32 %v90, 4294901760
  %v92 = vsub.f32 %v90, %v91
  %v93 = vand.u32 %v92, 4294901760
  %94 = vmatmul.f32.gmra.mxu0 %v93
  %v95 = vpop.f32.mrf.mxu0
  %v96 = vadd.f32 %v55, %v95
  %v97 = vand.u32 %v47, 4294901760
  %v98 = vsub.f32 %v47, %v97
  %v99 = vand.u32 %v98, 4294901760
  %v100 = vsub.f32 %v98, %v99
  %v101 = vand.u32 %v100, 4294901760
  %102 = vmatmul.f32.gmra.mxu0 %v101
  %v103 = vpop.f32.mrf.mxu0
  %v104 = vadd.f32 %v55, %v103
  %v105 = vand.u32 %v48, 4294901760
  %v106 = vsub.f32 %v48, %v105
  %v107 = vand.u32 %v106, 4294901760
  %v108 = vsub.f32 %v106, %v107
  %v109 = vand.u32 %v108, 4294901760
  %110 = vmatmul.f32.gmra.mxu0 %v109
  %v111 = vpop.f32.mrf.mxu0
  %v112 = vadd.f32 %v55, %v111
  %v113 = vand.u32 %v49, 4294901760
  %v114 = vsub.f32 %v49, %v113
  %v115 = vand.u32 %v114, 4294901760
  %v116 = vsub.f32 %v114, %v115
  %v117 = vand.u32 %v116, 4294901760
  %118 = vmatmul.f32.gmra.mxu0 %v117
  %v119 = vpop.f32.mrf.mxu0
  %v120 = vadd.f32 %v55, %v119
  %v121 = vand.u32 %v50, 4294901760
  %v122 = vsub.f32 %v50, %v121
  %v123 = vand.u32 %v122, 4294901760
  %v124 = vsub.f32 %v122, %v123
  %v125 = vand.u32 %v124, 4294901760
  %126 = vmatmul.f32.gmra.mxu0 %v125
  %v127 = vpop.f32.mrf.mxu0
  %v128 = vadd.f32 %v55, %v127
  %v129 = vand.u32 %v51, 4294901760
  %v130 = vsub.f32 %v51, %v129
  %v131 = vand.u32 %v130, 4294901760
  %v132 = vsub.f32 %v130, %v131
  %v133 = vand.u32 %v132, 4294901760
  %134 = vmatmul.f32.gmra.mxu0 %v133
  %v135 = vpop.f32.mrf.mxu0
  %v136 = vadd.f32 %v55, %v135
  %v137 = vand.u32 %v52, 4294901760
  %v138 = vsub.f32 %v52, %v137
  %v139 = vand.u32 %v138, 4294901760
  %v140 = vsub.f32 %v138, %v139
  %v141 = vand.u32 %v140, 4294901760
  %142 = vmatmul.f32.gmra.mxu0 %v141
  %v143 = vpop.f32.mrf.mxu0
  %v144 = vadd.f32 %v55, %v143
  %v145 = vand.u32 %v53, 4294901760
  %v146 = vsub.f32 %v53, %v145
  %v147 = vand.u32 %v146, 4294901760
  %v148 = vsub.f32 %v146, %v147
  %v149 = vand.u32 %v148, 4294901760
  %150 = vmatmul.f32.gmra.mxu0 %v149
  %v151 = vpop.f32.mrf.mxu0
  %v152 = vadd.f32 %v55, %v151
  %153 = vdwg.mxu0
  %v154 = vand.u32 %v44, 4294901760
  %v155 = vsub.f32 %v44, %v154
  %v156 = vand.u32 %v155, 4294901760
  %v157 = vsub.f32 %v155, %v156
  %v158 = vand.u32 %v157, 4294901760
  %159 = vmatpush.msra.mxu0 %v158
  %v160 = vand.u32 %v43, 4294901760
  %v161 = vsub.f32 %v43, %v160
  %v162 = vand.u32 %v161, 4294901760
  %v163 = vsub.f32 %v161, %v162
  %v164 = vand.u32 %v163, 4294901760
  %165 = vmatpush.msra.mxu0 %v164
  %v166 = vand.u32 %v42, 4294901760
  %v167 = vsub.f32 %v42, %v166
  %v168 = vand.u32 %v167, 4294901760
  %v169 = vsub.f32 %v167, %v168
  %v170 = vand.u32 %v169, 4294901760
  %171 = vmatpush.msra.mxu0 %v170
  %v172 = vand.u32 %v41, 4294901760
  %v173 = vsub.f32 %v41, %v172
  %v174 = vand.u32 %v173, 4294901760
  %v175 = vsub.f32 %v173, %v174
  %v176 = vand.u32 %v175, 4294901760
  %177 = vmatpush.msra.mxu0 %v176
  %v178 = vand.u32 %v40, 4294901760
  %v179 = vsub.f32 %v40, %v178
  %v180 = vand.u32 %v179, 4294901760
  %v181 = vsub.f32 %v179, %v180
  %v182 = vand.u32 %v181, 4294901760
  %183 = vmatpush.msra.mxu0 %v182
  %v184 = vand.u32 %v39, 4294901760
  %v185 = vsub.f32 %v39, %v184
  %v186 = vand.u32 %v185, 4294901760
  %v187 = vsub.f32 %v185, %v186
  %v188 = vand.u32 %v187, 4294901760
  %189 = vmatpush.msra.mxu0 %v188
  %v190 = vand.u32 %v38, 4294901760
  %v191 = vsub.f32 %v38, %v190
  %v192 = vand.u32 %v191, 4294901760
  %v193 = vsub.f32 %v191, %v192
  %v194 = vand.u32 %v193, 4294901760
  %195 = vmatpush.msra.mxu0 %v194
  %v196 = vand.u32 %v37, 4294901760
  %v197 = vsub.f32 %v37, %v196
  %v198 = vand.u32 %v197, 4294901760
  %v199 = vsub.f32 %v197, %v198
  %v200 = vand.u32 %v199, 4294901760
  %201 = vmatpush.msra.mxu0 %v200
  %v202 = vand.u32 %v36, 4294901760
  %v203 = vsub.f32 %v36, %v202
  %v204 = vand.u32 %v203, 4294901760
  %v205 = vsub.f32 %v203, %v204
  %v206 = vand.u32 %v205, 4294901760
  %207 = vmatpush.msra.mxu0 %v206
  %v208 = vand.u32 %v35, 4294901760
  %v209 = vsub.f32 %v35, %v208
  %v210 = vand.u32 %v209, 4294901760
  %v211 = vsub.f32 %v209, %v210
  %v212 = vand.u32 %v211, 4294901760
  %213 = vmatpush.msra.mxu0 %v212
  %v214 = vand.u32 %v34, 4294901760
  %v215 = vsub.f32 %v34, %v214
  %v216 = vand.u32 %v215, 4294901760
  %v217 = vsub.f32 %v215, %v216
  %v218 = vand.u32 %v217, 4294901760
  %219 = vmatpush.msra.mxu0 %v218
  %v220 = vand.u32 %v33, 4294901760
  %v221 = vsub.f32 %v33, %v220
  %v222 = vand.u32 %v221, 4294901760
  %v223 = vsub.f32 %v221, %v222
  %v224 = vand.u32 %v223, 4294901760
  %225 = vmatpush.msra.mxu0 %v224
  %v226 = vand.u32 %v32, 4294901760
  %v227 = vsub.f32 %v32, %v226
  %v228 = vand.u32 %v227, 4294901760
  %v229 = vsub.f32 %v227, %v228
  %v230 = vand.u32 %v229, 4294901760
  %231 = vmatpush.msra.mxu0 %v230
  %v232 = vand.u32 %v31, 4294901760
  %v233 = vsub.f32 %v31, %v232
  %v234 = vand.u32 %v233, 4294901760
  %v235 = vsub.f32 %v233, %v234
  %v236 = vand.u32 %v235, 4294901760
  %237 = vmatpush.msra.mxu0 %v236
  %v238 = vand.u32 %v30, 4294901760
  %v239 = vsub.f32 %v30, %v238
  %v240 = vand.u32 %v239, 4294901760
  %v241 = vsub.f32 %v239, %v240
  %v242 = vand.u32 %v241, 4294901760
  %243 = vmatpush.msra.mxu0 %v242
  %v244 = vand.u32 %v29, 4294901760
  %v245 = vsub.f32 %v29, %v244
  %v246 = vand.u32 %v245, 4294901760
  %v247 = vsub.f32 %v245, %v246
  %v248 = vand.u32 %v247, 4294901760
  %249 = vmatpush.msra.mxu0 %v248
  %v250 = vand.u32 %v46, 4294901760
  %251 = vmatmul.f32.gmra.mxu0 %v250
  %v252 = vpop.f32.mrf.mxu0
  %v253 = vadd.f32 %v96, %v252
  %v254 = vand.u32 %v47, 4294901760
  %255 = vmatmul.f32.gmra.mxu0 %v254
  %v256 = vpop.f32.mrf.mxu0
  %v257 = vadd.f32 %v104, %v256
  %v258 = vand.u32 %v48, 4294901760
  %259 = vmatmul.f32.gmra.mxu0 %v258
  %v260 = vpop.f32.mrf.mxu0
  %v261 = vadd.f32 %v112, %v260
  %v262 = vand.u32 %v49, 4294901760
  %263 = vmatmul.f32.gmra.mxu0 %v262
  %v264 = vpop.f32.mrf.mxu0
  %v265 = vadd.f32 %v120, %v264
  %v266 = vand.u32 %v50, 4294901760
  %267 = vmatmul.f32.gmra.mxu0 %v266
  %v268 = vpop.f32.mrf.mxu0
  %v269 = vadd.f32 %v128, %v268
  %v270 = vand.u32 %v51, 4294901760
  %271 = vmatmul.f32.gmra.mxu0 %v270
  %v272 = vpop.f32.mrf.mxu0
  %v273 = vadd.f32 %v136, %v272
  %v274 = vand.u32 %v52, 4294901760
  %275 = vmatmul.f32.gmra.mxu0 %v274
  %v276 = vpop.f32.mrf.mxu0
  %v277 = vadd.f32 %v144, %v276
  %v278 = vand.u32 %v53, 4294901760
  %279 = vmatmul.f32.gmra.mxu0 %v278
  %v280 = vpop.f32.mrf.mxu0
  %v281 = vadd.f32 %v152, %v280
  %282 = vdwg.mxu0
  %v283 = vand.u32 %v44, 4294901760
  %v284 = vsub.f32 %v44, %v283
  %285 = vmatpush.msra.mxu0 %v284
  %v286 = vand.u32 %v43, 4294901760
  %v287 = vsub.f32 %v43, %v286
  %288 = vmatpush.msra.mxu0 %v287
  %v289 = vand.u32 %v42, 4294901760
  %v290 = vsub.f32 %v42, %v289
  %291 = vmatpush.msra.mxu0 %v290
  %v292 = vand.u32 %v41, 4294901760
  %v293 = vsub.f32 %v41, %v292
  %294 = vmatpush.msra.mxu0 %v293
  %v295 = vand.u32 %v40, 4294901760
  %v296 = vsub.f32 %v40, %v295
  %297 = vmatpush.msra.mxu0 %v296
  %v298 = vand.u32 %v39, 4294901760
  %v299 = vsub.f32 %v39, %v298
  %300 = vmatpush.msra.mxu0 %v299
  %v301 = vand.u32 %v38, 4294901760
  %v302 = vsub.f32 %v38, %v301
  %303 = vmatpush.msra.mxu0 %v302
  %v304 = vand.u32 %v37, 4294901760
  %v305 = vsub.f32 %v37, %v304
  %306 = vmatpush.msra.mxu0 %v305
  %v307 = vand.u32 %v36, 4294901760
  %v308 = vsub.f32 %v36, %v307
  %309 = vmatpush.msra.mxu0 %v308
  %v310 = vand.u32 %v35, 4294901760
  %v311 = vsub.f32 %v35, %v310
  %312 = vmatpush.msra.mxu0 %v311
  %v313 = vand.u32 %v34, 4294901760
  %v314 = vsub.f32 %v34, %v313
  %315 = vmatpush.msra.mxu0 %v314
  %v316 = vand.u32 %v33, 4294901760
  %v317 = vsub.f32 %v33, %v316
  %318 = vmatpush.msra.mxu0 %v317
  %v319 = vand.u32 %v32, 4294901760
  %v320 = vsub.f32 %v32, %v319
  %321 = vmatpush.msra.mxu0 %v320
  %v322 = vand.u32 %v31, 4294901760
  %v323 = vsub.f32 %v31, %v322
  %324 = vmatpush.msra.mxu0 %v323
  %v325 = vand.u32 %v30, 4294901760
  %v326 = vsub.f32 %v30, %v325
  %327 = vmatpush.msra.mxu0 %v326
  %v328 = vand.u32 %v29, 4294901760
  %v329 = vsub.f32 %v29, %v328
  %330 = vmatpush.msra.mxu0 %v329
  %v331 = vand.u32 %v46, 4294901760
  %v332 = vsub.f32 %v46, %v331
  %333 = vmatmul.f32.gmra.mxu0 %v332
  %v334 = vpop.f32.mrf.mxu0
  %v335 = vadd.f32 %v253, %v334
  %v336 = vand.u32 %v47, 4294901760
  %v337 = vsub.f32 %v47, %v336
  %338 = vmatmul.f32.gmra.mxu0 %v337
  %v339 = vpop.f32.mrf.mxu0
  %v340 = vadd.f32 %v257, %v339
  %v341 = vand.u32 %v48, 4294901760
  %v342 = vsub.f32 %v48, %v341
  %343 = vmatmul.f32.gmra.mxu0 %v342
  %v344 = vpop.f32.mrf.mxu0
  %v345 = vadd.f32 %v261, %v344
  %v346 = vand.u32 %v49, 4294901760
  %v347 = vsub.f32 %v49, %v346
  %348 = vmatmul.f32.gmra.mxu0 %v347
  %v349 = vpop.f32.mrf.mxu0
  %v350 = vadd.f32 %v265, %v349
  %v351 = vand.u32 %v50, 4294901760
  %v352 = vsub.f32 %v50, %v351
  %353 = vmatmul.f32.gmra.mxu0 %v352
  %v354 = vpop.f32.mrf.mxu0
  %v355 = vadd.f32 %v269, %v354
  %v356 = vand.u32 %v51, 4294901760
  %v357 = vsub.f32 %v51, %v356
  %358 = vmatmul.f32.gmra.mxu0 %v357
  %v359 = vpop.f32.mrf.mxu0
  %v360 = vadd.f32 %v273, %v359
  %v361 = vand.u32 %v52, 4294901760
  %v362 = vsub.f32 %v52, %v361
  %363 = vmatmul.f32.gmra.mxu0 %v362
  %v364 = vpop.f32.mrf.mxu0
  %v365 = vadd.f32 %v277, %v364
  %v366 = vand.u32 %v53, 4294901760
  %v367 = vsub.f32 %v53, %v366
  %368 = vmatmul.f32.gmra.mxu0 %v367
  %v369 = vpop.f32.mrf.mxu0
  %v370 = vadd.f32 %v281, %v369
  %371 = vdwg.mxu0
  %v372 = vand.u32 %v44, 4294901760
  %373 = vmatpush.msra.mxu0 %v372
  %v374 = vand.u32 %v43, 4294901760
  %375 = vmatpush.msra.mxu0 %v374
  %v376 = vand.u32 %v42, 4294901760
  %377 = vmatpush.msra.mxu0 %v376
  %v378 = vand.u32 %v41, 4294901760
  %379 = vmatpush.msra.mxu0 %v378
  %v380 = vand.u32 %v40, 4294901760
  %381 = vmatpush.msra.mxu0 %v380
  %v382 = vand.u32 %v39, 4294901760
  %383 = vmatpush.msra.mxu0 %v382
  %v384 = vand.u32 %v38, 4294901760
  %385 = vmatpush.msra.mxu0 %v384
  %v386 = vand.u32 %v37, 4294901760
  %387 = vmatpush.msra.mxu0 %v386
  %v388 = vand.u32 %v36, 4294901760
  %389 = vmatpush.msra.mxu0 %v388
  %v390 = vand.u32 %v35, 4294901760
  %391 = vmatpush.msra.mxu0 %v390
  %v392 = vand.u32 %v34, 4294901760
  %393 = vmatpush.msra.mxu0 %v392
  %v394 = vand.u32 %v33, 4294901760
  %395 = vmatpush.msra.mxu0 %v394
  %v396 = vand.u32 %v32, 4294901760
  %397 = vmatpush.msra.mxu0 %v396
  %v398 = vand.u32 %v31, 4294901760
  %399 = vmatpush.msra.mxu0 %v398
  %v400 = vand.u32 %v30, 4294901760
  %401 = vmatpush.msra.mxu0 %v400
  %v402 = vand.u32 %v29, 4294901760
  %403 = vmatpush.msra.mxu0 %v402
  %v404 = vand.u32 %v46, 4294901760
  %v405 = vsub.f32 %v46, %v404
  %v406 = vand.u32 %v405, 4294901760
  %407 = vmatmul.f32.gmra.mxu0 %v406
  %v408 = vpop.f32.mrf.mxu0
  %v409 = vadd.f32 %v335, %v408
  %v410 = vand.u32 %v47, 4294901760
  %v411 = vsub.f32 %v47, %v410
  %v412 = vand.u32 %v411, 4294901760
  %413 = vmatmul.f32.gmra.mxu0 %v412
  %v414 = vpop.f32.mrf.mxu0
  %v415 = vadd.f32 %v340, %v414
  %v416 = vand.u32 %v48, 4294901760
  %v417 = vsub.f32 %v48, %v416
  %v418 = vand.u32 %v417, 4294901760
  %419 = vmatmul.f32.gmra.mxu0 %v418
  %v420 = vpop.f32.mrf.mxu0
  %v421 = vadd.f32 %v345, %v420
  %v422 = vand.u32 %v49, 4294901760
  %v423 = vsub.f32 %v49, %v422
  %v424 = vand.u32 %v423, 4294901760
  %425 = vmatmul.f32.gmra.mxu0 %v424
  %v426 = vpop.f32.mrf.mxu0
  %v427 = vadd.f32 %v350, %v426
  %v428 = vand.u32 %v50, 4294901760
  %v429 = vsub.f32 %v50, %v428
  %v430 = vand.u32 %v429, 4294901760
  %431 = vmatmul.f32.gmra.mxu0 %v430
  %v432 = vpop.f32.mrf.mxu0
  %v433 = vadd.f32 %v355, %v432
  %v434 = vand.u32 %v51, 4294901760
  %v435 = vsub.f32 %v51, %v434
  %v436 = vand.u32 %v435, 4294901760
  %437 = vmatmul.f32.gmra.mxu0 %v436
  %v438 = vpop.f32.mrf.mxu0
  %v439 = vadd.f32 %v360, %v438
  %v440 = vand.u32 %v52, 4294901760
  %v441 = vsub.f32 %v52, %v440
  %v442 = vand.u32 %v441, 4294901760
  %443 = vmatmul.f32.gmra.mxu0 %v442
  %v444 = vpop.f32.mrf.mxu0
  %v445 = vadd.f32 %v365, %v444
  %v446 = vand.u32 %v53, 4294901760
  %v447 = vsub.f32 %v53, %v446
  %v448 = vand.u32 %v447, 4294901760
  %449 = vmatmul.f32.gmra.mxu0 %v448
  %v450 = vpop.f32.mrf.mxu0
  %v451 = vadd.f32 %v370, %v450
  %452 = vdwg.mxu0
  %v453 = vand.u32 %v44, 4294901760
  %v454 = vsub.f32 %v44, %v453
  %v455 = vand.u32 %v454, 4294901760
  %456 = vmatpush.msra.mxu0 %v455
  %v457 = vand.u32 %v43, 4294901760
  %v458 = vsub.f32 %v43, %v457
  %v459 = vand.u32 %v458, 4294901760
  %460 = vmatpush.msra.mxu0 %v459
  %v461 = vand.u32 %v42, 4294901760
  %v462 = vsub.f32 %v42, %v461
  %v463 = vand.u32 %v462, 4294901760
  %464 = vmatpush.msra.mxu0 %v463
  %v465 = vand.u32 %v41, 4294901760
  %v466 = vsub.f32 %v41, %v465
  %v467 = vand.u32 %v466, 4294901760
  %468 = vmatpush.msra.mxu0 %v467
  %v469 = vand.u32 %v40, 4294901760
  %v470 = vsub.f32 %v40, %v469
  %v471 = vand.u32 %v470, 4294901760
  %472 = vmatpush.msra.mxu0 %v471
  %v473 = vand.u32 %v39, 4294901760
  %v474 = vsub.f32 %v39, %v473
  %v475 = vand.u32 %v474, 4294901760
  %476 = vmatpush.msra.mxu0 %v475
  %v477 = vand.u32 %v38, 4294901760
  %v478 = vsub.f32 %v38, %v477
  %v479 = vand.u32 %v478, 4294901760
  %480 = vmatpush.msra.mxu0 %v479
  %v481 = vand.u32 %v37, 4294901760
  %v482 = vsub.f32 %v37, %v481
  %v483 = vand.u32 %v482, 4294901760
  %484 = vmatpush.msra.mxu0 %v483
  %v485 = vand.u32 %v36, 4294901760
  %v486 = vsub.f32 %v36, %v485
  %v487 = vand.u32 %v486, 4294901760
  %488 = vmatpush.msra.mxu0 %v487
  %v489 = vand.u32 %v35, 4294901760
  %v490 = vsub.f32 %v35, %v489
  %v491 = vand.u32 %v490, 4294901760
  %492 = vmatpush.msra.mxu0 %v491
  %v493 = vand.u32 %v34, 4294901760
  %v494 = vsub.f32 %v34, %v493
  %v495 = vand.u32 %v494, 4294901760
  %496 = vmatpush.msra.mxu0 %v495
  %v497 = vand.u32 %v33, 4294901760
  %v498 = vsub.f32 %v33, %v497
  %v499 = vand.u32 %v498, 4294901760
  %500 = vmatpush.msra.mxu0 %v499
  %v501 = vand.u32 %v32, 4294901760
  %v502 = vsub.f32 %v32, %v501
  %v503 = vand.u32 %v502, 4294901760
  %504 = vmatpush.msra.mxu0 %v503
  %v505 = vand.u32 %v31, 4294901760
  %v506 = vsub.f32 %v31, %v505
  %v507 = vand.u32 %v506, 4294901760
  %508 = vmatpush.msra.mxu0 %v507
  %v509 = vand.u32 %v30, 4294901760
  %v510 = vsub.f32 %v30, %v509
  %v511 = vand.u32 %v510, 4294901760
  %512 = vmatpush.msra.mxu0 %v511
  %v513 = vand.u32 %v29, 4294901760
  %v514 = vsub.f32 %v29, %v513
  %v515 = vand.u32 %v514, 4294901760
  %516 = vmatpush.msra.mxu0 %v515
  %v517 = vand.u32 %v46, 4294901760
  %518 = vmatmul.f32.gmra.mxu0 %v517
  %v519 = vpop.f32.mrf.mxu0
  %v520 = vadd.f32 %v409, %v519
  %v521 = vand.u32 %v47, 4294901760
  %522 = vmatmul.f32.gmra.mxu0 %v521
  %v523 = vpop.f32.mrf.mxu0
  %v524 = vadd.f32 %v415, %v523
  %v525 = vand.u32 %v48, 4294901760
  %526 = vmatmul.f32.gmra.mxu0 %v525
  %v527 = vpop.f32.mrf.mxu0
  %v528 = vadd.f32 %v421, %v527
  %v529 = vand.u32 %v49, 4294901760
  %530 = vmatmul.f32.gmra.mxu0 %v529
  %v531 = vpop.f32.mrf.mxu0
  %v532 = vadd.f32 %v427, %v531
  %v533 = vand.u32 %v50, 4294901760
  %534 = vmatmul.f32.gmra.mxu0 %v533
  %v535 = vpop.f32.mrf.mxu0
  %v536 = vadd.f32 %v433, %v535
  %v537 = vand.u32 %v51, 4294901760
  %538 = vmatmul.f32.gmra.mxu0 %v537
  %v539 = vpop.f32.mrf.mxu0
  %v540 = vadd.f32 %v439, %v539
  %v541 = vand.u32 %v52, 4294901760
  %542 = vmatmul.f32.gmra.mxu0 %v541
  %v543 = vpop.f32.mrf.mxu0
  %v544 = vadd.f32 %v445, %v543
  %v545 = vand.u32 %v53, 4294901760
  %546 = vmatmul.f32.gmra.mxu0 %v545
  %v547 = vpop.f32.mrf.mxu0
  %v548 = vadd.f32 %v451, %v547
  %549 = vdwg.mxu0
  %v550 = vand.u32 %v44, 4294901760
  %551 = vmatpush.msra.mxu0 %v550
  %v552 = vand.u32 %v43, 4294901760
  %553 = vmatpush.msra.mxu0 %v552
  %v554 = vand.u32 %v42, 4294901760
  %555 = vmatpush.msra.mxu0 %v554
  %v556 = vand.u32 %v41, 4294901760
  %557 = vmatpush.msra.mxu0 %v556
  %v558 = vand.u32 %v40, 4294901760
  %559 = vmatpush.msra.mxu0 %v558
  %v560 = vand.u32 %v39, 4294901760
  %561 = vmatpush.msra.mxu0 %v560
  %v562 = vand.u32 %v38, 4294901760
  %563 = vmatpush.msra.mxu0 %v562
  %v564 = vand.u32 %v37, 4294901760
  %565 = vmatpush.msra.mxu0 %v564
  %v566 = vand.u32 %v36, 4294901760
  %567 = vmatpush.msra.mxu0 %v566
  %v568 = vand.u32 %v35, 4294901760
  %569 = vmatpush.msra.mxu0 %v568
  %v570 = vand.u32 %v34, 4294901760
  %571 = vmatpush.msra.mxu0 %v570
  %v572 = vand.u32 %v33, 4294901760
  %573 = vmatpush.msra.mxu0 %v572
  %v574 = vand.u32 %v32, 4294901760
  %575 = vmatpush.msra.mxu0 %v574
  %v576 = vand.u32 %v31, 4294901760
  %577 = vmatpush.msra.mxu0 %v576
  %v578 = vand.u32 %v30, 4294901760
  %579 = vmatpush.msra.mxu0 %v578
  %v580 = vand.u32 %v29, 4294901760
  %581 = vmatpush.msra.mxu0 %v580
  %v582 = vand.u32 %v46, 4294901760
  %583 = vmatmul.f32.gmra.mxu0 %v582
  %v584 = vpop.f32.mrf.mxu0
  %v585 = vadd.f32 %v520, %v584
  %v586 = vand.u32 %v47, 4294901760
  %587 = vmatmul.f32.gmra.mxu0 %v586
  %v588 = vpop.f32.mrf.mxu0
  %v589 = vadd.f32 %v524, %v588
  %v590 = vand.u32 %v48, 4294901760
  %591 = vmatmul.f32.gmra.mxu0 %v590
  %v592 = vpop.f32.mrf.mxu0
  %v593 = vadd.f32 %v528, %v592
  %v594 = vand.u32 %v49, 4294901760
  %595 = vmatmul.f32.gmra.mxu0 %v594
  %v596 = vpop.f32.mrf.mxu0
  %v597 = vadd.f32 %v532, %v596
  %v598 = vand.u32 %v50, 4294901760
  %599 = vmatmul.f32.gmra.mxu0 %v598
  %v600 = vpop.f32.mrf.mxu0
  %v601 = vadd.f32 %v536, %v600
  %v602 = vand.u32 %v51, 4294901760
  %603 = vmatmul.f32.gmra.mxu0 %v602
  %v604 = vpop.f32.mrf.mxu0
  %v605 = vadd.f32 %v540, %v604
  %v606 = vand.u32 %v52, 4294901760
  %607 = vmatmul.f32.gmra.mxu0 %v606
  %v608 = vpop.f32.mrf.mxu0
  %v609 = vadd.f32 %v544, %v608
  %v610 = vand.u32 %v53, 4294901760
  %611 = vmatmul.f32.gmra.mxu0 %v610
  %v612 = vpop.f32.mrf.mxu0
  %v613 = vadd.f32 %v548, %v612
  %614 = vdwg.mxu0
  %v615 = vrot.slane %v593, 4
  %vm616 = vcmask 1047556
  %v617 = vsel %vm616, %v615, %v585
  %v618 = vrot.slane %v585, 4
  %v619 = vsel %vm616, %v593, %v618
  %v621 = vunpack.c.l.s4 1983009808
  %v622 = vunpack.c.0.s8 %v621
  %v623 = vperm.slane %v617, %v622
  %v625 = vunpack.c.l.s4 1983009808
  %v626 = vunpack.c.0.s8 %v625
  %v627 = vperm.slane %v619, %v626
  %v628 = vrot.slane %v597, 4
  %v629 = vsel %vm616, %v628, %v589
  %v630 = vrot.slane %v589, 4
  %v631 = vsel %vm616, %v597, %v630
  %v633 = vunpack.c.l.s4 1983009808
  %v634 = vunpack.c.0.s8 %v633
  %v635 = vperm.slane %v629, %v634
  %v637 = vunpack.c.l.s4 1983009808
  %v638 = vunpack.c.0.s8 %v637
  %v639 = vperm.slane %v631, %v638
  %v640 = vrot.slane %v609, 4
  %v641 = vsel %vm616, %v640, %v601
  %v642 = vrot.slane %v601, 4
  %v643 = vsel %vm616, %v609, %v642
  %v645 = vunpack.c.l.s4 1983009808
  %v646 = vunpack.c.0.s8 %v645
  %v647 = vperm.slane %v641, %v646
  %v649 = vunpack.c.l.s4 1983009808
  %v650 = vunpack.c.0.s8 %v649
  %v651 = vperm.slane %v643, %v650
  %v652 = vrot.slane %v613, 4
  %v653 = vsel %vm616, %v652, %v605
  %v654 = vrot.slane %v605, 4
  %v655 = vsel %vm616, %v613, %v654
  %v657 = vunpack.c.l.s4 1983009808
  %v658 = vunpack.c.0.s8 %v657
  %v659 = vperm.slane %v653, %v658
  %v661 = vunpack.c.l.s4 1983009808
  %v662 = vunpack.c.0.s8 %v661
  %v663 = vperm.slane %v655, %v662
  %v664 = vrot.slane %v635, 4
  %v665 = vsel %vm616, %v664, %v623
  %v666 = vrot.slane %v623, 4
  %v667 = vsel %vm616, %v635, %v666
  %v669 = vunpack.c.l.s4 1934713408
  %v670 = vunpack.c.0.s8 %v669
  %v671 = vperm.slane %v665, %v670
  %v673 = vunpack.c.l.s4 1934713408
  %v674 = vunpack.c.0.s8 %v673
  %v675 = vperm.slane %v667, %v674
  %v676 = vrot.slane %v639, 4
  %v677 = vsel %vm616, %v676, %v627
  %v678 = vrot.slane %v627, 4
  %v679 = vsel %vm616, %v639, %v678
  %v681 = vunpack.c.l.s4 1934713408
  %v682 = vunpack.c.0.s8 %v681
  %v683 = vperm.slane %v677, %v682
  %v685 = vunpack.c.l.s4 1934713408
  %v686 = vunpack.c.0.s8 %v685
  %v687 = vperm.slane %v679, %v686
  %v688 = vrot.slane %v659, 4
  %v689 = vsel %vm616, %v688, %v647
  %v690 = vrot.slane %v647, 4
  %v691 = vsel %vm616, %v659, %v690
  %v693 = vunpack.c.l.s4 1934713408
  %v694 = vunpack.c.0.s8 %v693
  %v695 = vperm.slane %v689, %v694
  %v697 = vunpack.c.l.s4 1934713408
  %v698 = vunpack.c.0.s8 %v697
  %v699 = vperm.slane %v691, %v698
  %v700 = vrot.slane %v663, 4
  %v701 = vsel %vm616, %v700, %v651
  %v702 = vrot.slane %v651, 4
  %v703 = vsel %vm616, %v663, %v702
  %v705 = vunpack.c.l.s4 1934713408
  %v706 = vunpack.c.0.s8 %v705
  %v707 = vperm.slane %v701, %v706
  %v709 = vunpack.c.l.s4 1934713408
  %v710 = vunpack.c.0.s8 %v709
  %v711 = vperm.slane %v703, %v710
  %v712 = vrot.slane %v695, 4
  %v713 = vsel %vm616, %v712, %v671
  %v714 = vrot.slane %v671, 4
  %v715 = vsel %vm616, %v695, %v714
  %v716 = vrot.slane %v699, 4
  %v717 = vsel %vm616, %v716, %v675
  %v718 = vrot.slane %v675, 4
  %v719 = vsel %vm616, %v699, %v718
  %v720 = vrot.slane %v707, 4
  %v721 = vsel %vm616, %v720, %v683
  %v722 = vrot.slane %v683, 4
  %v723 = vsel %vm616, %v707, %v722
  %v724 = vrot.slane %v711, 4
  %v725 = vsel %vm616, %v724, %v687
  %v726 = vrot.slane %v687, 4
  %v727 = vsel %vm616, %v711, %v726
  %728 = vst [vmem:[#allocation2] sm:$0xff] %v713
  %729 = vst [vmem:[#allocation2 + $0x8] sm:$0xff] %v715
  %730 = vst [vmem:[#allocation2 + $0x10] sm:$0xff] %v717
  %731 = vst [vmem:[#allocation2 + $0x18] sm:$0xff] %v719
  %732 = vst [vmem:[#allocation2 + $0x20] sm:$0xff] %v721
  %733 = vst [vmem:[#allocation2 + $0x28] sm:$0xff] %v723
  %734 = vst [vmem:[#allocation2 + $0x30] sm:$0xff] %v725
  %735 = vst [vmem:[#allocation2 + $0x38] sm:$0xff] %v727
  %v736 = vld [vmem:[%s5] sm:$0x1]
  %v737 = vld [vmem:[%s6] sm:$0x1]
  %v738 = vld [vmem:[%s7] sm:$0xff]
  %v739 = vld [vmem:[%s7 + $0x8] sm:$0xff]
  %v740 = vld [vmem:[%s7 + $0x10] sm:$0xff]
  %v741 = vld [vmem:[%s7 + $0x18] sm:$0xff]
  %v742 = vld [vmem:[%s7 + $0x20] sm:$0xff]
  %v743 = vld [vmem:[%s7 + $0x28] sm:$0xff]
  %v744 = vld [vmem:[%s7 + $0x30] sm:$0xff]
  %v745 = vld [vmem:[%s7 + $0x38] sm:$0xff]
  %v746 = vld [vmem:[%s7 + $0x40] sm:$0xff]
  %v747 = vld [vmem:[%s7 + $0x48] sm:$0xff]
  %v748 = vld [vmem:[%s7 + $0x50] sm:$0xff]
  %v749 = vld [vmem:[%s7 + $0x58] sm:$0xff]
  %v750 = vld [vmem:[%s7 + $0x60] sm:$0xff]
  %v751 = vld [vmem:[%s7 + $0x68] sm:$0xff]
  %v752 = vld [vmem:[%s7 + $0x70] sm:$0xff]
  %v753 = vld [vmem:[%s7 + $0x78] sm:$0xff]
  %v754 = vmax.f32 %v738, %v742
  %v755 = vmax.f32 %v739, %v743
  %v756 = vmax.f32 %v740, %v744
  %v757 = vmax.f32 %v741, %v745
  %v758 = vmax.f32 %v754, %v746
  %v759 = vmax.f32 %v755, %v747
  %v760 = vmax.f32 %v756, %v748
  %v761 = vmax.f32 %v757, %v749
  %v762 = vmax.f32 %v758, %v750
  %v763 = vmax.f32 %v759, %v751
  %v764 = vmax.f32 %v760, %v752
  %v765 = vmax.f32 %v761, %v753
  %v766 = vmax.f32 %v762, %v763
  %v767 = vmax.f32 %v764, %v765
  %v768 = vmax.f32 %v766, %v767
  %v769 = vrot.slane %v768, 4
  %v770 = vmax.f32 %v768, %v769
  %v771 = vrot.slane %v770, 2
  %v772 = vmax.f32 %v770, %v771
  %v773 = vrot.slane %v772, 1
  %v774 = vmax.f32 %v772, %v773
  %v775 = vsub.f32 %v738, %v774
  %v776 = vsub.f32 %v739, %v774
  %v777 = vsub.f32 %v740, %v774
  %v778 = vsub.f32 %v741, %v774
  %v779 = vsub.f32 %v742, %v774
  %v780 = vsub.f32 %v743, %v774
  %v781 = vsub.f32 %v744, %v774
  %v782 = vsub.f32 %v745, %v774
  %v783 = vsub.f32 %v746, %v774
  %v784 = vsub.f32 %v747, %v774
  %v785 = vsub.f32 %v748, %v774
  %v786 = vsub.f32 %v749, %v774
  %v787 = vsub.f32 %v750, %v774
  %v788 = vsub.f32 %v751, %v774
  %v789 = vsub.f32 %v752, %v774
  %v790 = vsub.f32 %v753, %v774
  %v791 = vmul.f32 %v775, 1.442695
  %v792 = vpow.pop %v791
  %v793 = vmul.f32 %v776, 1.442695
  %v794 = vpow.pop %v793
  %v795 = vmul.f32 %v777, 1.442695
  %v796 = vpow.pop %v795
  %v797 = vmul.f32 %v778, 1.442695
  %v798 = vpow.pop %v797
  %v799 = vmul.f32 %v779, 1.442695
  %v800 = vpow.pop %v799
  %v801 = vmul.f32 %v780, 1.442695
  %v802 = vpow.pop %v801
  %v803 = vmul.f32 %v781, 1.442695
  %v804 = vpow.pop %v803
  %v805 = vmul.f32 %v782, 1.442695
  %v806 = vpow.pop %v805
  %v807 = vmul.f32 %v783, 1.442695
  %v808 = vpow.pop %v807
  %v809 = vmul.f32 %v784, 1.442695
  %v810 = vpow.pop %v809
  %v811 = vmul.f32 %v785, 1.442695
  %v812 = vpow.pop %v811
  %v813 = vmul.f32 %v786, 1.442695
  %v814 = vpow.pop %v813
  %v815 = vmul.f32 %v787, 1.442695
  %v816 = vpow.pop %v815
  %v817 = vmul.f32 %v788, 1.442695
  %v818 = vpow.pop %v817
  %v819 = vmul.f32 %v789, 1.442695
  %v820 = vpow.pop %v819
  %v821 = vmul.f32 %v790, 1.442695
  %v822 = vpow.pop %v821
  %v823 = vlaneseq
  %v824 = vand.u32 %v823, 127
  %v825 = vld [vmem:[#allocation2] sm:$0xff]
  %v826 = vld [vmem:[%s1] sm:$0xff]
  %827 = vset.pattern.permute.xlu0 0
  %828 = vperm.xlu0 %827, %v826
  %v829 = vpop.permute.xlu0 %828
  %vm830 = vcmp.eq.s32.totalorder %v824, %v829
  %v831 = vsel %vm830, 1, 0
  %v832 = vcvt.s32.f32 %v831
  %v834 = vperm.slane %v736, 0
  %v836 = vadd.f32 %v834, %v825
  %v837 = vmul.f32 %v836, %v832
  %838 = vadd.xlane.f32.xlu0 %v837
  %v839 = vpop.xlane.xlu0 %838
  %s840 = scalar_lea.vmem [#allocation2], 8
  %v841 = vld [vmem:[%s840] sm:$0xff]
  %s842 = scalar_lea.vmem %s2, 8
  %v843 = vld [vmem:[%s842] sm:$0xff]
  %s844 = scalar_lea.vmem %s1, 8
  %v845 = vld [vmem:[%s844] sm:$0xff]
  %846 = vset.pattern.permute.xlu0 0
  %847 = vperm.xlu0 %846, %v845
  %v848 = vpop.permute.xlu0 %847
  %vm849 = vcmp.eq.s32.totalorder %v824, %v848
  %v850 = vsel %vm849, 1, 0
  %v851 = vcvt.s32.f32 %v850
  %v852 = vmul.f32 %v841, %v851
  %853 = vadd.xlane.f32.xlu0 %v852
  %v854 = vpop.xlane.xlu0 %853
  %v855 = vand.u32 %v753, 4294901760
  %856 = vmatpush.msra.mxu0 %v855
  %v857 = vand.u32 %v752, 4294901760
  %858 = vmatpush.msra.mxu0 %v857
  %v859 = vand.u32 %v751, 4294901760
  %860 = vmatpush.msra.mxu0 %v859
  %v861 = vand.u32 %v750, 4294901760
  %862 = vmatpush.msra.mxu0 %v861
  %v863 = vand.u32 %v749, 4294901760
  %864 = vmatpush.msra.mxu0 %v863
  %v865 = vand.u32 %v748, 4294901760
  %866 = vmatpush.msra.mxu0 %v865
  %v867 = vand.u32 %v747, 4294901760
  %868 = vmatpush.msra.mxu0 %v867
  %v869 = vand.u32 %v746, 4294901760
  %870 = vmatpush.msra.mxu0 %v869
  %v871 = vand.u32 %v745, 4294901760
  %872 = vmatpush.msra.mxu0 %v871
  %v873 = vand.u32 %v744, 4294901760
  %874 = vmatpush.msra.mxu0 %v873
  %v875 = vand.u32 %v743, 4294901760
  %876 = vmatpush.msra.mxu0 %v875
  %v877 = vand.u32 %v742, 4294901760
  %878 = vmatpush.msra.mxu0 %v877
  %v879 = vand.u32 %v741, 4294901760
  %880 = vmatpush.msra.mxu0 %v879
  %v881 = vand.u32 %v740, 4294901760
  %882 = vmatpush.msra.mxu0 %v881
  %v883 = vand.u32 %v739, 4294901760
  %884 = vmatpush.msra.mxu0 %v883
  %v885 = vand.u32 %v738, 4294901760
  %886 = vmatpush.msra.mxu0 %v885
  %v887 = vand.u32 %v832, 4294901760
  %v888 = vsub.f32 %v832, %v887
  %v889 = vand.u32 %v888, 4294901760
  %v890 = vsub.f32 %v888, %v889
  %v891 = vand.u32 %v890, 4294901760
  %892 = vmatmul.f32.gmra.mxu0 %v891
  %v893 = vpop.f32.mrf.mxu0
  %v894 = vadd.f32 0.0, %v893
  %895 = vdwg.mxu0
  %v896 = vand.u32 %v753, 4294901760
  %v897 = vsub.f32 %v753, %v896
  %v898 = vand.u32 %v897, 4294901760
  %v899 = vsub.f32 %v897, %v898
  %v900 = vand.u32 %v899, 4294901760
  %901 = vmatpush.msra.mxu0 %v900
  %v902 = vand.u32 %v752, 4294901760
  %v903 = vsub.f32 %v752, %v902
  %v904 = vand.u32 %v903, 4294901760
  %v905 = vsub.f32 %v903, %v904
  %v906 = vand.u32 %v905, 4294901760
  %907 = vmatpush.msra.mxu0 %v906
  %v908 = vand.u32 %v751, 4294901760
  %v909 = vsub.f32 %v751, %v908
  %v910 = vand.u32 %v909, 4294901760
  %v911 = vsub.f32 %v909, %v910
  %v912 = vand.u32 %v911, 4294901760
  %913 = vmatpush.msra.mxu0 %v912
  %v914 = vand.u32 %v750, 4294901760
  %v915 = vsub.f32 %v750, %v914
  %v916 = vand.u32 %v915, 4294901760
  %v917 = vsub.f32 %v915, %v916
  %v918 = vand.u32 %v917, 4294901760
  %919 = vmatpush.msra.mxu0 %v918
  %v920 = vand.u32 %v749, 4294901760
  %v921 = vsub.f32 %v749, %v920
  %v922 = vand.u32 %v921, 4294901760
  %v923 = vsub.f32 %v921, %v922
  %v924 = vand.u32 %v923, 4294901760
  %925 = vmatpush.msra.mxu0 %v924
  %v926 = vand.u32 %v748, 4294901760
  %v927 = vsub.f32 %v748, %v926
  %v928 = vand.u32 %v927, 4294901760
  %v929 = vsub.f32 %v927, %v928
  %v930 = vand.u32 %v929, 4294901760
  %931 = vmatpush.msra.mxu0 %v930
  %v932 = vand.u32 %v747, 4294901760
  %v933 = vsub.f32 %v747, %v932
  %v934 = vand.u32 %v933, 4294901760
  %v935 = vsub.f32 %v933, %v934
  %v936 = vand.u32 %v935, 4294901760
  %937 = vmatpush.msra.mxu0 %v936
  %v938 = vand.u32 %v746, 4294901760
  %v939 = vsub.f32 %v746, %v938
  %v940 = vand.u32 %v939, 4294901760
  %v941 = vsub.f32 %v939, %v940
  %v942 = vand.u32 %v941, 4294901760
  %943 = vmatpush.msra.mxu0 %v942
  %v944 = vand.u32 %v745, 4294901760
  %v945 = vsub.f32 %v745, %v944
  %v946 = vand.u32 %v945, 4294901760
  %v947 = vsub.f32 %v945, %v946
  %v948 = vand.u32 %v947, 4294901760
  %949 = vmatpush.msra.mxu0 %v948
  %v950 = vand.u32 %v744, 4294901760
  %v951 = vsub.f32 %v744, %v950
  %v952 = vand.u32 %v951, 4294901760
  %v953 = vsub.f32 %v951, %v952
  %v954 = vand.u32 %v953, 4294901760
  %955 = vmatpush.msra.mxu0 %v954
  %v956 = vand.u32 %v743, 4294901760
  %v957 = vsub.f32 %v743, %v956
  %v958 = vand.u32 %v957, 4294901760
  %v959 = vsub.f32 %v957, %v958
  %v960 = vand.u32 %v959, 4294901760
  %961 = vmatpush.msra.mxu0 %v960
  %v962 = vand.u32 %v742, 4294901760
  %v963 = vsub.f32 %v742, %v962
  %v964 = vand.u32 %v963, 4294901760
  %v965 = vsub.f32 %v963, %v964
  %v966 = vand.u32 %v965, 4294901760
  %967 = vmatpush.msra.mxu0 %v966
  %v968 = vand.u32 %v741, 4294901760
  %v969 = vsub.f32 %v741, %v968
  %v970 = vand.u32 %v969, 4294901760
  %v971 = vsub.f32 %v969, %v970
  %v972 = vand.u32 %v971, 4294901760
  %973 = vmatpush.msra.mxu0 %v972
  %v974 = vand.u32 %v740, 4294901760
  %v975 = vsub.f32 %v740, %v974
  %v976 = vand.u32 %v975, 4294901760
  %v977 = vsub.f32 %v975, %v976
  %v978 = vand.u32 %v977, 4294901760
  %979 = vmatpush.msra.mxu0 %v978
  %v980 = vand.u32 %v739, 4294901760
  %v981 = vsub.f32 %v739, %v980
  %v982 = vand.u32 %v981, 4294901760
  %v983 = vsub.f32 %v981, %v982
  %v984 = vand.u32 %v983, 4294901760
  %985 = vmatpush.msra.mxu0 %v984
  %v986 = vand.u32 %v738, 4294901760
  %v987 = vsub.f32 %v738, %v986
  %v988 = vand.u32 %v987, 4294901760
  %v989 = vsub.f32 %v987, %v988
  %v990 = vand.u32 %v989, 4294901760
  %991 = vmatpush.msra.mxu0 %v990
  %v992 = vand.u32 %v832, 4294901760
  %993 = vmatmul.f32.gmra.mxu0 %v992
  %v994 = vpop.f32.mrf.mxu0
  %v995 = vadd.f32 %v894, %v994
  %996 = vdwg.mxu0
  %v997 = vand.u32 %v753, 4294901760
  %v998 = vsub.f32 %v753, %v997
  %999 = vmatpush.msra.mxu0 %v998
  %v1000 = vand.u32 %v752, 4294901760
  %v1001 = vsub.f32 %v752, %v1000
  %1002 = vmatpush.msra.mxu0 %v1001
  %v1003 = vand.u32 %v751, 4294901760
  %v1004 = vsub.f32 %v751, %v1003
  %1005 = vmatpush.msra.mxu0 %v1004
  %v1006 = vand.u32 %v750, 4294901760
  %v1007 = vsub.f32 %v750, %v1006
  %1008 = vmatpush.msra.mxu0 %v1007
  %v1009 = vand.u32 %v749, 4294901760
  %v1010 = vsub.f32 %v749, %v1009
  %1011 = vmatpush.msra.mxu0 %v1010
  %v1012 = vand.u32 %v748, 4294901760
  %v1013 = vsub.f32 %v748, %v1012
  %1014 = vmatpush.msra.mxu0 %v1013
  %v1015 = vand.u32 %v747, 4294901760
  %v1016 = vsub.f32 %v747, %v1015
  %1017 = vmatpush.msra.mxu0 %v1016
  %v1018 = vand.u32 %v746, 4294901760
  %v1019 = vsub.f32 %v746, %v1018
  %1020 = vmatpush.msra.mxu0 %v1019
  %v1021 = vand.u32 %v745, 4294901760
  %v1022 = vsub.f32 %v745, %v1021
  %1023 = vmatpush.msra.mxu0 %v1022
  %v1024 = vand.u32 %v744, 4294901760
  %v1025 = vsub.f32 %v744, %v1024
  %1026 = vmatpush.msra.mxu0 %v1025
  %v1027 = vand.u32 %v743, 4294901760
  %v1028 = vsub.f32 %v743, %v1027
  %1029 = vmatpush.msra.mxu0 %v1028
  %v1030 = vand.u32 %v742, 4294901760
  %v1031 = vsub.f32 %v742, %v1030
  %1032 = vmatpush.msra.mxu0 %v1031
  %v1033 = vand.u32 %v741, 4294901760
  %v1034 = vsub.f32 %v741, %v1033
  %1035 = vmatpush.msra.mxu0 %v1034
  %v1036 = vand.u32 %v740, 4294901760
  %v1037 = vsub.f32 %v740, %v1036
  %1038 = vmatpush.msra.mxu0 %v1037
  %v1039 = vand.u32 %v739, 4294901760
  %v1040 = vsub.f32 %v739, %v1039
  %1041 = vmatpush.msra.mxu0 %v1040
  %v1042 = vand.u32 %v738, 4294901760
  %v1043 = vsub.f32 %v738, %v1042
  %1044 = vmatpush.msra.mxu0 %v1043
  %v1045 = vand.u32 %v832, 4294901760
  %v1046 = vsub.f32 %v832, %v1045
  %1047 = vmatmul.f32.gmra.mxu0 %v1046
  %v1048 = vpop.f32.mrf.mxu0
  %v1049 = vadd.f32 %v995, %v1048
  %1050 = vdwg.mxu0
  %v1051 = vand.u32 %v753, 4294901760
  %1052 = vmatpush.msra.mxu0 %v1051
  %v1053 = vand.u32 %v752, 4294901760
  %1054 = vmatpush.msra.mxu0 %v1053
  %v1055 = vand.u32 %v751, 4294901760
  %1056 = vmatpush.msra.mxu0 %v1055
  %v1057 = vand.u32 %v750, 4294901760
  %1058 = vmatpush.msra.mxu0 %v1057
  %v1059 = vand.u32 %v749, 4294901760
  %1060 = vmatpush.msra.mxu0 %v1059
  %v1061 = vand.u32 %v748, 4294901760
  %1062 = vmatpush.msra.mxu0 %v1061
  %v1063 = vand.u32 %v747, 4294901760
  %1064 = vmatpush.msra.mxu0 %v1063
  %v1065 = vand.u32 %v746, 4294901760
  %1066 = vmatpush.msra.mxu0 %v1065
  %v1067 = vand.u32 %v745, 4294901760
  %1068 = vmatpush.msra.mxu0 %v1067
  %v1069 = vand.u32 %v744, 4294901760
  %1070 = vmatpush.msra.mxu0 %v1069
  %v1071 = vand.u32 %v743, 4294901760
  %1072 = vmatpush.msra.mxu0 %v1071
  %v1073 = vand.u32 %v742, 4294901760
  %1074 = vmatpush.msra.mxu0 %v1073
  %v1075 = vand.u32 %v741, 4294901760
  %1076 = vmatpush.msra.mxu0 %v1075
  %v1077 = vand.u32 %v740, 4294901760
  %1078 = vmatpush.msra.mxu0 %v1077
  %v1079 = vand.u32 %v739, 4294901760
  %1080 = vmatpush.msra.mxu0 %v1079
  %v1081 = vand.u32 %v738, 4294901760
  %1082 = vmatpush.msra.mxu0 %v1081
  %v1083 = vand.u32 %v832, 4294901760
  %v1084 = vsub.f32 %v832, %v1083
  %v1085 = vand.u32 %v1084, 4294901760
  %1086 = vmatmul.f32.gmra.mxu0 %v1085
  %v1087 = vpop.f32.mrf.mxu0
  %v1088 = vadd.f32 %v1049, %v1087
  %1089 = vdwg.mxu0
  %v1090 = vand.u32 %v753, 4294901760
  %v1091 = vsub.f32 %v753, %v1090
  %v1092 = vand.u32 %v1091, 4294901760
  %1093 = vmatpush.msra.mxu0 %v1092
  %v1094 = vand.u32 %v752, 4294901760
  %v1095 = vsub.f32 %v752, %v1094
  %v1096 = vand.u32 %v1095, 4294901760
  %1097 = vmatpush.msra.mxu0 %v1096
  %v1098 = vand.u32 %v751, 4294901760
  %v1099 = vsub.f32 %v751, %v1098
  %v1100 = vand.u32 %v1099, 4294901760
  %1101 = vmatpush.msra.mxu0 %v1100
  %v1102 = vand.u32 %v750, 4294901760
  %v1103 = vsub.f32 %v750, %v1102
  %v1104 = vand.u32 %v1103, 4294901760
  %1105 = vmatpush.msra.mxu0 %v1104
  %v1106 = vand.u32 %v749, 4294901760
  %v1107 = vsub.f32 %v749, %v1106
  %v1108 = vand.u32 %v1107, 4294901760
  %1109 = vmatpush.msra.mxu0 %v1108
  %v1110 = vand.u32 %v748, 4294901760
  %v1111 = vsub.f32 %v748, %v1110
  %v1112 = vand.u32 %v1111, 4294901760
  %1113 = vmatpush.msra.mxu0 %v1112
  %v1114 = vand.u32 %v747, 4294901760
  %v1115 = vsub.f32 %v747, %v1114
  %v1116 = vand.u32 %v1115, 4294901760
  %1117 = vmatpush.msra.mxu0 %v1116
  %v1118 = vand.u32 %v746, 4294901760
  %v1119 = vsub.f32 %v746, %v1118
  %v1120 = vand.u32 %v1119, 4294901760
  %1121 = vmatpush.msra.mxu0 %v1120
  %v1122 = vand.u32 %v745, 4294901760
  %v1123 = vsub.f32 %v745, %v1122
  %v1124 = vand.u32 %v1123, 4294901760
  %1125 = vmatpush.msra.mxu0 %v1124
  %v1126 = vand.u32 %v744, 4294901760
  %v1127 = vsub.f32 %v744, %v1126
  %v1128 = vand.u32 %v1127, 4294901760
  %1129 = vmatpush.msra.mxu0 %v1128
  %v1130 = vand.u32 %v743, 4294901760
  %v1131 = vsub.f32 %v743, %v1130
  %v1132 = vand.u32 %v1131, 4294901760
  %1133 = vmatpush.msra.mxu0 %v1132
  %v1134 = vand.u32 %v742, 4294901760
  %v1135 = vsub.f32 %v742, %v1134
  %v1136 = vand.u32 %v1135, 4294901760
  %1137 = vmatpush.msra.mxu0 %v1136
  %v1138 = vand.u32 %v741, 4294901760
  %v1139 = vsub.f32 %v741, %v1138
  %v1140 = vand.u32 %v1139, 4294901760
  %1141 = vmatpush.msra.mxu0 %v1140
  %v1142 = vand.u32 %v740, 4294901760
  %v1143 = vsub.f32 %v740, %v1142
  %v1144 = vand.u32 %v1143, 4294901760
  %1145 = vmatpush.msra.mxu0 %v1144
  %v1146 = vand.u32 %v739, 4294901760
  %v1147 = vsub.f32 %v739, %v1146
  %v1148 = vand.u32 %v1147, 4294901760
  %1149 = vmatpush.msra.mxu0 %v1148
  %v1150 = vand.u32 %v738, 4294901760
  %v1151 = vsub.f32 %v738, %v1150
  %v1152 = vand.u32 %v1151, 4294901760
  %1153 = vmatpush.msra.mxu0 %v1152
  %v1154 = vand.u32 %v832, 4294901760
  %1155 = vmatmul.f32.gmra.mxu0 %v1154
  %v1156 = vpop.f32.mrf.mxu0
  %v1157 = vadd.f32 %v1088, %v1156
  %1158 = vdwg.mxu0
  %v1159 = vand.u32 %v753, 4294901760
  %1160 = vmatpush.msra.mxu0 %v1159
  %v1161 = vand.u32 %v752, 4294901760
  %1162 = vmatpush.msra.mxu0 %v1161
  %v1163 = vand.u32 %v751, 4294901760
  %1164 = vmatpush.msra.mxu0 %v1163
  %v1165 = vand.u32 %v750, 4294901760
  %1166 = vmatpush.msra.mxu0 %v1165
  %v1167 = vand.u32 %v749, 4294901760
  %1168 = vmatpush.msra.mxu0 %v1167
  %v1169 = vand.u32 %v748, 4294901760
  %1170 = vmatpush.msra.mxu0 %v1169
  %v1171 = vand.u32 %v747, 4294901760
  %1172 = vmatpush.msra.mxu0 %v1171
  %v1173 = vand.u32 %v746, 4294901760
  %1174 = vmatpush.msra.mxu0 %v1173
  %v1175 = vand.u32 %v745, 4294901760
  %1176 = vmatpush.msra.mxu0 %v1175
  %v1177 = vand.u32 %v744, 4294901760
  %1178 = vmatpush.msra.mxu0 %v1177
  %v1179 = vand.u32 %v743, 4294901760
  %1180 = vmatpush.msra.mxu0 %v1179
  %v1181 = vand.u32 %v742, 4294901760
  %1182 = vmatpush.msra.mxu0 %v1181
  %v1183 = vand.u32 %v741, 4294901760
  %1184 = vmatpush.msra.mxu0 %v1183
  %v1185 = vand.u32 %v740, 4294901760
  %1186 = vmatpush.msra.mxu0 %v1185
  %v1187 = vand.u32 %v739, 4294901760
  %1188 = vmatpush.msra.mxu0 %v1187
  %v1189 = vand.u32 %v738, 4294901760
  %1190 = vmatpush.msra.mxu0 %v1189
  %v1191 = vand.u32 %v832, 4294901760
  %1192 = vmatmul.f32.gmra.mxu0 %v1191
  %v1193 = vpop.f32.mrf.mxu0
  %v1194 = vadd.f32 %v1157, %v1193
  %1195 = vdwg.mxu0
  %v1196 = vmul.f32 %v1194, %v851
  %1197 = vadd.xlane.f32.xlu0 %v1196
  %v1198 = vpop.xlane.xlu0 %1197
  %v1199 = vadd.f32 %v854, %v1198
  %v1200 = vmul.f32 %v843, %v1199
  %v1201 = vadd.f32 %v839, %v1200
  %vm1202 = vcmp.gt.f32.partialorder %v843, 0.0
  %v1203 = vsel %vm1202, 1, 0
  %1204 = vset.pattern.permute.xlu0 0
  %1205 = vperm.xlu0 %1204, %v1203
  %v1206 = vpop.permute.xlu0 %1205
  %vm1207 = vcmp.eq.s32.totalorder %v1206, 1
  %v1208 = vsel %vm1207, %v851, %v832
  %1209 = vmax.xlane.f32.xlu0 %v836
  %v1210 = vpop.xlane.xlu0 %1209
  %v1211 = vsub.f32 %v836, %v1210
  %v1212 = vmul.f32 %v1211, 1.442695
  %v1213 = vpow.pop %v1212
  %v1214 = vand.u32 %v822, 4294901760
  %1215 = vmatpush.msra.mxu0 %v1214
  %v1216 = vand.u32 %v820, 4294901760
  %1217 = vmatpush.msra.mxu0 %v1216
  %v1218 = vand.u32 %v818, 4294901760
  %1219 = vmatpush.msra.mxu0 %v1218
  %v1220 = vand.u32 %v816, 4294901760
  %1221 = vmatpush.msra.mxu0 %v1220
  %v1222 = vand.u32 %v814, 4294901760
  %1223 = vmatpush.msra.mxu0 %v1222
  %v1224 = vand.u32 %v812, 4294901760
  %1225 = vmatpush.msra.mxu0 %v1224
  %v1226 = vand.u32 %v810, 4294901760
  %1227 = vmatpush.msra.mxu0 %v1226
  %v1228 = vand.u32 %v808, 4294901760
  %1229 = vmatpush.msra.mxu0 %v1228
  %v1230 = vand.u32 %v806, 4294901760
  %1231 = vmatpush.msra.mxu0 %v1230
  %v1232 = vand.u32 %v804, 4294901760
  %1233 = vmatpush.msra.mxu0 %v1232
  %v1234 = vand.u32 %v802, 4294901760
  %1235 = vmatpush.msra.mxu0 %v1234
  %v1236 = vand.u32 %v800, 4294901760
  %1237 = vmatpush.msra.mxu0 %v1236
  %v1238 = vand.u32 %v798, 4294901760
  %1239 = vmatpush.msra.mxu0 %v1238
  %v1240 = vand.u32 %v796, 4294901760
  %1241 = vmatpush.msra.mxu0 %v1240
  %v1242 = vand.u32 %v794, 4294901760
  %1243 = vmatpush.msra.mxu0 %v1242
  %v1244 = vand.u32 %v792, 4294901760
  %1245 = vmatpush.msra.mxu0 %v1244
  %v1246 = vand.u32 %v1213, 4294901760
  %v1247 = vsub.f32 %v1213, %v1246
  %v1248 = vand.u32 %v1247, 4294901760
  %v1249 = vsub.f32 %v1247, %v1248
  %v1250 = vand.u32 %v1249, 4294901760
  %1251 = vmatmul.f32.gmra.mxu0 %v1250
  %v1252 = vpop.f32.mrf.mxu0
  %v1253 = vadd.f32 0.0, %v1252
  %1254 = vdwg.mxu0
  %v1255 = vand.u32 %v822, 4294901760
  %v1256 = vsub.f32 %v822, %v1255
  %v1257 = vand.u32 %v1256, 4294901760
  %v1258 = vsub.f32 %v1256, %v1257
  %v1259 = vand.u32 %v1258, 4294901760
  %1260 = vmatpush.msra.mxu0 %v1259
  %v1261 = vand.u32 %v820, 4294901760
  %v1262 = vsub.f32 %v820, %v1261
  %v1263 = vand.u32 %v1262, 4294901760
  %v1264 = vsub.f32 %v1262, %v1263
  %v1265 = vand.u32 %v1264, 4294901760
  %1266 = vmatpush.msra.mxu0 %v1265
  %v1267 = vand.u32 %v818, 4294901760
  %v1268 = vsub.f32 %v818, %v1267
  %v1269 = vand.u32 %v1268, 4294901760
  %v1270 = vsub.f32 %v1268, %v1269
  %v1271 = vand.u32 %v1270, 4294901760
  %1272 = vmatpush.msra.mxu0 %v1271
  %v1273 = vand.u32 %v816, 4294901760
  %v1274 = vsub.f32 %v816, %v1273
  %v1275 = vand.u32 %v1274, 4294901760
  %v1276 = vsub.f32 %v1274, %v1275
  %v1277 = vand.u32 %v1276, 4294901760
  %1278 = vmatpush.msra.mxu0 %v1277
  %v1279 = vand.u32 %v814, 4294901760
  %v1280 = vsub.f32 %v814, %v1279
  %v1281 = vand.u32 %v1280, 4294901760
  %v1282 = vsub.f32 %v1280, %v1281
  %v1283 = vand.u32 %v1282, 4294901760
  %1284 = vmatpush.msra.mxu0 %v1283
  %v1285 = vand.u32 %v812, 4294901760
  %v1286 = vsub.f32 %v812, %v1285
  %v1287 = vand.u32 %v1286, 4294901760
  %v1288 = vsub.f32 %v1286, %v1287
  %v1289 = vand.u32 %v1288, 4294901760
  %1290 = vmatpush.msra.mxu0 %v1289
  %v1291 = vand.u32 %v810, 4294901760
  %v1292 = vsub.f32 %v810, %v1291
  %v1293 = vand.u32 %v1292, 4294901760
  %v1294 = vsub.f32 %v1292, %v1293
  %v1295 = vand.u32 %v1294, 4294901760
  %1296 = vmatpush.msra.mxu0 %v1295
  %v1297 = vand.u32 %v808, 4294901760
  %v1298 = vsub.f32 %v808, %v1297
  %v1299 = vand.u32 %v1298, 4294901760
  %v1300 = vsub.f32 %v1298, %v1299
  %v1301 = vand.u32 %v1300, 4294901760
  %1302 = vmatpush.msra.mxu0 %v1301
  %v1303 = vand.u32 %v806, 4294901760
  %v1304 = vsub.f32 %v806, %v1303
  %v1305 = vand.u32 %v1304, 4294901760
  %v1306 = vsub.f32 %v1304, %v1305
  %v1307 = vand.u32 %v1306, 4294901760
  %1308 = vmatpush.msra.mxu0 %v1307
  %v1309 = vand.u32 %v804, 4294901760
  %v1310 = vsub.f32 %v804, %v1309
  %v1311 = vand.u32 %v1310, 4294901760
  %v1312 = vsub.f32 %v1310, %v1311
  %v1313 = vand.u32 %v1312, 4294901760
  %1314 = vmatpush.msra.mxu0 %v1313
  %v1315 = vand.u32 %v802, 4294901760
  %v1316 = vsub.f32 %v802, %v1315
  %v1317 = vand.u32 %v1316, 4294901760
  %v1318 = vsub.f32 %v1316, %v1317
  %v1319 = vand.u32 %v1318, 4294901760
  %1320 = vmatpush.msra.mxu0 %v1319
  %v1321 = vand.u32 %v800, 4294901760
  %v1322 = vsub.f32 %v800, %v1321
  %v1323 = vand.u32 %v1322, 4294901760
  %v1324 = vsub.f32 %v1322, %v1323
  %v1325 = vand.u32 %v1324, 4294901760
  %1326 = vmatpush.msra.mxu0 %v1325
  %v1327 = vand.u32 %v798, 4294901760
  %v1328 = vsub.f32 %v798, %v1327
  %v1329 = vand.u32 %v1328, 4294901760
  %v1330 = vsub.f32 %v1328, %v1329
  %v1331 = vand.u32 %v1330, 4294901760
  %1332 = vmatpush.msra.mxu0 %v1331
  %v1333 = vand.u32 %v796, 4294901760
  %v1334 = vsub.f32 %v796, %v1333
  %v1335 = vand.u32 %v1334, 4294901760
  %v1336 = vsub.f32 %v1334, %v1335
  %v1337 = vand.u32 %v1336, 4294901760
  %1338 = vmatpush.msra.mxu0 %v1337
  %v1339 = vand.u32 %v794, 4294901760
  %v1340 = vsub.f32 %v794, %v1339
  %v1341 = vand.u32 %v1340, 4294901760
  %v1342 = vsub.f32 %v1340, %v1341
  %v1343 = vand.u32 %v1342, 4294901760
  %1344 = vmatpush.msra.mxu0 %v1343
  %v1345 = vand.u32 %v792, 4294901760
  %v1346 = vsub.f32 %v792, %v1345
  %v1347 = vand.u32 %v1346, 4294901760
  %v1348 = vsub.f32 %v1346, %v1347
  %v1349 = vand.u32 %v1348, 4294901760
  %1350 = vmatpush.msra.mxu0 %v1349
  %v1351 = vand.u32 %v1213, 4294901760
  %1352 = vmatmul.f32.gmra.mxu0 %v1351
  %v1353 = vpop.f32.mrf.mxu0
  %v1354 = vadd.f32 %v1253, %v1353
  %1355 = vdwg.mxu0
  %v1356 = vand.u32 %v822, 4294901760
  %v1357 = vsub.f32 %v822, %v1356
  %1358 = vmatpush.msra.mxu0 %v1357
  %v1359 = vand.u32 %v820, 4294901760
  %v1360 = vsub.f32 %v820, %v1359
  %1361 = vmatpush.msra.mxu0 %v1360
  %v1362 = vand.u32 %v818, 4294901760
  %v1363 = vsub.f32 %v818, %v1362
  %1364 = vmatpush.msra.mxu0 %v1363
  %v1365 = vand.u32 %v816, 4294901760
  %v1366 = vsub.f32 %v816, %v1365
  %1367 = vmatpush.msra.mxu0 %v1366
  %v1368 = vand.u32 %v814, 4294901760
  %v1369 = vsub.f32 %v814, %v1368
  %1370 = vmatpush.msra.mxu0 %v1369
  %v1371 = vand.u32 %v812, 4294901760
  %v1372 = vsub.f32 %v812, %v1371
  %1373 = vmatpush.msra.mxu0 %v1372
  %v1374 = vand.u32 %v810, 4294901760
  %v1375 = vsub.f32 %v810, %v1374
  %1376 = vmatpush.msra.mxu0 %v1375
  %v1377 = vand.u32 %v808, 4294901760
  %v1378 = vsub.f32 %v808, %v1377
  %1379 = vmatpush.msra.mxu0 %v1378
  %v1380 = vand.u32 %v806, 4294901760
  %v1381 = vsub.f32 %v806, %v1380
  %1382 = vmatpush.msra.mxu0 %v1381
  %v1383 = vand.u32 %v804, 4294901760
  %v1384 = vsub.f32 %v804, %v1383
  %1385 = vmatpush.msra.mxu0 %v1384
  %v1386 = vand.u32 %v802, 4294901760
  %v1387 = vsub.f32 %v802, %v1386
  %1388 = vmatpush.msra.mxu0 %v1387
  %v1389 = vand.u32 %v800, 4294901760
  %v1390 = vsub.f32 %v800, %v1389
  %1391 = vmatpush.msra.mxu0 %v1390
  %v1392 = vand.u32 %v798, 4294901760
  %v1393 = vsub.f32 %v798, %v1392
  %1394 = vmatpush.msra.mxu0 %v1393
  %v1395 = vand.u32 %v796, 4294901760
  %v1396 = vsub.f32 %v796, %v1395
  %1397 = vmatpush.msra.mxu0 %v1396
  %v1398 = vand.u32 %v794, 4294901760
  %v1399 = vsub.f32 %v794, %v1398
  %1400 = vmatpush.msra.mxu0 %v1399
  %v1401 = vand.u32 %v792, 4294901760
  %v1402 = vsub.f32 %v792, %v1401
  %1403 = vmatpush.msra.mxu0 %v1402
  %v1404 = vand.u32 %v1213, 4294901760
  %v1405 = vsub.f32 %v1213, %v1404
  %1406 = vmatmul.f32.gmra.mxu0 %v1405
  %v1407 = vpop.f32.mrf.mxu0
  %v1408 = vadd.f32 %v1354, %v1407
  %1409 = vdwg.mxu0
  %v1410 = vand.u32 %v822, 4294901760
  %1411 = vmatpush.msra.mxu0 %v1410
  %v1412 = vand.u32 %v820, 4294901760
  %1413 = vmatpush.msra.mxu0 %v1412
  %v1414 = vand.u32 %v818, 4294901760
  %1415 = vmatpush.msra.mxu0 %v1414
  %v1416 = vand.u32 %v816, 4294901760
  %1417 = vmatpush.msra.mxu0 %v1416
  %v1418 = vand.u32 %v814, 4294901760
  %1419 = vmatpush.msra.mxu0 %v1418
  %v1420 = vand.u32 %v812, 4294901760
  %1421 = vmatpush.msra.mxu0 %v1420
  %v1422 = vand.u32 %v810, 4294901760
  %1423 = vmatpush.msra.mxu0 %v1422
  %v1424 = vand.u32 %v808, 4294901760
  %1425 = vmatpush.msra.mxu0 %v1424
  %v1426 = vand.u32 %v806, 4294901760
  %1427 = vmatpush.msra.mxu0 %v1426
  %v1428 = vand.u32 %v804, 4294901760
  %1429 = vmatpush.msra.mxu0 %v1428
  %v1430 = vand.u32 %v802, 4294901760
  %1431 = vmatpush.msra.mxu0 %v1430
  %v1432 = vand.u32 %v800, 4294901760
  %1433 = vmatpush.msra.mxu0 %v1432
  %v1434 = vand.u32 %v798, 4294901760
  %1435 = vmatpush.msra.mxu0 %v1434
  %v1436 = vand.u32 %v796, 4294901760
  %1437 = vmatpush.msra.mxu0 %v1436
  %v1438 = vand.u32 %v794, 4294901760
  %1439 = vmatpush.msra.mxu0 %v1438
  %v1440 = vand.u32 %v792, 4294901760
  %1441 = vmatpush.msra.mxu0 %v1440
  %v1442 = vand.u32 %v1213, 4294901760
  %v1443 = vsub.f32 %v1213, %v1442
  %v1444 = vand.u32 %v1443, 4294901760
  %1445 = vmatmul.f32.gmra.mxu0 %v1444
  %v1446 = vpop.f32.mrf.mxu0
  %v1447 = vadd.f32 %v1408, %v1446
  %1448 = vdwg.mxu0
  %v1449 = vand.u32 %v822, 4294901760
  %v1450 = vsub.f32 %v822, %v1449
  %v1451 = vand.u32 %v1450, 4294901760
  %1452 = vmatpush.msra.mxu0 %v1451
  %v1453 = vand.u32 %v820, 4294901760
  %v1454 = vsub.f32 %v820, %v1453
  %v1455 = vand.u32 %v1454, 4294901760
  %1456 = vmatpush.msra.mxu0 %v1455
  %v1457 = vand.u32 %v818, 4294901760
  %v1458 = vsub.f32 %v818, %v1457
  %v1459 = vand.u32 %v1458, 4294901760
  %1460 = vmatpush.msra.mxu0 %v1459
  %v1461 = vand.u32 %v816, 4294901760
  %v1462 = vsub.f32 %v816, %v1461
  %v1463 = vand.u32 %v1462, 4294901760
  %1464 = vmatpush.msra.mxu0 %v1463
  %v1465 = vand.u32 %v814, 4294901760
  %v1466 = vsub.f32 %v814, %v1465
  %v1467 = vand.u32 %v1466, 4294901760
  %1468 = vmatpush.msra.mxu0 %v1467
  %v1469 = vand.u32 %v812, 4294901760
  %v1470 = vsub.f32 %v812, %v1469
  %v1471 = vand.u32 %v1470, 4294901760
  %1472 = vmatpush.msra.mxu0 %v1471
  %v1473 = vand.u32 %v810, 4294901760
  %v1474 = vsub.f32 %v810, %v1473
  %v1475 = vand.u32 %v1474, 4294901760
  %1476 = vmatpush.msra.mxu0 %v1475
  %v1477 = vand.u32 %v808, 4294901760
  %v1478 = vsub.f32 %v808, %v1477
  %v1479 = vand.u32 %v1478, 4294901760
  %1480 = vmatpush.msra.mxu0 %v1479
  %v1481 = vand.u32 %v806, 4294901760
  %v1482 = vsub.f32 %v806, %v1481
  %v1483 = vand.u32 %v1482, 4294901760
  %1484 = vmatpush.msra.mxu0 %v1483
  %v1485 = vand.u32 %v804, 4294901760
  %v1486 = vsub.f32 %v804, %v1485
  %v1487 = vand.u32 %v1486, 4294901760
  %1488 = vmatpush.msra.mxu0 %v1487
  %v1489 = vand.u32 %v802, 4294901760
  %v1490 = vsub.f32 %v802, %v1489
  %v1491 = vand.u32 %v1490, 4294901760
  %1492 = vmatpush.msra.mxu0 %v1491
  %v1493 = vand.u32 %v800, 4294901760
  %v1494 = vsub.f32 %v800, %v1493
  %v1495 = vand.u32 %v1494, 4294901760
  %1496 = vmatpush.msra.mxu0 %v1495
  %v1497 = vand.u32 %v798, 4294901760
  %v1498 = vsub.f32 %v798, %v1497
  %v1499 = vand.u32 %v1498, 4294901760
  %1500 = vmatpush.msra.mxu0 %v1499
  %v1501 = vand.u32 %v796, 4294901760
  %v1502 = vsub.f32 %v796, %v1501
  %v1503 = vand.u32 %v1502, 4294901760
  %1504 = vmatpush.msra.mxu0 %v1503
  %v1505 = vand.u32 %v794, 4294901760
  %v1506 = vsub.f32 %v794, %v1505
  %v1507 = vand.u32 %v1506, 4294901760
  %1508 = vmatpush.msra.mxu0 %v1507
  %v1509 = vand.u32 %v792, 4294901760
  %v1510 = vsub.f32 %v792, %v1509
  %v1511 = vand.u32 %v1510, 4294901760
  %1512 = vmatpush.msra.mxu0 %v1511
  %v1513 = vand.u32 %v1213, 4294901760
  %1514 = vmatmul.f32.gmra.mxu0 %v1513
  %v1515 = vpop.f32.mrf.mxu0
  %v1516 = vadd.f32 %v1447, %v1515
  %1517 = vdwg.mxu0
  %v1518 = vand.u32 %v822, 4294901760
  %1519 = vmatpush.msra.mxu0 %v1518
  %v1520 = vand.u32 %v820, 4294901760
  %1521 = vmatpush.msra.mxu0 %v1520
  %v1522 = vand.u32 %v818, 4294901760
  %1523 = vmatpush.msra.mxu0 %v1522
  %v1524 = vand.u32 %v816, 4294901760
  %1525 = vmatpush.msra.mxu0 %v1524
  %v1526 = vand.u32 %v814, 4294901760
  %1527 = vmatpush.msra.mxu0 %v1526
  %v1528 = vand.u32 %v812, 4294901760
  %1529 = vmatpush.msra.mxu0 %v1528
  %v1530 = vand.u32 %v810, 4294901760
  %1531 = vmatpush.msra.mxu0 %v1530
  %v1532 = vand.u32 %v808, 4294901760
  %1533 = vmatpush.msra.mxu0 %v1532
  %v1534 = vand.u32 %v806, 4294901760
  %1535 = vmatpush.msra.mxu0 %v1534
  %v1536 = vand.u32 %v804, 4294901760
  %1537 = vmatpush.msra.mxu0 %v1536
  %v1538 = vand.u32 %v802, 4294901760
  %1539 = vmatpush.msra.mxu0 %v1538
  %v1540 = vand.u32 %v800, 4294901760
  %1541 = vmatpush.msra.mxu0 %v1540
  %v1542 = vand.u32 %v798, 4294901760
  %1543 = vmatpush.msra.mxu0 %v1542
  %v1544 = vand.u32 %v796, 4294901760
  %1545 = vmatpush.msra.mxu0 %v1544
  %v1546 = vand.u32 %v794, 4294901760
  %1547 = vmatpush.msra.mxu0 %v1546
  %v1548 = vand.u32 %v792, 4294901760
  %1549 = vmatpush.msra.mxu0 %v1548
  %v1550 = vand.u32 %v1213, 4294901760
  %1551 = vmatmul.f32.gmra.mxu0 %v1550
  %v1552 = vpop.f32.mrf.mxu0
  %v1553 = vadd.f32 %v1516, %v1552
  %1554 = vdwg.mxu0
  %v1555 = vlog2.pop %v1553
  %v1556 = vmul.f32 %v1555, 0.6931472
  %v1557 = vadd.f32 %v1556, %v1210
  %v1558 = vadd.f32 %v1557, %v774
  %v1559 = vadd.f32 %v1558, %v841
  %v1560 = vsel %vm1207, %v1559, %v836
  %s1561 = scalar_lea.vmem [#allocation2], 16
  %v1562 = vld [vmem:[%s1561] sm:$0xff]
  %s1563 = scalar_lea.vmem %s2, 16
  %v1564 = vld [vmem:[%s1563] sm:$0xff]
  %s1565 = scalar_lea.vmem %s1, 16
  %v1566 = vld [vmem:[%s1565] sm:$0xff]
  %1567 = vset.pattern.permute.xlu0 0
  %1568 = vperm.xlu0 %1567, %v1566
  %v1569 = vpop.permute.xlu0 %1568
  %vm1570 = vcmp.eq.s32.totalorder %v824, %v1569
  %v1571 = vsel %vm1570, 1, 0
  %v1572 = vcvt.s32.f32 %v1571
  %v1573 = vmul.f32 %v1562, %v1572
  %1574 = vadd.xlane.f32.xlu0 %v1573
  %v1575 = vpop.xlane.xlu0 %1574
  %v1576 = vand.u32 %v753, 4294901760
  %1577 = vmatpush.msra.mxu0 %v1576
  %v1578 = vand.u32 %v752, 4294901760
  %1579 = vmatpush.msra.mxu0 %v1578
  %v1580 = vand.u32 %v751, 4294901760
  %1581 = vmatpush.msra.mxu0 %v1580
  %v1582 = vand.u32 %v750, 4294901760
  %1583 = vmatpush.msra.mxu0 %v1582
  %v1584 = vand.u32 %v749, 4294901760
  %1585 = vmatpush.msra.mxu0 %v1584
  %v1586 = vand.u32 %v748, 4294901760
  %1587 = vmatpush.msra.mxu0 %v1586
  %v1588 = vand.u32 %v747, 4294901760
  %1589 = vmatpush.msra.mxu0 %v1588
  %v1590 = vand.u32 %v746, 4294901760
  %1591 = vmatpush.msra.mxu0 %v1590
  %v1592 = vand.u32 %v745, 4294901760
  %1593 = vmatpush.msra.mxu0 %v1592
  %v1594 = vand.u32 %v744, 4294901760
  %1595 = vmatpush.msra.mxu0 %v1594
  %v1596 = vand.u32 %v743, 4294901760
  %1597 = vmatpush.msra.mxu0 %v1596
  %v1598 = vand.u32 %v742, 4294901760
  %1599 = vmatpush.msra.mxu0 %v1598
  %v1600 = vand.u32 %v741, 4294901760
  %1601 = vmatpush.msra.mxu0 %v1600
  %v1602 = vand.u32 %v740, 4294901760
  %1603 = vmatpush.msra.mxu0 %v1602
  %v1604 = vand.u32 %v739, 4294901760
  %1605 = vmatpush.msra.mxu0 %v1604
  %v1606 = vand.u32 %v738, 4294901760
  %1607 = vmatpush.msra.mxu0 %v1606
  %v1608 = vand.u32 %v1208, 4294901760
  %v1609 = vsub.f32 %v1208, %v1608
  %v1610 = vand.u32 %v1609, 4294901760
  %v1611 = vsub.f32 %v1609, %v1610
  %v1612 = vand.u32 %v1611, 4294901760
  %1613 = vmatmul.f32.gmra.mxu0 %v1612
  %v1614 = vpop.f32.mrf.mxu0
  %v1615 = vadd.f32 0.0, %v1614
  %1616 = vdwg.mxu0
  %v1617 = vand.u32 %v753, 4294901760
  %v1618 = vsub.f32 %v753, %v1617
  %v1619 = vand.u32 %v1618, 4294901760
  %v1620 = vsub.f32 %v1618, %v1619
  %v1621 = vand.u32 %v1620, 4294901760
  %1622 = vmatpush.msra.mxu0 %v1621
  %v1623 = vand.u32 %v752, 4294901760
  %v1624 = vsub.f32 %v752, %v1623
  %v1625 = vand.u32 %v1624, 4294901760
  %v1626 = vsub.f32 %v1624, %v1625
  %v1627 = vand.u32 %v1626, 4294901760
  %1628 = vmatpush.msra.mxu0 %v1627
  %v1629 = vand.u32 %v751, 4294901760
  %v1630 = vsub.f32 %v751, %v1629
  %v1631 = vand.u32 %v1630, 4294901760
  %v1632 = vsub.f32 %v1630, %v1631
  %v1633 = vand.u32 %v1632, 4294901760
  %1634 = vmatpush.msra.mxu0 %v1633
  %v1635 = vand.u32 %v750, 4294901760
  %v1636 = vsub.f32 %v750, %v1635
  %v1637 = vand.u32 %v1636, 4294901760
  %v1638 = vsub.f32 %v1636, %v1637
  %v1639 = vand.u32 %v1638, 4294901760
  %1640 = vmatpush.msra.mxu0 %v1639
  %v1641 = vand.u32 %v749, 4294901760
  %v1642 = vsub.f32 %v749, %v1641
  %v1643 = vand.u32 %v1642, 4294901760
  %v1644 = vsub.f32 %v1642, %v1643
  %v1645 = vand.u32 %v1644, 4294901760
  %1646 = vmatpush.msra.mxu0 %v1645
  %v1647 = vand.u32 %v748, 4294901760
  %v1648 = vsub.f32 %v748, %v1647
  %v1649 = vand.u32 %v1648, 4294901760
  %v1650 = vsub.f32 %v1648, %v1649
  %v1651 = vand.u32 %v1650, 4294901760
  %1652 = vmatpush.msra.mxu0 %v1651
  %v1653 = vand.u32 %v747, 4294901760
  %v1654 = vsub.f32 %v747, %v1653
  %v1655 = vand.u32 %v1654, 4294901760
  %v1656 = vsub.f32 %v1654, %v1655
  %v1657 = vand.u32 %v1656, 4294901760
  %1658 = vmatpush.msra.mxu0 %v1657
  %v1659 = vand.u32 %v746, 4294901760
  %v1660 = vsub.f32 %v746, %v1659
  %v1661 = vand.u32 %v1660, 4294901760
  %v1662 = vsub.f32 %v1660, %v1661
  %v1663 = vand.u32 %v1662, 4294901760
  %1664 = vmatpush.msra.mxu0 %v1663
  %v1665 = vand.u32 %v745, 4294901760
  %v1666 = vsub.f32 %v745, %v1665
  %v1667 = vand.u32 %v1666, 4294901760
  %v1668 = vsub.f32 %v1666, %v1667
  %v1669 = vand.u32 %v1668, 4294901760
  %1670 = vmatpush.msra.mxu0 %v1669
  %v1671 = vand.u32 %v744, 4294901760
  %v1672 = vsub.f32 %v744, %v1671
  %v1673 = vand.u32 %v1672, 4294901760
  %v1674 = vsub.f32 %v1672, %v1673
  %v1675 = vand.u32 %v1674, 4294901760
  %1676 = vmatpush.msra.mxu0 %v1675
  %v1677 = vand.u32 %v743, 4294901760
  %v1678 = vsub.f32 %v743, %v1677
  %v1679 = vand.u32 %v1678, 4294901760
  %v1680 = vsub.f32 %v1678, %v1679
  %v1681 = vand.u32 %v1680, 4294901760
  %1682 = vmatpush.msra.mxu0 %v1681
  %v1683 = vand.u32 %v742, 4294901760
  %v1684 = vsub.f32 %v742, %v1683
  %v1685 = vand.u32 %v1684, 4294901760
  %v1686 = vsub.f32 %v1684, %v1685
  %v1687 = vand.u32 %v1686, 4294901760
  %1688 = vmatpush.msra.mxu0 %v1687
  %v1689 = vand.u32 %v741, 4294901760
  %v1690 = vsub.f32 %v741, %v1689
  %v1691 = vand.u32 %v1690, 4294901760
  %v1692 = vsub.f32 %v1690, %v1691
  %v1693 = vand.u32 %v1692, 4294901760
  %1694 = vmatpush.msra.mxu0 %v1693
  %v1695 = vand.u32 %v740, 4294901760
  %v1696 = vsub.f32 %v740, %v1695
  %v1697 = vand.u32 %v1696, 4294901760
  %v1698 = vsub.f32 %v1696, %v1697
  %v1699 = vand.u32 %v1698, 4294901760
  %1700 = vmatpush.msra.mxu0 %v1699
  %v1701 = vand.u32 %v739, 4294901760
  %v1702 = vsub.f32 %v739, %v1701
  %v1703 = vand.u32 %v1702, 4294901760
  %v1704 = vsub.f32 %v1702, %v1703
  %v1705 = vand.u32 %v1704, 4294901760
  %1706 = vmatpush.msra.mxu0 %v1705
  %v1707 = vand.u32 %v738, 4294901760
  %v1708 = vsub.f32 %v738, %v1707
  %v1709 = vand.u32 %v1708, 4294901760
  %v1710 = vsub.f32 %v1708, %v1709
  %v1711 = vand.u32 %v1710, 4294901760
  %1712 = vmatpush.msra.mxu0 %v1711
  %v1713 = vand.u32 %v1208, 4294901760
  %1714 = vmatmul.f32.gmra.mxu0 %v1713
  %v1715 = vpop.f32.mrf.mxu0
  %v1716 = vadd.f32 %v1615, %v1715
  %1717 = vdwg.mxu0
  %v1718 = vand.u32 %v753, 4294901760
  %v1719 = vsub.f32 %v753, %v1718
  %1720 = vmatpush.msra.mxu0 %v1719
  %v1721 = vand.u32 %v752, 4294901760
  %v1722 = vsub.f32 %v752, %v1721
  %1723 = vmatpush.msra.mxu0 %v1722
  %v1724 = vand.u32 %v751, 4294901760
  %v1725 = vsub.f32 %v751, %v1724
  %1726 = vmatpush.msra.mxu0 %v1725
  %v1727 = vand.u32 %v750, 4294901760
  %v1728 = vsub.f32 %v750, %v1727
  %1729 = vmatpush.msra.mxu0 %v1728
  %v1730 = vand.u32 %v749, 4294901760
  %v1731 = vsub.f32 %v749, %v1730
  %1732 = vmatpush.msra.mxu0 %v1731
  %v1733 = vand.u32 %v748, 4294901760
  %v1734 = vsub.f32 %v748, %v1733
  %1735 = vmatpush.msra.mxu0 %v1734
  %v1736 = vand.u32 %v747, 4294901760
  %v1737 = vsub.f32 %v747, %v1736
  %1738 = vmatpush.msra.mxu0 %v1737
  %v1739 = vand.u32 %v746, 4294901760
  %v1740 = vsub.f32 %v746, %v1739
  %1741 = vmatpush.msra.mxu0 %v1740
  %v1742 = vand.u32 %v745, 4294901760
  %v1743 = vsub.f32 %v745, %v1742
  %1744 = vmatpush.msra.mxu0 %v1743
  %v1745 = vand.u32 %v744, 4294901760
  %v1746 = vsub.f32 %v744, %v1745
  %1747 = vmatpush.msra.mxu0 %v1746
  %v1748 = vand.u32 %v743, 4294901760
  %v1749 = vsub.f32 %v743, %v1748
  %1750 = vmatpush.msra.mxu0 %v1749
  %v1751 = vand.u32 %v742, 4294901760
  %v1752 = vsub.f32 %v742, %v1751
  %1753 = vmatpush.msra.mxu0 %v1752
  %v1754 = vand.u32 %v741, 4294901760
  %v1755 = vsub.f32 %v741, %v1754
  %1756 = vmatpush.msra.mxu0 %v1755
  %v1757 = vand.u32 %v740, 4294901760
  %v1758 = vsub.f32 %v740, %v1757
  %1759 = vmatpush.msra.mxu0 %v1758
  %v1760 = vand.u32 %v739, 4294901760
  %v1761 = vsub.f32 %v739, %v1760
  %1762 = vmatpush.msra.mxu0 %v1761
  %v1763 = vand.u32 %v738, 4294901760
  %v1764 = vsub.f32 %v738, %v1763
  %1765 = vmatpush.msra.mxu0 %v1764
  %v1766 = vand.u32 %v1208, 4294901760
  %v1767 = vsub.f32 %v1208, %v1766
  %1768 = vmatmul.f32.gmra.mxu0 %v1767
  %v1769 = vpop.f32.mrf.mxu0
  %v1770 = vadd.f32 %v1716, %v1769
  %1771 = vdwg.mxu0
  %v1772 = vand.u32 %v753, 4294901760
  %1773 = vmatpush.msra.mxu0 %v1772
  %v1774 = vand.u32 %v752, 4294901760
  %1775 = vmatpush.msra.mxu0 %v1774
  %v1776 = vand.u32 %v751, 4294901760
  %1777 = vmatpush.msra.mxu0 %v1776
  %v1778 = vand.u32 %v750, 4294901760
  %1779 = vmatpush.msra.mxu0 %v1778
  %v1780 = vand.u32 %v749, 4294901760
  %1781 = vmatpush.msra.mxu0 %v1780
  %v1782 = vand.u32 %v748, 4294901760
  %1783 = vmatpush.msra.mxu0 %v1782
  %v1784 = vand.u32 %v747, 4294901760
  %1785 = vmatpush.msra.mxu0 %v1784
  %v1786 = vand.u32 %v746, 4294901760
  %1787 = vmatpush.msra.mxu0 %v1786
  %v1788 = vand.u32 %v745, 4294901760
  %1789 = vmatpush.msra.mxu0 %v1788
  %v1790 = vand.u32 %v744, 4294901760
  %1791 = vmatpush.msra.mxu0 %v1790
  %v1792 = vand.u32 %v743, 4294901760
  %1793 = vmatpush.msra.mxu0 %v1792
  %v1794 = vand.u32 %v742, 4294901760
  %1795 = vmatpush.msra.mxu0 %v1794
  %v1796 = vand.u32 %v741, 4294901760
  %1797 = vmatpush.msra.mxu0 %v1796
  %v1798 = vand.u32 %v740, 4294901760
  %1799 = vmatpush.msra.mxu0 %v1798
  %v1800 = vand.u32 %v739, 4294901760
  %1801 = vmatpush.msra.mxu0 %v1800
  %v1802 = vand.u32 %v738, 4294901760
  %1803 = vmatpush.msra.mxu0 %v1802
  %v1804 = vand.u32 %v1208, 4294901760
  %v1805 = vsub.f32 %v1208, %v1804
  %v1806 = vand.u32 %v1805, 4294901760
  %1807 = vmatmul.f32.gmra.mxu0 %v1806
  %v1808 = vpop.f32.mrf.mxu0
  %v1809 = vadd.f32 %v1770, %v1808
  %1810 = vdwg.mxu0
  %v1811 = vand.u32 %v753, 4294901760
  %v1812 = vsub.f32 %v753, %v1811
  %v1813 = vand.u32 %v1812, 4294901760
  %1814 = vmatpush.msra.mxu0 %v1813
  %v1815 = vand.u32 %v752, 4294901760
  %v1816 = vsub.f32 %v752, %v1815
  %v1817 = vand.u32 %v1816, 4294901760
  %1818 = vmatpush.msra.mxu0 %v1817
  %v1819 = vand.u32 %v751, 4294901760
  %v1820 = vsub.f32 %v751, %v1819
  %v1821 = vand.u32 %v1820, 4294901760
  %1822 = vmatpush.msra.mxu0 %v1821
  %v1823 = vand.u32 %v750, 4294901760
  %v1824 = vsub.f32 %v750, %v1823
  %v1825 = vand.u32 %v1824, 4294901760
  %1826 = vmatpush.msra.mxu0 %v1825
  %v1827 = vand.u32 %v749, 4294901760
  %v1828 = vsub.f32 %v749, %v1827
  %v1829 = vand.u32 %v1828, 4294901760
  %1830 = vmatpush.msra.mxu0 %v1829
  %v1831 = vand.u32 %v748, 4294901760
  %v1832 = vsub.f32 %v748, %v1831
  %v1833 = vand.u32 %v1832, 4294901760
  %1834 = vmatpush.msra.mxu0 %v1833
  %v1835 = vand.u32 %v747, 4294901760
  %v1836 = vsub.f32 %v747, %v1835
  %v1837 = vand.u32 %v1836, 4294901760
  %1838 = vmatpush.msra.mxu0 %v1837
  %v1839 = vand.u32 %v746, 4294901760
  %v1840 = vsub.f32 %v746, %v1839
  %v1841 = vand.u32 %v1840, 4294901760
  %1842 = vmatpush.msra.mxu0 %v1841
  %v1843 = vand.u32 %v745, 4294901760
  %v1844 = vsub.f32 %v745, %v1843
  %v1845 = vand.u32 %v1844, 4294901760
  %1846 = vmatpush.msra.mxu0 %v1845
  %v1847 = vand.u32 %v744, 4294901760
  %v1848 = vsub.f32 %v744, %v1847
  %v1849 = vand.u32 %v1848, 4294901760
  %1850 = vmatpush.msra.mxu0 %v1849
  %v1851 = vand.u32 %v743, 4294901760
  %v1852 = vsub.f32 %v743, %v1851
  %v1853 = vand.u32 %v1852, 4294901760
  %1854 = vmatpush.msra.mxu0 %v1853
  %v1855 = vand.u32 %v742, 4294901760
  %v1856 = vsub.f32 %v742, %v1855
  %v1857 = vand.u32 %v1856, 4294901760
  %1858 = vmatpush.msra.mxu0 %v1857
  %v1859 = vand.u32 %v741, 4294901760
  %v1860 = vsub.f32 %v741, %v1859
  %v1861 = vand.u32 %v1860, 4294901760
  %1862 = vmatpush.msra.mxu0 %v1861
  %v1863 = vand.u32 %v740, 4294901760
  %v1864 = vsub.f32 %v740, %v1863
  %v1865 = vand.u32 %v1864, 4294901760
  %1866 = vmatpush.msra.mxu0 %v1865
  %v1867 = vand.u32 %v739, 4294901760
  %v1868 = vsub.f32 %v739, %v1867
  %v1869 = vand.u32 %v1868, 4294901760
  %1870 = vmatpush.msra.mxu0 %v1869
  %v1871 = vand.u32 %v738, 4294901760
  %v1872 = vsub.f32 %v738, %v1871
  %v1873 = vand.u32 %v1872, 4294901760
  %1874 = vmatpush.msra.mxu0 %v1873
  %v1875 = vand.u32 %v1208, 4294901760
  %1876 = vmatmul.f32.gmra.mxu0 %v1875
  %v1877 = vpop.f32.mrf.mxu0
  %v1878 = vadd.f32 %v1809, %v1877
  %1879 = vdwg.mxu0
  %v1880 = vand.u32 %v753, 4294901760
  %1881 = vmatpush.msra.mxu0 %v1880
  %v1882 = vand.u32 %v752, 4294901760
  %1883 = vmatpush.msra.mxu0 %v1882
  %v1884 = vand.u32 %v751, 4294901760
  %1885 = vmatpush.msra.mxu0 %v1884
  %v1886 = vand.u32 %v750, 4294901760
  %1887 = vmatpush.msra.mxu0 %v1886
  %v1888 = vand.u32 %v749, 4294901760
  %1889 = vmatpush.msra.mxu0 %v1888
  %v1890 = vand.u32 %v748, 4294901760
  %1891 = vmatpush.msra.mxu0 %v1890
  %v1892 = vand.u32 %v747, 4294901760
  %1893 = vmatpush.msra.mxu0 %v1892
  %v1894 = vand.u32 %v746, 4294901760
  %1895 = vmatpush.msra.mxu0 %v1894
  %v1896 = vand.u32 %v745, 4294901760
  %1897 = vmatpush.msra.mxu0 %v1896
  %v1898 = vand.u32 %v744, 4294901760
  %1899 = vmatpush.msra.mxu0 %v1898
  %v1900 = vand.u32 %v743, 4294901760
  %1901 = vmatpush.msra.mxu0 %v1900
  %v1902 = vand.u32 %v742, 4294901760
  %1903 = vmatpush.msra.mxu0 %v1902
  %v1904 = vand.u32 %v741, 4294901760
  %1905 = vmatpush.msra.mxu0 %v1904
  %v1906 = vand.u32 %v740, 4294901760
  %1907 = vmatpush.msra.mxu0 %v1906
  %v1908 = vand.u32 %v739, 4294901760
  %1909 = vmatpush.msra.mxu0 %v1908
  %v1910 = vand.u32 %v738, 4294901760
  %1911 = vmatpush.msra.mxu0 %v1910
  %v1912 = vand.u32 %v1208, 4294901760
  %1913 = vmatmul.f32.gmra.mxu0 %v1912
  %v1914 = vpop.f32.mrf.mxu0
  %v1915 = vadd.f32 %v1878, %v1914
  %1916 = vdwg.mxu0
  %v1917 = vmul.f32 %v1915, %v1572
  %1918 = vadd.xlane.f32.xlu0 %v1917
  %v1919 = vpop.xlane.xlu0 %1918
  %v1920 = vadd.f32 %v1575, %v1919
  %v1921 = vmul.f32 %v1564, %v1920
  %v1922 = vadd.f32 %v1201, %v1921
  %vm1923 = vcmp.gt.f32.partialorder %v1564, 0.0
  %v1924 = vsel %vm1923, 1, 0
  %1925 = vset.pattern.permute.xlu0 0
  %1926 = vperm.xlu0 %1925, %v1924
  %v1927 = vpop.permute.xlu0 %1926
  %vm1928 = vcmp.eq.s32.totalorder %v1927, 1
  %v1929 = vsel %vm1928, %v1572, %v1208
  %1930 = vmax.xlane.f32.xlu0 %v1560
  %v1931 = vpop.xlane.xlu0 %1930
  %v1932 = vsub.f32 %v1560, %v1931
  %v1933 = vmul.f32 %v1932, 1.442695
  %v1934 = vpow.pop %v1933
  %v1935 = vand.u32 %v822, 4294901760
  %1936 = vmatpush.msra.mxu0 %v1935
  %v1937 = vand.u32 %v820, 4294901760
  %1938 = vmatpush.msra.mxu0 %v1937
  %v1939 = vand.u32 %v818, 4294901760
  %1940 = vmatpush.msra.mxu0 %v1939
  %v1941 = vand.u32 %v816, 4294901760
  %1942 = vmatpush.msra.mxu0 %v1941
  %v1943 = vand.u32 %v814, 4294901760
  %1944 = vmatpush.msra.mxu0 %v1943
  %v1945 = vand.u32 %v812, 4294901760
  %1946 = vmatpush.msra.mxu0 %v1945
  %v1947 = vand.u32 %v810, 4294901760
  %1948 = vmatpush.msra.mxu0 %v1947
  %v1949 = vand.u32 %v808, 4294901760
  %1950 = vmatpush.msra.mxu0 %v1949
  %v1951 = vand.u32 %v806, 4294901760
  %1952 = vmatpush.msra.mxu0 %v1951
  %v1953 = vand.u32 %v804, 4294901760
  %1954 = vmatpush.msra.mxu0 %v1953
  %v1955 = vand.u32 %v802, 4294901760
  %1956 = vmatpush.msra.mxu0 %v1955
  %v1957 = vand.u32 %v800, 4294901760
  %1958 = vmatpush.msra.mxu0 %v1957
  %v1959 = vand.u32 %v798, 4294901760
  %1960 = vmatpush.msra.mxu0 %v1959
  %v1961 = vand.u32 %v796, 4294901760
  %1962 = vmatpush.msra.mxu0 %v1961
  %v1963 = vand.u32 %v794, 4294901760
  %1964 = vmatpush.msra.mxu0 %v1963
  %v1965 = vand.u32 %v792, 4294901760
  %1966 = vmatpush.msra.mxu0 %v1965
  %v1967 = vand.u32 %v1934, 4294901760
  %v1968 = vsub.f32 %v1934, %v1967
  %v1969 = vand.u32 %v1968, 4294901760
  %v1970 = vsub.f32 %v1968, %v1969
  %v1971 = vand.u32 %v1970, 4294901760
  %1972 = vmatmul.f32.gmra.mxu0 %v1971
  %v1973 = vpop.f32.mrf.mxu0
  %v1974 = vadd.f32 0.0, %v1973
  %1975 = vdwg.mxu0
  %v1976 = vand.u32 %v822, 4294901760
  %v1977 = vsub.f32 %v822, %v1976
  %v1978 = vand.u32 %v1977, 4294901760
  %v1979 = vsub.f32 %v1977, %v1978
  %v1980 = vand.u32 %v1979, 4294901760
  %1981 = vmatpush.msra.mxu0 %v1980
  %v1982 = vand.u32 %v820, 4294901760
  %v1983 = vsub.f32 %v820, %v1982
  %v1984 = vand.u32 %v1983, 4294901760
  %v1985 = vsub.f32 %v1983, %v1984
  %v1986 = vand.u32 %v1985, 4294901760
  %1987 = vmatpush.msra.mxu0 %v1986
  %v1988 = vand.u32 %v818, 4294901760
  %v1989 = vsub.f32 %v818, %v1988
  %v1990 = vand.u32 %v1989, 4294901760
  %v1991 = vsub.f32 %v1989, %v1990
  %v1992 = vand.u32 %v1991, 4294901760
  %1993 = vmatpush.msra.mxu0 %v1992
  %v1994 = vand.u32 %v816, 4294901760
  %v1995 = vsub.f32 %v816, %v1994
  %v1996 = vand.u32 %v1995, 4294901760
  %v1997 = vsub.f32 %v1995, %v1996
  %v1998 = vand.u32 %v1997, 4294901760
  %1999 = vmatpush.msra.mxu0 %v1998
  %v2000 = vand.u32 %v814, 4294901760
  %v2001 = vsub.f32 %v814, %v2000
  %v2002 = vand.u32 %v2001, 4294901760
  %v2003 = vsub.f32 %v2001, %v2002
  %v2004 = vand.u32 %v2003, 4294901760
  %2005 = vmatpush.msra.mxu0 %v2004
  %v2006 = vand.u32 %v812, 4294901760
  %v2007 = vsub.f32 %v812, %v2006
  %v2008 = vand.u32 %v2007, 4294901760
  %v2009 = vsub.f32 %v2007, %v2008
  %v2010 = vand.u32 %v2009, 4294901760
  %2011 = vmatpush.msra.mxu0 %v2010
  %v2012 = vand.u32 %v810, 4294901760
  %v2013 = vsub.f32 %v810, %v2012
  %v2014 = vand.u32 %v2013, 4294901760
  %v2015 = vsub.f32 %v2013, %v2014
  %v2016 = vand.u32 %v2015, 4294901760
  %2017 = vmatpush.msra.mxu0 %v2016
  %v2018 = vand.u32 %v808, 4294901760
  %v2019 = vsub.f32 %v808, %v2018
  %v2020 = vand.u32 %v2019, 4294901760
  %v2021 = vsub.f32 %v2019, %v2020
  %v2022 = vand.u32 %v2021, 4294901760
  %2023 = vmatpush.msra.mxu0 %v2022
  %v2024 = vand.u32 %v806, 4294901760
  %v2025 = vsub.f32 %v806, %v2024
  %v2026 = vand.u32 %v2025, 4294901760
  %v2027 = vsub.f32 %v2025, %v2026
  %v2028 = vand.u32 %v2027, 4294901760
  %2029 = vmatpush.msra.mxu0 %v2028
  %v2030 = vand.u32 %v804, 4294901760
  %v2031 = vsub.f32 %v804, %v2030
  %v2032 = vand.u32 %v2031, 4294901760
  %v2033 = vsub.f32 %v2031, %v2032
  %v2034 = vand.u32 %v2033, 4294901760
  %2035 = vmatpush.msra.mxu0 %v2034
  %v2036 = vand.u32 %v802, 4294901760
  %v2037 = vsub.f32 %v802, %v2036
  %v2038 = vand.u32 %v2037, 4294901760
  %v2039 = vsub.f32 %v2037, %v2038
  %v2040 = vand.u32 %v2039, 4294901760
  %2041 = vmatpush.msra.mxu0 %v2040
  %v2042 = vand.u32 %v800, 4294901760
  %v2043 = vsub.f32 %v800, %v2042
  %v2044 = vand.u32 %v2043, 4294901760
  %v2045 = vsub.f32 %v2043, %v2044
  %v2046 = vand.u32 %v2045, 4294901760
  %2047 = vmatpush.msra.mxu0 %v2046
  %v2048 = vand.u32 %v798, 4294901760
  %v2049 = vsub.f32 %v798, %v2048
  %v2050 = vand.u32 %v2049, 4294901760
  %v2051 = vsub.f32 %v2049, %v2050
  %v2052 = vand.u32 %v2051, 4294901760
  %2053 = vmatpush.msra.mxu0 %v2052
  %v2054 = vand.u32 %v796, 4294901760
  %v2055 = vsub.f32 %v796, %v2054
  %v2056 = vand.u32 %v2055, 4294901760
  %v2057 = vsub.f32 %v2055, %v2056
  %v2058 = vand.u32 %v2057, 4294901760
  %2059 = vmatpush.msra.mxu0 %v2058
  %v2060 = vand.u32 %v794, 4294901760
  %v2061 = vsub.f32 %v794, %v2060
  %v2062 = vand.u32 %v2061, 4294901760
  %v2063 = vsub.f32 %v2061, %v2062
  %v2064 = vand.u32 %v2063, 4294901760
  %2065 = vmatpush.msra.mxu0 %v2064
  %v2066 = vand.u32 %v792, 4294901760
  %v2067 = vsub.f32 %v792, %v2066
  %v2068 = vand.u32 %v2067, 4294901760
  %v2069 = vsub.f32 %v2067, %v2068
  %v2070 = vand.u32 %v2069, 4294901760
  %2071 = vmatpush.msra.mxu0 %v2070
  %v2072 = vand.u32 %v1934, 4294901760
  %2073 = vmatmul.f32.gmra.mxu0 %v2072
  %v2074 = vpop.f32.mrf.mxu0
  %v2075 = vadd.f32 %v1974, %v2074
  %2076 = vdwg.mxu0
  %v2077 = vand.u32 %v822, 4294901760
  %v2078 = vsub.f32 %v822, %v2077
  %2079 = vmatpush.msra.mxu0 %v2078
  %v2080 = vand.u32 %v820, 4294901760
  %v2081 = vsub.f32 %v820, %v2080
  %2082 = vmatpush.msra.mxu0 %v2081
  %v2083 = vand.u32 %v818, 4294901760
  %v2084 = vsub.f32 %v818, %v2083
  %2085 = vmatpush.msra.mxu0 %v2084
  %v2086 = vand.u32 %v816, 4294901760
  %v2087 = vsub.f32 %v816, %v2086
  %2088 = vmatpush.msra.mxu0 %v2087
  %v2089 = vand.u32 %v814, 4294901760
  %v2090 = vsub.f32 %v814, %v2089
  %2091 = vmatpush.msra.mxu0 %v2090
  %v2092 = vand.u32 %v812, 4294901760
  %v2093 = vsub.f32 %v812, %v2092
  %2094 = vmatpush.msra.mxu0 %v2093
  %v2095 = vand.u32 %v810, 4294901760
  %v2096 = vsub.f32 %v810, %v2095
  %2097 = vmatpush.msra.mxu0 %v2096
  %v2098 = vand.u32 %v808, 4294901760
  %v2099 = vsub.f32 %v808, %v2098
  %2100 = vmatpush.msra.mxu0 %v2099
  %v2101 = vand.u32 %v806, 4294901760
  %v2102 = vsub.f32 %v806, %v2101
  %2103 = vmatpush.msra.mxu0 %v2102
  %v2104 = vand.u32 %v804, 4294901760
  %v2105 = vsub.f32 %v804, %v2104
  %2106 = vmatpush.msra.mxu0 %v2105
  %v2107 = vand.u32 %v802, 4294901760
  %v2108 = vsub.f32 %v802, %v2107
  %2109 = vmatpush.msra.mxu0 %v2108
  %v2110 = vand.u32 %v800, 4294901760
  %v2111 = vsub.f32 %v800, %v2110
  %2112 = vmatpush.msra.mxu0 %v2111
  %v2113 = vand.u32 %v798, 4294901760
  %v2114 = vsub.f32 %v798, %v2113
  %2115 = vmatpush.msra.mxu0 %v2114
  %v2116 = vand.u32 %v796, 4294901760
  %v2117 = vsub.f32 %v796, %v2116
  %2118 = vmatpush.msra.mxu0 %v2117
  %v2119 = vand.u32 %v794, 4294901760
  %v2120 = vsub.f32 %v794, %v2119
  %2121 = vmatpush.msra.mxu0 %v2120
  %v2122 = vand.u32 %v792, 4294901760
  %v2123 = vsub.f32 %v792, %v2122
  %2124 = vmatpush.msra.mxu0 %v2123
  %v2125 = vand.u32 %v1934, 4294901760
  %v2126 = vsub.f32 %v1934, %v2125
  %2127 = vmatmul.f32.gmra.mxu0 %v2126
  %v2128 = vpop.f32.mrf.mxu0
  %v2129 = vadd.f32 %v2075, %v2128
  %2130 = vdwg.mxu0
  %v2131 = vand.u32 %v822, 4294901760
  %2132 = vmatpush.msra.mxu0 %v2131
  %v2133 = vand.u32 %v820, 4294901760
  %2134 = vmatpush.msra.mxu0 %v2133
  %v2135 = vand.u32 %v818, 4294901760
  %2136 = vmatpush.msra.mxu0 %v2135
  %v2137 = vand.u32 %v816, 4294901760
  %2138 = vmatpush.msra.mxu0 %v2137
  %v2139 = vand.u32 %v814, 4294901760
  %2140 = vmatpush.msra.mxu0 %v2139
  %v2141 = vand.u32 %v812, 4294901760
  %2142 = vmatpush.msra.mxu0 %v2141
  %v2143 = vand.u32 %v810, 4294901760
  %2144 = vmatpush.msra.mxu0 %v2143
  %v2145 = vand.u32 %v808, 4294901760
  %2146 = vmatpush.msra.mxu0 %v2145
  %v2147 = vand.u32 %v806, 4294901760
  %2148 = vmatpush.msra.mxu0 %v2147
  %v2149 = vand.u32 %v804, 4294901760
  %2150 = vmatpush.msra.mxu0 %v2149
  %v2151 = vand.u32 %v802, 4294901760
  %2152 = vmatpush.msra.mxu0 %v2151
  %v2153 = vand.u32 %v800, 4294901760
  %2154 = vmatpush.msra.mxu0 %v2153
  %v2155 = vand.u32 %v798, 4294901760
  %2156 = vmatpush.msra.mxu0 %v2155
  %v2157 = vand.u32 %v796, 4294901760
  %2158 = vmatpush.msra.mxu0 %v2157
  %v2159 = vand.u32 %v794, 4294901760
  %2160 = vmatpush.msra.mxu0 %v2159
  %v2161 = vand.u32 %v792, 4294901760
  %2162 = vmatpush.msra.mxu0 %v2161
  %v2163 = vand.u32 %v1934, 4294901760
  %v2164 = vsub.f32 %v1934, %v2163
  %v2165 = vand.u32 %v2164, 4294901760
  %2166 = vmatmul.f32.gmra.mxu0 %v2165
  %v2167 = vpop.f32.mrf.mxu0
  %v2168 = vadd.f32 %v2129, %v2167
  %2169 = vdwg.mxu0
  %v2170 = vand.u32 %v822, 4294901760
  %v2171 = vsub.f32 %v822, %v2170
  %v2172 = vand.u32 %v2171, 4294901760
  %2173 = vmatpush.msra.mxu0 %v2172
  %v2174 = vand.u32 %v820, 4294901760
  %v2175 = vsub.f32 %v820, %v2174
  %v2176 = vand.u32 %v2175, 4294901760
  %2177 = vmatpush.msra.mxu0 %v2176
  %v2178 = vand.u32 %v818, 4294901760
  %v2179 = vsub.f32 %v818, %v2178
  %v2180 = vand.u32 %v2179, 4294901760
  %2181 = vmatpush.msra.mxu0 %v2180
  %v2182 = vand.u32 %v816, 4294901760
  %v2183 = vsub.f32 %v816, %v2182
  %v2184 = vand.u32 %v2183, 4294901760
  %2185 = vmatpush.msra.mxu0 %v2184
  %v2186 = vand.u32 %v814, 4294901760
  %v2187 = vsub.f32 %v814, %v2186
  %v2188 = vand.u32 %v2187, 4294901760
  %2189 = vmatpush.msra.mxu0 %v2188
  %v2190 = vand.u32 %v812, 4294901760
  %v2191 = vsub.f32 %v812, %v2190
  %v2192 = vand.u32 %v2191, 4294901760
  %2193 = vmatpush.msra.mxu0 %v2192
  %v2194 = vand.u32 %v810, 4294901760
  %v2195 = vsub.f32 %v810, %v2194
  %v2196 = vand.u32 %v2195, 4294901760
  %2197 = vmatpush.msra.mxu0 %v2196
  %v2198 = vand.u32 %v808, 4294901760
  %v2199 = vsub.f32 %v808, %v2198
  %v2200 = vand.u32 %v2199, 4294901760
  %2201 = vmatpush.msra.mxu0 %v2200
  %v2202 = vand.u32 %v806, 4294901760
  %v2203 = vsub.f32 %v806, %v2202
  %v2204 = vand.u32 %v2203, 4294901760
  %2205 = vmatpush.msra.mxu0 %v2204
  %v2206 = vand.u32 %v804, 4294901760
  %v2207 = vsub.f32 %v804, %v2206
  %v2208 = vand.u32 %v2207, 4294901760
  %2209 = vmatpush.msra.mxu0 %v2208
  %v2210 = vand.u32 %v802, 4294901760
  %v2211 = vsub.f32 %v802, %v2210
  %v2212 = vand.u32 %v2211, 4294901760
  %2213 = vmatpush.msra.mxu0 %v2212
  %v2214 = vand.u32 %v800, 4294901760
  %v2215 = vsub.f32 %v800, %v2214
  %v2216 = vand.u32 %v2215, 4294901760
  %2217 = vmatpush.msra.mxu0 %v2216
  %v2218 = vand.u32 %v798, 4294901760
  %v2219 = vsub.f32 %v798, %v2218
  %v2220 = vand.u32 %v2219, 4294901760
  %2221 = vmatpush.msra.mxu0 %v2220
  %v2222 = vand.u32 %v796, 4294901760
  %v2223 = vsub.f32 %v796, %v2222
  %v2224 = vand.u32 %v2223, 4294901760
  %2225 = vmatpush.msra.mxu0 %v2224
  %v2226 = vand.u32 %v794, 4294901760
  %v2227 = vsub.f32 %v794, %v2226
  %v2228 = vand.u32 %v2227, 4294901760
  %2229 = vmatpush.msra.mxu0 %v2228
  %v2230 = vand.u32 %v792, 4294901760
  %v2231 = vsub.f32 %v792, %v2230
  %v2232 = vand.u32 %v2231, 4294901760
  %2233 = vmatpush.msra.mxu0 %v2232
  %v2234 = vand.u32 %v1934, 4294901760
  %2235 = vmatmul.f32.gmra.mxu0 %v2234
  %v2236 = vpop.f32.mrf.mxu0
  %v2237 = vadd.f32 %v2168, %v2236
  %2238 = vdwg.mxu0
  %v2239 = vand.u32 %v822, 4294901760
  %2240 = vmatpush.msra.mxu0 %v2239
  %v2241 = vand.u32 %v820, 4294901760
  %2242 = vmatpush.msra.mxu0 %v2241
  %v2243 = vand.u32 %v818, 4294901760
  %2244 = vmatpush.msra.mxu0 %v2243
  %v2245 = vand.u32 %v816, 4294901760
  %2246 = vmatpush.msra.mxu0 %v2245
  %v2247 = vand.u32 %v814, 4294901760
  %2248 = vmatpush.msra.mxu0 %v2247
  %v2249 = vand.u32 %v812, 4294901760
  %2250 = vmatpush.msra.mxu0 %v2249
  %v2251 = vand.u32 %v810, 4294901760
  %2252 = vmatpush.msra.mxu0 %v2251
  %v2253 = vand.u32 %v808, 4294901760
  %2254 = vmatpush.msra.mxu0 %v2253
  %v2255 = vand.u32 %v806, 4294901760
  %2256 = vmatpush.msra.mxu0 %v2255
  %v2257 = vand.u32 %v804, 4294901760
  %2258 = vmatpush.msra.mxu0 %v2257
  %v2259 = vand.u32 %v802, 4294901760
  %2260 = vmatpush.msra.mxu0 %v2259
  %v2261 = vand.u32 %v800, 4294901760
  %2262 = vmatpush.msra.mxu0 %v2261
  %v2263 = vand.u32 %v798, 4294901760
  %2264 = vmatpush.msra.mxu0 %v2263
  %v2265 = vand.u32 %v796, 4294901760
  %2266 = vmatpush.msra.mxu0 %v2265
  %v2267 = vand.u32 %v794, 4294901760
  %2268 = vmatpush.msra.mxu0 %v2267
  %v2269 = vand.u32 %v792, 4294901760
  %2270 = vmatpush.msra.mxu0 %v2269
  %v2271 = vand.u32 %v1934, 4294901760
  %2272 = vmatmul.f32.gmra.mxu0 %v2271
  %v2273 = vpop.f32.mrf.mxu0
  %v2274 = vadd.f32 %v2237, %v2273
  %2275 = vdwg.mxu0
  %v2276 = vlog2.pop %v2274
  %v2277 = vmul.f32 %v2276, 0.6931472
  %v2278 = vadd.f32 %v2277, %v1931
  %v2279 = vadd.f32 %v2278, %v774
  %v2280 = vadd.f32 %v2279, %v1562
  %v2281 = vsel %vm1928, %v2280, %v1560
  %s2282 = scalar_lea.vmem [#allocation2], 24
  %v2283 = vld [vmem:[%s2282] sm:$0xff]
  %s2284 = scalar_lea.vmem %s2, 24
  %v2285 = vld [vmem:[%s2284] sm:$0xff]
  %s2286 = scalar_lea.vmem %s1, 24
  %v2287 = vld [vmem:[%s2286] sm:$0xff]
  %2288 = vset.pattern.permute.xlu0 0
  %2289 = vperm.xlu0 %2288, %v2287
  %v2290 = vpop.permute.xlu0 %2289
  %vm2291 = vcmp.eq.s32.totalorder %v824, %v2290
  %v2292 = vsel %vm2291, 1, 0
  %v2293 = vcvt.s32.f32 %v2292
  %v2294 = vmul.f32 %v2283, %v2293
  %2295 = vadd.xlane.f32.xlu0 %v2294
  %v2296 = vpop.xlane.xlu0 %2295
  %v2297 = vand.u32 %v753, 4294901760
  %2298 = vmatpush.msra.mxu0 %v2297
  %v2299 = vand.u32 %v752, 4294901760
  %2300 = vmatpush.msra.mxu0 %v2299
  %v2301 = vand.u32 %v751, 4294901760
  %2302 = vmatpush.msra.mxu0 %v2301
  %v2303 = vand.u32 %v750, 4294901760
  %2304 = vmatpush.msra.mxu0 %v2303
  %v2305 = vand.u32 %v749, 4294901760
  %2306 = vmatpush.msra.mxu0 %v2305
  %v2307 = vand.u32 %v748, 4294901760
  %2308 = vmatpush.msra.mxu0 %v2307
  %v2309 = vand.u32 %v747, 4294901760
  %2310 = vmatpush.msra.mxu0 %v2309
  %v2311 = vand.u32 %v746, 4294901760
  %2312 = vmatpush.msra.mxu0 %v2311
  %v2313 = vand.u32 %v745, 4294901760
  %2314 = vmatpush.msra.mxu0 %v2313
  %v2315 = vand.u32 %v744, 4294901760
  %2316 = vmatpush.msra.mxu0 %v2315
  %v2317 = vand.u32 %v743, 4294901760
  %2318 = vmatpush.msra.mxu0 %v2317
  %v2319 = vand.u32 %v742, 4294901760
  %2320 = vmatpush.msra.mxu0 %v2319
  %v2321 = vand.u32 %v741, 4294901760
  %2322 = vmatpush.msra.mxu0 %v2321
  %v2323 = vand.u32 %v740, 4294901760
  %2324 = vmatpush.msra.mxu0 %v2323
  %v2325 = vand.u32 %v739, 4294901760
  %2326 = vmatpush.msra.mxu0 %v2325
  %v2327 = vand.u32 %v738, 4294901760
  %2328 = vmatpush.msra.mxu0 %v2327
  %v2329 = vand.u32 %v1929, 4294901760
  %v2330 = vsub.f32 %v1929, %v2329
  %v2331 = vand.u32 %v2330, 4294901760
  %v2332 = vsub.f32 %v2330, %v2331
  %v2333 = vand.u32 %v2332, 4294901760
  %2334 = vmatmul.f32.gmra.mxu0 %v2333
  %v2335 = vpop.f32.mrf.mxu0
  %v2336 = vadd.f32 0.0, %v2335
  %2337 = vdwg.mxu0
  %v2338 = vand.u32 %v753, 4294901760
  %v2339 = vsub.f32 %v753, %v2338
  %v2340 = vand.u32 %v2339, 4294901760
  %v2341 = vsub.f32 %v2339, %v2340
  %v2342 = vand.u32 %v2341, 4294901760
  %2343 = vmatpush.msra.mxu0 %v2342
  %v2344 = vand.u32 %v752, 4294901760
  %v2345 = vsub.f32 %v752, %v2344
  %v2346 = vand.u32 %v2345, 4294901760
  %v2347 = vsub.f32 %v2345, %v2346
  %v2348 = vand.u32 %v2347, 4294901760
  %2349 = vmatpush.msra.mxu0 %v2348
  %v2350 = vand.u32 %v751, 4294901760
  %v2351 = vsub.f32 %v751, %v2350
  %v2352 = vand.u32 %v2351, 4294901760
  %v2353 = vsub.f32 %v2351, %v2352
  %v2354 = vand.u32 %v2353, 4294901760
  %2355 = vmatpush.msra.mxu0 %v2354
  %v2356 = vand.u32 %v750, 4294901760
  %v2357 = vsub.f32 %v750, %v2356
  %v2358 = vand.u32 %v2357, 4294901760
  %v2359 = vsub.f32 %v2357, %v2358
  %v2360 = vand.u32 %v2359, 4294901760
  %2361 = vmatpush.msra.mxu0 %v2360
  %v2362 = vand.u32 %v749, 4294901760
  %v2363 = vsub.f32 %v749, %v2362
  %v2364 = vand.u32 %v2363, 4294901760
  %v2365 = vsub.f32 %v2363, %v2364
  %v2366 = vand.u32 %v2365, 4294901760
  %2367 = vmatpush.msra.mxu0 %v2366
  %v2368 = vand.u32 %v748, 4294901760
  %v2369 = vsub.f32 %v748, %v2368
  %v2370 = vand.u32 %v2369, 4294901760
  %v2371 = vsub.f32 %v2369, %v2370
  %v2372 = vand.u32 %v2371, 4294901760
  %2373 = vmatpush.msra.mxu0 %v2372
  %v2374 = vand.u32 %v747, 4294901760
  %v2375 = vsub.f32 %v747, %v2374
  %v2376 = vand.u32 %v2375, 4294901760
  %v2377 = vsub.f32 %v2375, %v2376
  %v2378 = vand.u32 %v2377, 4294901760
  %2379 = vmatpush.msra.mxu0 %v2378
  %v2380 = vand.u32 %v746, 4294901760
  %v2381 = vsub.f32 %v746, %v2380
  %v2382 = vand.u32 %v2381, 4294901760
  %v2383 = vsub.f32 %v2381, %v2382
  %v2384 = vand.u32 %v2383, 4294901760
  %2385 = vmatpush.msra.mxu0 %v2384
  %v2386 = vand.u32 %v745, 4294901760
  %v2387 = vsub.f32 %v745, %v2386
  %v2388 = vand.u32 %v2387, 4294901760
  %v2389 = vsub.f32 %v2387, %v2388
  %v2390 = vand.u32 %v2389, 4294901760
  %2391 = vmatpush.msra.mxu0 %v2390
  %v2392 = vand.u32 %v744, 4294901760
  %v2393 = vsub.f32 %v744, %v2392
  %v2394 = vand.u32 %v2393, 4294901760
  %v2395 = vsub.f32 %v2393, %v2394
  %v2396 = vand.u32 %v2395, 4294901760
  %2397 = vmatpush.msra.mxu0 %v2396
  %v2398 = vand.u32 %v743, 4294901760
  %v2399 = vsub.f32 %v743, %v2398
  %v2400 = vand.u32 %v2399, 4294901760
  %v2401 = vsub.f32 %v2399, %v2400
  %v2402 = vand.u32 %v2401, 4294901760
  %2403 = vmatpush.msra.mxu0 %v2402
  %v2404 = vand.u32 %v742, 4294901760
  %v2405 = vsub.f32 %v742, %v2404
  %v2406 = vand.u32 %v2405, 4294901760
  %v2407 = vsub.f32 %v2405, %v2406
  %v2408 = vand.u32 %v2407, 4294901760
  %2409 = vmatpush.msra.mxu0 %v2408
  %v2410 = vand.u32 %v741, 4294901760
  %v2411 = vsub.f32 %v741, %v2410
  %v2412 = vand.u32 %v2411, 4294901760
  %v2413 = vsub.f32 %v2411, %v2412
  %v2414 = vand.u32 %v2413, 4294901760
  %2415 = vmatpush.msra.mxu0 %v2414
  %v2416 = vand.u32 %v740, 4294901760
  %v2417 = vsub.f32 %v740, %v2416
  %v2418 = vand.u32 %v2417, 4294901760
  %v2419 = vsub.f32 %v2417, %v2418
  %v2420 = vand.u32 %v2419, 4294901760
  %2421 = vmatpush.msra.mxu0 %v2420
  %v2422 = vand.u32 %v739, 4294901760
  %v2423 = vsub.f32 %v739, %v2422
  %v2424 = vand.u32 %v2423, 4294901760
  %v2425 = vsub.f32 %v2423, %v2424
  %v2426 = vand.u32 %v2425, 4294901760
  %2427 = vmatpush.msra.mxu0 %v2426
  %v2428 = vand.u32 %v738, 4294901760
  %v2429 = vsub.f32 %v738, %v2428
  %v2430 = vand.u32 %v2429, 4294901760
  %v2431 = vsub.f32 %v2429, %v2430
  %v2432 = vand.u32 %v2431, 4294901760
  %2433 = vmatpush.msra.mxu0 %v2432
  %v2434 = vand.u32 %v1929, 4294901760
  %2435 = vmatmul.f32.gmra.mxu0 %v2434
  %v2436 = vpop.f32.mrf.mxu0
  %v2437 = vadd.f32 %v2336, %v2436
  %2438 = vdwg.mxu0
  %v2439 = vand.u32 %v753, 4294901760
  %v2440 = vsub.f32 %v753, %v2439
  %2441 = vmatpush.msra.mxu0 %v2440
  %v2442 = vand.u32 %v752, 4294901760
  %v2443 = vsub.f32 %v752, %v2442
  %2444 = vmatpush.msra.mxu0 %v2443
  %v2445 = vand.u32 %v751, 4294901760
  %v2446 = vsub.f32 %v751, %v2445
  %2447 = vmatpush.msra.mxu0 %v2446
  %v2448 = vand.u32 %v750, 4294901760
  %v2449 = vsub.f32 %v750, %v2448
  %2450 = vmatpush.msra.mxu0 %v2449
  %v2451 = vand.u32 %v749, 4294901760
  %v2452 = vsub.f32 %v749, %v2451
  %2453 = vmatpush.msra.mxu0 %v2452
  %v2454 = vand.u32 %v748, 4294901760
  %v2455 = vsub.f32 %v748, %v2454
  %2456 = vmatpush.msra.mxu0 %v2455
  %v2457 = vand.u32 %v747, 4294901760
  %v2458 = vsub.f32 %v747, %v2457
  %2459 = vmatpush.msra.mxu0 %v2458
  %v2460 = vand.u32 %v746, 4294901760
  %v2461 = vsub.f32 %v746, %v2460
  %2462 = vmatpush.msra.mxu0 %v2461
  %v2463 = vand.u32 %v745, 4294901760
  %v2464 = vsub.f32 %v745, %v2463
  %2465 = vmatpush.msra.mxu0 %v2464
  %v2466 = vand.u32 %v744, 4294901760
  %v2467 = vsub.f32 %v744, %v2466
  %2468 = vmatpush.msra.mxu0 %v2467
  %v2469 = vand.u32 %v743, 4294901760
  %v2470 = vsub.f32 %v743, %v2469
  %2471 = vmatpush.msra.mxu0 %v2470
  %v2472 = vand.u32 %v742, 4294901760
  %v2473 = vsub.f32 %v742, %v2472
  %2474 = vmatpush.msra.mxu0 %v2473
  %v2475 = vand.u32 %v741, 4294901760
  %v2476 = vsub.f32 %v741, %v2475
  %2477 = vmatpush.msra.mxu0 %v2476
  %v2478 = vand.u32 %v740, 4294901760
  %v2479 = vsub.f32 %v740, %v2478
  %2480 = vmatpush.msra.mxu0 %v2479
  %v2481 = vand.u32 %v739, 4294901760
  %v2482 = vsub.f32 %v739, %v2481
  %2483 = vmatpush.msra.mxu0 %v2482
  %v2484 = vand.u32 %v738, 4294901760
  %v2485 = vsub.f32 %v738, %v2484
  %2486 = vmatpush.msra.mxu0 %v2485
  %v2487 = vand.u32 %v1929, 4294901760
  %v2488 = vsub.f32 %v1929, %v2487
  %2489 = vmatmul.f32.gmra.mxu0 %v2488
  %v2490 = vpop.f32.mrf.mxu0
  %v2491 = vadd.f32 %v2437, %v2490
  %2492 = vdwg.mxu0
  %v2493 = vand.u32 %v753, 4294901760
  %2494 = vmatpush.msra.mxu0 %v2493
  %v2495 = vand.u32 %v752, 4294901760
  %2496 = vmatpush.msra.mxu0 %v2495
  %v2497 = vand.u32 %v751, 4294901760
  %2498 = vmatpush.msra.mxu0 %v2497
  %v2499 = vand.u32 %v750, 4294901760
  %2500 = vmatpush.msra.mxu0 %v2499
  %v2501 = vand.u32 %v749, 4294901760
  %2502 = vmatpush.msra.mxu0 %v2501
  %v2503 = vand.u32 %v748, 4294901760
  %2504 = vmatpush.msra.mxu0 %v2503
  %v2505 = vand.u32 %v747, 4294901760
  %2506 = vmatpush.msra.mxu0 %v2505
  %v2507 = vand.u32 %v746, 4294901760
  %2508 = vmatpush.msra.mxu0 %v2507
  %v2509 = vand.u32 %v745, 4294901760
  %2510 = vmatpush.msra.mxu0 %v2509
  %v2511 = vand.u32 %v744, 4294901760
  %2512 = vmatpush.msra.mxu0 %v2511
  %v2513 = vand.u32 %v743, 4294901760
  %2514 = vmatpush.msra.mxu0 %v2513
  %v2515 = vand.u32 %v742, 4294901760
  %2516 = vmatpush.msra.mxu0 %v2515
  %v2517 = vand.u32 %v741, 4294901760
  %2518 = vmatpush.msra.mxu0 %v2517
  %v2519 = vand.u32 %v740, 4294901760
  %2520 = vmatpush.msra.mxu0 %v2519
  %v2521 = vand.u32 %v739, 4294901760
  %2522 = vmatpush.msra.mxu0 %v2521
  %v2523 = vand.u32 %v738, 4294901760
  %2524 = vmatpush.msra.mxu0 %v2523
  %v2525 = vand.u32 %v1929, 4294901760
  %v2526 = vsub.f32 %v1929, %v2525
  %v2527 = vand.u32 %v2526, 4294901760
  %2528 = vmatmul.f32.gmra.mxu0 %v2527
  %v2529 = vpop.f32.mrf.mxu0
  %v2530 = vadd.f32 %v2491, %v2529
  %2531 = vdwg.mxu0
  %v2532 = vand.u32 %v753, 4294901760
  %v2533 = vsub.f32 %v753, %v2532
  %v2534 = vand.u32 %v2533, 4294901760
  %2535 = vmatpush.msra.mxu0 %v2534
  %v2536 = vand.u32 %v752, 4294901760
  %v2537 = vsub.f32 %v752, %v2536
  %v2538 = vand.u32 %v2537, 4294901760
  %2539 = vmatpush.msra.mxu0 %v2538
  %v2540 = vand.u32 %v751, 4294901760
  %v2541 = vsub.f32 %v751, %v2540
  %v2542 = vand.u32 %v2541, 4294901760
  %2543 = vmatpush.msra.mxu0 %v2542
  %v2544 = vand.u32 %v750, 4294901760
  %v2545 = vsub.f32 %v750, %v2544
  %v2546 = vand.u32 %v2545, 4294901760
  %2547 = vmatpush.msra.mxu0 %v2546
  %v2548 = vand.u32 %v749, 4294901760
  %v2549 = vsub.f32 %v749, %v2548
  %v2550 = vand.u32 %v2549, 4294901760
  %2551 = vmatpush.msra.mxu0 %v2550
  %v2552 = vand.u32 %v748, 4294901760
  %v2553 = vsub.f32 %v748, %v2552
  %v2554 = vand.u32 %v2553, 4294901760
  %2555 = vmatpush.msra.mxu0 %v2554
  %v2556 = vand.u32 %v747, 4294901760
  %v2557 = vsub.f32 %v747, %v2556
  %v2558 = vand.u32 %v2557, 4294901760
  %2559 = vmatpush.msra.mxu0 %v2558
  %v2560 = vand.u32 %v746, 4294901760
  %v2561 = vsub.f32 %v746, %v2560
  %v2562 = vand.u32 %v2561, 4294901760
  %2563 = vmatpush.msra.mxu0 %v2562
  %v2564 = vand.u32 %v745, 4294901760
  %v2565 = vsub.f32 %v745, %v2564
  %v2566 = vand.u32 %v2565, 4294901760
  %2567 = vmatpush.msra.mxu0 %v2566
  %v2568 = vand.u32 %v744, 4294901760
  %v2569 = vsub.f32 %v744, %v2568
  %v2570 = vand.u32 %v2569, 4294901760
  %2571 = vmatpush.msra.mxu0 %v2570
  %v2572 = vand.u32 %v743, 4294901760
  %v2573 = vsub.f32 %v743, %v2572
  %v2574 = vand.u32 %v2573, 4294901760
  %2575 = vmatpush.msra.mxu0 %v2574
  %v2576 = vand.u32 %v742, 4294901760
  %v2577 = vsub.f32 %v742, %v2576
  %v2578 = vand.u32 %v2577, 4294901760
  %2579 = vmatpush.msra.mxu0 %v2578
  %v2580 = vand.u32 %v741, 4294901760
  %v2581 = vsub.f32 %v741, %v2580
  %v2582 = vand.u32 %v2581, 4294901760
  %2583 = vmatpush.msra.mxu0 %v2582
  %v2584 = vand.u32 %v740, 4294901760
  %v2585 = vsub.f32 %v740, %v2584
  %v2586 = vand.u32 %v2585, 4294901760
  %2587 = vmatpush.msra.mxu0 %v2586
  %v2588 = vand.u32 %v739, 4294901760
  %v2589 = vsub.f32 %v739, %v2588
  %v2590 = vand.u32 %v2589, 4294901760
  %2591 = vmatpush.msra.mxu0 %v2590
  %v2592 = vand.u32 %v738, 4294901760
  %v2593 = vsub.f32 %v738, %v2592
  %v2594 = vand.u32 %v2593, 4294901760
  %2595 = vmatpush.msra.mxu0 %v2594
  %v2596 = vand.u32 %v1929, 4294901760
  %2597 = vmatmul.f32.gmra.mxu0 %v2596
  %v2598 = vpop.f32.mrf.mxu0
  %v2599 = vadd.f32 %v2530, %v2598
  %2600 = vdwg.mxu0
  %v2601 = vand.u32 %v753, 4294901760
  %2602 = vmatpush.msra.mxu0 %v2601
  %v2603 = vand.u32 %v752, 4294901760
  %2604 = vmatpush.msra.mxu0 %v2603
  %v2605 = vand.u32 %v751, 4294901760
  %2606 = vmatpush.msra.mxu0 %v2605
  %v2607 = vand.u32 %v750, 4294901760
  %2608 = vmatpush.msra.mxu0 %v2607
  %v2609 = vand.u32 %v749, 4294901760
  %2610 = vmatpush.msra.mxu0 %v2609
  %v2611 = vand.u32 %v748, 4294901760
  %2612 = vmatpush.msra.mxu0 %v2611
  %v2613 = vand.u32 %v747, 4294901760
  %2614 = vmatpush.msra.mxu0 %v2613
  %v2615 = vand.u32 %v746, 4294901760
  %2616 = vmatpush.msra.mxu0 %v2615
  %v2617 = vand.u32 %v745, 4294901760
  %2618 = vmatpush.msra.mxu0 %v2617
  %v2619 = vand.u32 %v744, 4294901760
  %2620 = vmatpush.msra.mxu0 %v2619
  %v2621 = vand.u32 %v743, 4294901760
  %2622 = vmatpush.msra.mxu0 %v2621
  %v2623 = vand.u32 %v742, 4294901760
  %2624 = vmatpush.msra.mxu0 %v2623
  %v2625 = vand.u32 %v741, 4294901760
  %2626 = vmatpush.msra.mxu0 %v2625
  %v2627 = vand.u32 %v740, 4294901760
  %2628 = vmatpush.msra.mxu0 %v2627
  %v2629 = vand.u32 %v739, 4294901760
  %2630 = vmatpush.msra.mxu0 %v2629
  %v2631 = vand.u32 %v738, 4294901760
  %2632 = vmatpush.msra.mxu0 %v2631
  %v2633 = vand.u32 %v1929, 4294901760
  %2634 = vmatmul.f32.gmra.mxu0 %v2633
  %v2635 = vpop.f32.mrf.mxu0
  %v2636 = vadd.f32 %v2599, %v2635
  %2637 = vdwg.mxu0
  %v2638 = vmul.f32 %v2636, %v2293
  %2639 = vadd.xlane.f32.xlu0 %v2638
  %v2640 = vpop.xlane.xlu0 %2639
  %v2641 = vadd.f32 %v2296, %v2640
  %v2642 = vmul.f32 %v2285, %v2641
  %v2643 = vadd.f32 %v1922, %v2642
  %vm2644 = vcmp.gt.f32.partialorder %v2285, 0.0
  %v2645 = vsel %vm2644, 1, 0
  %2646 = vset.pattern.permute.xlu0 0
  %2647 = vperm.xlu0 %2646, %v2645
  %v2648 = vpop.permute.xlu0 %2647
  %vm2649 = vcmp.eq.s32.totalorder %v2648, 1
  %v2650 = vsel %vm2649, %v2293, %v1929
  %2651 = vmax.xlane.f32.xlu0 %v2281
  %v2652 = vpop.xlane.xlu0 %2651
  %v2653 = vsub.f32 %v2281, %v2652
  %v2654 = vmul.f32 %v2653, 1.442695
  %v2655 = vpow.pop %v2654
  %v2656 = vand.u32 %v822, 4294901760
  %2657 = vmatpush.msra.mxu0 %v2656
  %v2658 = vand.u32 %v820, 4294901760
  %2659 = vmatpush.msra.mxu0 %v2658
  %v2660 = vand.u32 %v818, 4294901760
  %2661 = vmatpush.msra.mxu0 %v2660
  %v2662 = vand.u32 %v816, 4294901760
  %2663 = vmatpush.msra.mxu0 %v2662
  %v2664 = vand.u32 %v814, 4294901760
  %2665 = vmatpush.msra.mxu0 %v2664
  %v2666 = vand.u32 %v812, 4294901760
  %2667 = vmatpush.msra.mxu0 %v2666
  %v2668 = vand.u32 %v810, 4294901760
  %2669 = vmatpush.msra.mxu0 %v2668
  %v2670 = vand.u32 %v808, 4294901760
  %2671 = vmatpush.msra.mxu0 %v2670
  %v2672 = vand.u32 %v806, 4294901760
  %2673 = vmatpush.msra.mxu0 %v2672
  %v2674 = vand.u32 %v804, 4294901760
  %2675 = vmatpush.msra.mxu0 %v2674
  %v2676 = vand.u32 %v802, 4294901760
  %2677 = vmatpush.msra.mxu0 %v2676
  %v2678 = vand.u32 %v800, 4294901760
  %2679 = vmatpush.msra.mxu0 %v2678
  %v2680 = vand.u32 %v798, 4294901760
  %2681 = vmatpush.msra.mxu0 %v2680
  %v2682 = vand.u32 %v796, 4294901760
  %2683 = vmatpush.msra.mxu0 %v2682
  %v2684 = vand.u32 %v794, 4294901760
  %2685 = vmatpush.msra.mxu0 %v2684
  %v2686 = vand.u32 %v792, 4294901760
  %2687 = vmatpush.msra.mxu0 %v2686
  %v2688 = vand.u32 %v2655, 4294901760
  %v2689 = vsub.f32 %v2655, %v2688
  %v2690 = vand.u32 %v2689, 4294901760
  %v2691 = vsub.f32 %v2689, %v2690
  %v2692 = vand.u32 %v2691, 4294901760
  %2693 = vmatmul.f32.gmra.mxu0 %v2692
  %v2694 = vpop.f32.mrf.mxu0
  %v2695 = vadd.f32 0.0, %v2694
  %2696 = vdwg.mxu0
  %v2697 = vand.u32 %v822, 4294901760
  %v2698 = vsub.f32 %v822, %v2697
  %v2699 = vand.u32 %v2698, 4294901760
  %v2700 = vsub.f32 %v2698, %v2699
  %v2701 = vand.u32 %v2700, 4294901760
  %2702 = vmatpush.msra.mxu0 %v2701
  %v2703 = vand.u32 %v820, 4294901760
  %v2704 = vsub.f32 %v820, %v2703
  %v2705 = vand.u32 %v2704, 4294901760
  %v2706 = vsub.f32 %v2704, %v2705
  %v2707 = vand.u32 %v2706, 4294901760
  %2708 = vmatpush.msra.mxu0 %v2707
  %v2709 = vand.u32 %v818, 4294901760
  %v2710 = vsub.f32 %v818, %v2709
  %v2711 = vand.u32 %v2710, 4294901760
  %v2712 = vsub.f32 %v2710, %v2711
  %v2713 = vand.u32 %v2712, 4294901760
  %2714 = vmatpush.msra.mxu0 %v2713
  %v2715 = vand.u32 %v816, 4294901760
  %v2716 = vsub.f32 %v816, %v2715
  %v2717 = vand.u32 %v2716, 4294901760
  %v2718 = vsub.f32 %v2716, %v2717
  %v2719 = vand.u32 %v2718, 4294901760
  %2720 = vmatpush.msra.mxu0 %v2719
  %v2721 = vand.u32 %v814, 4294901760
  %v2722 = vsub.f32 %v814, %v2721
  %v2723 = vand.u32 %v2722, 4294901760
  %v2724 = vsub.f32 %v2722, %v2723
  %v2725 = vand.u32 %v2724, 4294901760
  %2726 = vmatpush.msra.mxu0 %v2725
  %v2727 = vand.u32 %v812, 4294901760
  %v2728 = vsub.f32 %v812, %v2727
  %v2729 = vand.u32 %v2728, 4294901760
  %v2730 = vsub.f32 %v2728, %v2729
  %v2731 = vand.u32 %v2730, 4294901760
  %2732 = vmatpush.msra.mxu0 %v2731
  %v2733 = vand.u32 %v810, 4294901760
  %v2734 = vsub.f32 %v810, %v2733
  %v2735 = vand.u32 %v2734, 4294901760
  %v2736 = vsub.f32 %v2734, %v2735
  %v2737 = vand.u32 %v2736, 4294901760
  %2738 = vmatpush.msra.mxu0 %v2737
  %v2739 = vand.u32 %v808, 4294901760
  %v2740 = vsub.f32 %v808, %v2739
  %v2741 = vand.u32 %v2740, 4294901760
  %v2742 = vsub.f32 %v2740, %v2741
  %v2743 = vand.u32 %v2742, 4294901760
  %2744 = vmatpush.msra.mxu0 %v2743
  %v2745 = vand.u32 %v806, 4294901760
  %v2746 = vsub.f32 %v806, %v2745
  %v2747 = vand.u32 %v2746, 4294901760
  %v2748 = vsub.f32 %v2746, %v2747
  %v2749 = vand.u32 %v2748, 4294901760
  %2750 = vmatpush.msra.mxu0 %v2749
  %v2751 = vand.u32 %v804, 4294901760
  %v2752 = vsub.f32 %v804, %v2751
  %v2753 = vand.u32 %v2752, 4294901760
  %v2754 = vsub.f32 %v2752, %v2753
  %v2755 = vand.u32 %v2754, 4294901760
  %2756 = vmatpush.msra.mxu0 %v2755
  %v2757 = vand.u32 %v802, 4294901760
  %v2758 = vsub.f32 %v802, %v2757
  %v2759 = vand.u32 %v2758, 4294901760
  %v2760 = vsub.f32 %v2758, %v2759
  %v2761 = vand.u32 %v2760, 4294901760
  %2762 = vmatpush.msra.mxu0 %v2761
  %v2763 = vand.u32 %v800, 4294901760
  %v2764 = vsub.f32 %v800, %v2763
  %v2765 = vand.u32 %v2764, 4294901760
  %v2766 = vsub.f32 %v2764, %v2765
  %v2767 = vand.u32 %v2766, 4294901760
  %2768 = vmatpush.msra.mxu0 %v2767
  %v2769 = vand.u32 %v798, 4294901760
  %v2770 = vsub.f32 %v798, %v2769
  %v2771 = vand.u32 %v2770, 4294901760
  %v2772 = vsub.f32 %v2770, %v2771
  %v2773 = vand.u32 %v2772, 4294901760
  %2774 = vmatpush.msra.mxu0 %v2773
  %v2775 = vand.u32 %v796, 4294901760
  %v2776 = vsub.f32 %v796, %v2775
  %v2777 = vand.u32 %v2776, 4294901760
  %v2778 = vsub.f32 %v2776, %v2777
  %v2779 = vand.u32 %v2778, 4294901760
  %2780 = vmatpush.msra.mxu0 %v2779
  %v2781 = vand.u32 %v794, 4294901760
  %v2782 = vsub.f32 %v794, %v2781
  %v2783 = vand.u32 %v2782, 4294901760
  %v2784 = vsub.f32 %v2782, %v2783
  %v2785 = vand.u32 %v2784, 4294901760
  %2786 = vmatpush.msra.mxu0 %v2785
  %v2787 = vand.u32 %v792, 4294901760
  %v2788 = vsub.f32 %v792, %v2787
  %v2789 = vand.u32 %v2788, 4294901760
  %v2790 = vsub.f32 %v2788, %v2789
  %v2791 = vand.u32 %v2790, 4294901760
  %2792 = vmatpush.msra.mxu0 %v2791
  %v2793 = vand.u32 %v2655, 4294901760
  %2794 = vmatmul.f32.gmra.mxu0 %v2793
  %v2795 = vpop.f32.mrf.mxu0
  %v2796 = vadd.f32 %v2695, %v2795
  %2797 = vdwg.mxu0
  %v2798 = vand.u32 %v822, 4294901760
  %v2799 = vsub.f32 %v822, %v2798
  %2800 = vmatpush.msra.mxu0 %v2799
  %v2801 = vand.u32 %v820, 4294901760
  %v2802 = vsub.f32 %v820, %v2801
  %2803 = vmatpush.msra.mxu0 %v2802
  %v2804 = vand.u32 %v818, 4294901760
  %v2805 = vsub.f32 %v818, %v2804
  %2806 = vmatpush.msra.mxu0 %v2805
  %v2807 = vand.u32 %v816, 4294901760
  %v2808 = vsub.f32 %v816, %v2807
  %2809 = vmatpush.msra.mxu0 %v2808
  %v2810 = vand.u32 %v814, 4294901760
  %v2811 = vsub.f32 %v814, %v2810
  %2812 = vmatpush.msra.mxu0 %v2811
  %v2813 = vand.u32 %v812, 4294901760
  %v2814 = vsub.f32 %v812, %v2813
  %2815 = vmatpush.msra.mxu0 %v2814
  %v2816 = vand.u32 %v810, 4294901760
  %v2817 = vsub.f32 %v810, %v2816
  %2818 = vmatpush.msra.mxu0 %v2817
  %v2819 = vand.u32 %v808, 4294901760
  %v2820 = vsub.f32 %v808, %v2819
  %2821 = vmatpush.msra.mxu0 %v2820
  %v2822 = vand.u32 %v806, 4294901760
  %v2823 = vsub.f32 %v806, %v2822
  %2824 = vmatpush.msra.mxu0 %v2823
  %v2825 = vand.u32 %v804, 4294901760
  %v2826 = vsub.f32 %v804, %v2825
  %2827 = vmatpush.msra.mxu0 %v2826
  %v2828 = vand.u32 %v802, 4294901760
  %v2829 = vsub.f32 %v802, %v2828
  %2830 = vmatpush.msra.mxu0 %v2829
  %v2831 = vand.u32 %v800, 4294901760
  %v2832 = vsub.f32 %v800, %v2831
  %2833 = vmatpush.msra.mxu0 %v2832
  %v2834 = vand.u32 %v798, 4294901760
  %v2835 = vsub.f32 %v798, %v2834
  %2836 = vmatpush.msra.mxu0 %v2835
  %v2837 = vand.u32 %v796, 4294901760
  %v2838 = vsub.f32 %v796, %v2837
  %2839 = vmatpush.msra.mxu0 %v2838
  %v2840 = vand.u32 %v794, 4294901760
  %v2841 = vsub.f32 %v794, %v2840
  %2842 = vmatpush.msra.mxu0 %v2841
  %v2843 = vand.u32 %v792, 4294901760
  %v2844 = vsub.f32 %v792, %v2843
  %2845 = vmatpush.msra.mxu0 %v2844
  %v2846 = vand.u32 %v2655, 4294901760
  %v2847 = vsub.f32 %v2655, %v2846
  %2848 = vmatmul.f32.gmra.mxu0 %v2847
  %v2849 = vpop.f32.mrf.mxu0
  %v2850 = vadd.f32 %v2796, %v2849
  %2851 = vdwg.mxu0
  %v2852 = vand.u32 %v822, 4294901760
  %2853 = vmatpush.msra.mxu0 %v2852
  %v2854 = vand.u32 %v820, 4294901760
  %2855 = vmatpush.msra.mxu0 %v2854
  %v2856 = vand.u32 %v818, 4294901760
  %2857 = vmatpush.msra.mxu0 %v2856
  %v2858 = vand.u32 %v816, 4294901760
  %2859 = vmatpush.msra.mxu0 %v2858
  %v2860 = vand.u32 %v814, 4294901760
  %2861 = vmatpush.msra.mxu0 %v2860
  %v2862 = vand.u32 %v812, 4294901760
  %2863 = vmatpush.msra.mxu0 %v2862
  %v2864 = vand.u32 %v810, 4294901760
  %2865 = vmatpush.msra.mxu0 %v2864
  %v2866 = vand.u32 %v808, 4294901760
  %2867 = vmatpush.msra.mxu0 %v2866
  %v2868 = vand.u32 %v806, 4294901760
  %2869 = vmatpush.msra.mxu0 %v2868
  %v2870 = vand.u32 %v804, 4294901760
  %2871 = vmatpush.msra.mxu0 %v2870
  %v2872 = vand.u32 %v802, 4294901760
  %2873 = vmatpush.msra.mxu0 %v2872
  %v2874 = vand.u32 %v800, 4294901760
  %2875 = vmatpush.msra.mxu0 %v2874
  %v2876 = vand.u32 %v798, 4294901760
  %2877 = vmatpush.msra.mxu0 %v2876
  %v2878 = vand.u32 %v796, 4294901760
  %2879 = vmatpush.msra.mxu0 %v2878
  %v2880 = vand.u32 %v794, 4294901760
  %2881 = vmatpush.msra.mxu0 %v2880
  %v2882 = vand.u32 %v792, 4294901760
  %2883 = vmatpush.msra.mxu0 %v2882
  %v2884 = vand.u32 %v2655, 4294901760
  %v2885 = vsub.f32 %v2655, %v2884
  %v2886 = vand.u32 %v2885, 4294901760
  %2887 = vmatmul.f32.gmra.mxu0 %v2886
  %v2888 = vpop.f32.mrf.mxu0
  %v2889 = vadd.f32 %v2850, %v2888
  %2890 = vdwg.mxu0
  %v2891 = vand.u32 %v822, 4294901760
  %v2892 = vsub.f32 %v822, %v2891
  %v2893 = vand.u32 %v2892, 4294901760
  %2894 = vmatpush.msra.mxu0 %v2893
  %v2895 = vand.u32 %v820, 4294901760
  %v2896 = vsub.f32 %v820, %v2895
  %v2897 = vand.u32 %v2896, 4294901760
  %2898 = vmatpush.msra.mxu0 %v2897
  %v2899 = vand.u32 %v818, 4294901760
  %v2900 = vsub.f32 %v818, %v2899
  %v2901 = vand.u32 %v2900, 4294901760
  %2902 = vmatpush.msra.mxu0 %v2901
  %v2903 = vand.u32 %v816, 4294901760
  %v2904 = vsub.f32 %v816, %v2903
  %v2905 = vand.u32 %v2904, 4294901760
  %2906 = vmatpush.msra.mxu0 %v2905
  %v2907 = vand.u32 %v814, 4294901760
  %v2908 = vsub.f32 %v814, %v2907
  %v2909 = vand.u32 %v2908, 4294901760
  %2910 = vmatpush.msra.mxu0 %v2909
  %v2911 = vand.u32 %v812, 4294901760
  %v2912 = vsub.f32 %v812, %v2911
  %v2913 = vand.u32 %v2912, 4294901760
  %2914 = vmatpush.msra.mxu0 %v2913
  %v2915 = vand.u32 %v810, 4294901760
  %v2916 = vsub.f32 %v810, %v2915
  %v2917 = vand.u32 %v2916, 4294901760
  %2918 = vmatpush.msra.mxu0 %v2917
  %v2919 = vand.u32 %v808, 4294901760
  %v2920 = vsub.f32 %v808, %v2919
  %v2921 = vand.u32 %v2920, 4294901760
  %2922 = vmatpush.msra.mxu0 %v2921
  %v2923 = vand.u32 %v806, 4294901760
  %v2924 = vsub.f32 %v806, %v2923
  %v2925 = vand.u32 %v2924, 4294901760
  %2926 = vmatpush.msra.mxu0 %v2925
  %v2927 = vand.u32 %v804, 4294901760
  %v2928 = vsub.f32 %v804, %v2927
  %v2929 = vand.u32 %v2928, 4294901760
  %2930 = vmatpush.msra.mxu0 %v2929
  %v2931 = vand.u32 %v802, 4294901760
  %v2932 = vsub.f32 %v802, %v2931
  %v2933 = vand.u32 %v2932, 4294901760
  %2934 = vmatpush.msra.mxu0 %v2933
  %v2935 = vand.u32 %v800, 4294901760
  %v2936 = vsub.f32 %v800, %v2935
  %v2937 = vand.u32 %v2936, 4294901760
  %2938 = vmatpush.msra.mxu0 %v2937
  %v2939 = vand.u32 %v798, 4294901760
  %v2940 = vsub.f32 %v798, %v2939
  %v2941 = vand.u32 %v2940, 4294901760
  %2942 = vmatpush.msra.mxu0 %v2941
  %v2943 = vand.u32 %v796, 4294901760
  %v2944 = vsub.f32 %v796, %v2943
  %v2945 = vand.u32 %v2944, 4294901760
  %2946 = vmatpush.msra.mxu0 %v2945
  %v2947 = vand.u32 %v794, 4294901760
  %v2948 = vsub.f32 %v794, %v2947
  %v2949 = vand.u32 %v2948, 4294901760
  %2950 = vmatpush.msra.mxu0 %v2949
  %v2951 = vand.u32 %v792, 4294901760
  %v2952 = vsub.f32 %v792, %v2951
  %v2953 = vand.u32 %v2952, 4294901760
  %2954 = vmatpush.msra.mxu0 %v2953
  %v2955 = vand.u32 %v2655, 4294901760
  %2956 = vmatmul.f32.gmra.mxu0 %v2955
  %v2957 = vpop.f32.mrf.mxu0
  %v2958 = vadd.f32 %v2889, %v2957
  %2959 = vdwg.mxu0
  %v2960 = vand.u32 %v822, 4294901760
  %2961 = vmatpush.msra.mxu0 %v2960
  %v2962 = vand.u32 %v820, 4294901760
  %2963 = vmatpush.msra.mxu0 %v2962
  %v2964 = vand.u32 %v818, 4294901760
  %2965 = vmatpush.msra.mxu0 %v2964
  %v2966 = vand.u32 %v816, 4294901760
  %2967 = vmatpush.msra.mxu0 %v2966
  %v2968 = vand.u32 %v814, 4294901760
  %2969 = vmatpush.msra.mxu0 %v2968
  %v2970 = vand.u32 %v812, 4294901760
  %2971 = vmatpush.msra.mxu0 %v2970
  %v2972 = vand.u32 %v810, 4294901760
  %2973 = vmatpush.msra.mxu0 %v2972
  %v2974 = vand.u32 %v808, 4294901760
  %2975 = vmatpush.msra.mxu0 %v2974
  %v2976 = vand.u32 %v806, 4294901760
  %2977 = vmatpush.msra.mxu0 %v2976
  %v2978 = vand.u32 %v804, 4294901760
  %2979 = vmatpush.msra.mxu0 %v2978
  %v2980 = vand.u32 %v802, 4294901760
  %2981 = vmatpush.msra.mxu0 %v2980
  %v2982 = vand.u32 %v800, 4294901760
  %2983 = vmatpush.msra.mxu0 %v2982
  %v2984 = vand.u32 %v798, 4294901760
  %2985 = vmatpush.msra.mxu0 %v2984
  %v2986 = vand.u32 %v796, 4294901760
  %2987 = vmatpush.msra.mxu0 %v2986
  %v2988 = vand.u32 %v794, 4294901760
  %2989 = vmatpush.msra.mxu0 %v2988
  %v2990 = vand.u32 %v792, 4294901760
  %2991 = vmatpush.msra.mxu0 %v2990
  %v2992 = vand.u32 %v2655, 4294901760
  %2993 = vmatmul.f32.gmra.mxu0 %v2992
  %v2994 = vpop.f32.mrf.mxu0
  %v2995 = vadd.f32 %v2958, %v2994
  %2996 = vdwg.mxu0
  %v2997 = vlog2.pop %v2995
  %v2998 = vmul.f32 %v2997, 0.6931472
  %v2999 = vadd.f32 %v2998, %v2652
  %v3000 = vadd.f32 %v2999, %v774
  %v3001 = vadd.f32 %v3000, %v2283
  %v3002 = vsel %vm2649, %v3001, %v2281
  %s3003 = scalar_lea.vmem [#allocation2], 32
  %v3004 = vld [vmem:[%s3003] sm:$0xff]
  %s3005 = scalar_lea.vmem %s2, 32
  %v3006 = vld [vmem:[%s3005] sm:$0xff]
  %s3007 = scalar_lea.vmem %s1, 32
  %v3008 = vld [vmem:[%s3007] sm:$0xff]
  %3009 = vset.pattern.permute.xlu0 0
  %3010 = vperm.xlu0 %3009, %v3008
  %v3011 = vpop.permute.xlu0 %3010
  %vm3012 = vcmp.eq.s32.totalorder %v824, %v3011
  %v3013 = vsel %vm3012, 1, 0
  %v3014 = vcvt.s32.f32 %v3013
  %v3015 = vmul.f32 %v3004, %v3014
  %3016 = vadd.xlane.f32.xlu0 %v3015
  %v3017 = vpop.xlane.xlu0 %3016
  %v3018 = vand.u32 %v753, 4294901760
  %3019 = vmatpush.msra.mxu0 %v3018
  %v3020 = vand.u32 %v752, 4294901760
  %3021 = vmatpush.msra.mxu0 %v3020
  %v3022 = vand.u32 %v751, 4294901760
  %3023 = vmatpush.msra.mxu0 %v3022
  %v3024 = vand.u32 %v750, 4294901760
  %3025 = vmatpush.msra.mxu0 %v3024
  %v3026 = vand.u32 %v749, 4294901760
  %3027 = vmatpush.msra.mxu0 %v3026
  %v3028 = vand.u32 %v748, 4294901760
  %3029 = vmatpush.msra.mxu0 %v3028
  %v3030 = vand.u32 %v747, 4294901760
  %3031 = vmatpush.msra.mxu0 %v3030
  %v3032 = vand.u32 %v746, 4294901760
  %3033 = vmatpush.msra.mxu0 %v3032
  %v3034 = vand.u32 %v745, 4294901760
  %3035 = vmatpush.msra.mxu0 %v3034
  %v3036 = vand.u32 %v744, 4294901760
  %3037 = vmatpush.msra.mxu0 %v3036
  %v3038 = vand.u32 %v743, 4294901760
  %3039 = vmatpush.msra.mxu0 %v3038
  %v3040 = vand.u32 %v742, 4294901760
  %3041 = vmatpush.msra.mxu0 %v3040
  %v3042 = vand.u32 %v741, 4294901760
  %3043 = vmatpush.msra.mxu0 %v3042
  %v3044 = vand.u32 %v740, 4294901760
  %3045 = vmatpush.msra.mxu0 %v3044
  %v3046 = vand.u32 %v739, 4294901760
  %3047 = vmatpush.msra.mxu0 %v3046
  %v3048 = vand.u32 %v738, 4294901760
  %3049 = vmatpush.msra.mxu0 %v3048
  %v3050 = vand.u32 %v2650, 4294901760
  %v3051 = vsub.f32 %v2650, %v3050
  %v3052 = vand.u32 %v3051, 4294901760
  %v3053 = vsub.f32 %v3051, %v3052
  %v3054 = vand.u32 %v3053, 4294901760
  %3055 = vmatmul.f32.gmra.mxu0 %v3054
  %v3056 = vpop.f32.mrf.mxu0
  %v3057 = vadd.f32 0.0, %v3056
  %3058 = vdwg.mxu0
  %v3059 = vand.u32 %v753, 4294901760
  %v3060 = vsub.f32 %v753, %v3059
  %v3061 = vand.u32 %v3060, 4294901760
  %v3062 = vsub.f32 %v3060, %v3061
  %v3063 = vand.u32 %v3062, 4294901760
  %3064 = vmatpush.msra.mxu0 %v3063
  %v3065 = vand.u32 %v752, 4294901760
  %v3066 = vsub.f32 %v752, %v3065
  %v3067 = vand.u32 %v3066, 4294901760
  %v3068 = vsub.f32 %v3066, %v3067
  %v3069 = vand.u32 %v3068, 4294901760
  %3070 = vmatpush.msra.mxu0 %v3069
  %v3071 = vand.u32 %v751, 4294901760
  %v3072 = vsub.f32 %v751, %v3071
  %v3073 = vand.u32 %v3072, 4294901760
  %v3074 = vsub.f32 %v3072, %v3073
  %v3075 = vand.u32 %v3074, 4294901760
  %3076 = vmatpush.msra.mxu0 %v3075
  %v3077 = vand.u32 %v750, 4294901760
  %v3078 = vsub.f32 %v750, %v3077
  %v3079 = vand.u32 %v3078, 4294901760
  %v3080 = vsub.f32 %v3078, %v3079
  %v3081 = vand.u32 %v3080, 4294901760
  %3082 = vmatpush.msra.mxu0 %v3081
  %v3083 = vand.u32 %v749, 4294901760
  %v3084 = vsub.f32 %v749, %v3083
  %v3085 = vand.u32 %v3084, 4294901760
  %v3086 = vsub.f32 %v3084, %v3085
  %v3087 = vand.u32 %v3086, 4294901760
  %3088 = vmatpush.msra.mxu0 %v3087
  %v3089 = vand.u32 %v748, 4294901760
  %v3090 = vsub.f32 %v748, %v3089
  %v3091 = vand.u32 %v3090, 4294901760
  %v3092 = vsub.f32 %v3090, %v3091
  %v3093 = vand.u32 %v3092, 4294901760
  %3094 = vmatpush.msra.mxu0 %v3093
  %v3095 = vand.u32 %v747, 4294901760
  %v3096 = vsub.f32 %v747, %v3095
  %v3097 = vand.u32 %v3096, 4294901760
  %v3098 = vsub.f32 %v3096, %v3097
  %v3099 = vand.u32 %v3098, 4294901760
  %3100 = vmatpush.msra.mxu0 %v3099
  %v3101 = vand.u32 %v746, 4294901760
  %v3102 = vsub.f32 %v746, %v3101
  %v3103 = vand.u32 %v3102, 4294901760
  %v3104 = vsub.f32 %v3102, %v3103
  %v3105 = vand.u32 %v3104, 4294901760
  %3106 = vmatpush.msra.mxu0 %v3105
  %v3107 = vand.u32 %v745, 4294901760
  %v3108 = vsub.f32 %v745, %v3107
  %v3109 = vand.u32 %v3108, 4294901760
  %v3110 = vsub.f32 %v3108, %v3109
  %v3111 = vand.u32 %v3110, 4294901760
  %3112 = vmatpush.msra.mxu0 %v3111
  %v3113 = vand.u32 %v744, 4294901760
  %v3114 = vsub.f32 %v744, %v3113
  %v3115 = vand.u32 %v3114, 4294901760
  %v3116 = vsub.f32 %v3114, %v3115
  %v3117 = vand.u32 %v3116, 4294901760
  %3118 = vmatpush.msra.mxu0 %v3117
  %v3119 = vand.u32 %v743, 4294901760
  %v3120 = vsub.f32 %v743, %v3119
  %v3121 = vand.u32 %v3120, 4294901760
  %v3122 = vsub.f32 %v3120, %v3121
  %v3123 = vand.u32 %v3122, 4294901760
  %3124 = vmatpush.msra.mxu0 %v3123
  %v3125 = vand.u32 %v742, 4294901760
  %v3126 = vsub.f32 %v742, %v3125
  %v3127 = vand.u32 %v3126, 4294901760
  %v3128 = vsub.f32 %v3126, %v3127
  %v3129 = vand.u32 %v3128, 4294901760
  %3130 = vmatpush.msra.mxu0 %v3129
  %v3131 = vand.u32 %v741, 4294901760
  %v3132 = vsub.f32 %v741, %v3131
  %v3133 = vand.u32 %v3132, 4294901760
  %v3134 = vsub.f32 %v3132, %v3133
  %v3135 = vand.u32 %v3134, 4294901760
  %3136 = vmatpush.msra.mxu0 %v3135
  %v3137 = vand.u32 %v740, 4294901760
  %v3138 = vsub.f32 %v740, %v3137
  %v3139 = vand.u32 %v3138, 4294901760
  %v3140 = vsub.f32 %v3138, %v3139
  %v3141 = vand.u32 %v3140, 4294901760
  %3142 = vmatpush.msra.mxu0 %v3141
  %v3143 = vand.u32 %v739, 4294901760
  %v3144 = vsub.f32 %v739, %v3143
  %v3145 = vand.u32 %v3144, 4294901760
  %v3146 = vsub.f32 %v3144, %v3145
  %v3147 = vand.u32 %v3146, 4294901760
  %3148 = vmatpush.msra.mxu0 %v3147
  %v3149 = vand.u32 %v738, 4294901760
  %v3150 = vsub.f32 %v738, %v3149
  %v3151 = vand.u32 %v3150, 4294901760
  %v3152 = vsub.f32 %v3150, %v3151
  %v3153 = vand.u32 %v3152, 4294901760
  %3154 = vmatpush.msra.mxu0 %v3153
  %v3155 = vand.u32 %v2650, 4294901760
  %3156 = vmatmul.f32.gmra.mxu0 %v3155
  %v3157 = vpop.f32.mrf.mxu0
  %v3158 = vadd.f32 %v3057, %v3157
  %3159 = vdwg.mxu0
  %v3160 = vand.u32 %v753, 4294901760
  %v3161 = vsub.f32 %v753, %v3160
  %3162 = vmatpush.msra.mxu0 %v3161
  %v3163 = vand.u32 %v752, 4294901760
  %v3164 = vsub.f32 %v752, %v3163
  %3165 = vmatpush.msra.mxu0 %v3164
  %v3166 = vand.u32 %v751, 4294901760
  %v3167 = vsub.f32 %v751, %v3166
  %3168 = vmatpush.msra.mxu0 %v3167
  %v3169 = vand.u32 %v750, 4294901760
  %v3170 = vsub.f32 %v750, %v3169
  %3171 = vmatpush.msra.mxu0 %v3170
  %v3172 = vand.u32 %v749, 4294901760
  %v3173 = vsub.f32 %v749, %v3172
  %3174 = vmatpush.msra.mxu0 %v3173
  %v3175 = vand.u32 %v748, 4294901760
  %v3176 = vsub.f32 %v748, %v3175
  %3177 = vmatpush.msra.mxu0 %v3176
  %v3178 = vand.u32 %v747, 4294901760
  %v3179 = vsub.f32 %v747, %v3178
  %3180 = vmatpush.msra.mxu0 %v3179
  %v3181 = vand.u32 %v746, 4294901760
  %v3182 = vsub.f32 %v746, %v3181
  %3183 = vmatpush.msra.mxu0 %v3182
  %v3184 = vand.u32 %v745, 4294901760
  %v3185 = vsub.f32 %v745, %v3184
  %3186 = vmatpush.msra.mxu0 %v3185
  %v3187 = vand.u32 %v744, 4294901760
  %v3188 = vsub.f32 %v744, %v3187
  %3189 = vmatpush.msra.mxu0 %v3188
  %v3190 = vand.u32 %v743, 4294901760
  %v3191 = vsub.f32 %v743, %v3190
  %3192 = vmatpush.msra.mxu0 %v3191
  %v3193 = vand.u32 %v742, 4294901760
  %v3194 = vsub.f32 %v742, %v3193
  %3195 = vmatpush.msra.mxu0 %v3194
  %v3196 = vand.u32 %v741, 4294901760
  %v3197 = vsub.f32 %v741, %v3196
  %3198 = vmatpush.msra.mxu0 %v3197
  %v3199 = vand.u32 %v740, 4294901760
  %v3200 = vsub.f32 %v740, %v3199
  %3201 = vmatpush.msra.mxu0 %v3200
  %v3202 = vand.u32 %v739, 4294901760
  %v3203 = vsub.f32 %v739, %v3202
  %3204 = vmatpush.msra.mxu0 %v3203
  %v3205 = vand.u32 %v738, 4294901760
  %v3206 = vsub.f32 %v738, %v3205
  %3207 = vmatpush.msra.mxu0 %v3206
  %v3208 = vand.u32 %v2650, 4294901760
  %v3209 = vsub.f32 %v2650, %v3208
  %3210 = vmatmul.f32.gmra.mxu0 %v3209
  %v3211 = vpop.f32.mrf.mxu0
  %v3212 = vadd.f32 %v3158, %v3211
  %3213 = vdwg.mxu0
  %v3214 = vand.u32 %v753, 4294901760
  %3215 = vmatpush.msra.mxu0 %v3214
  %v3216 = vand.u32 %v752, 4294901760
  %3217 = vmatpush.msra.mxu0 %v3216
  %v3218 = vand.u32 %v751, 4294901760
  %3219 = vmatpush.msra.mxu0 %v3218
  %v3220 = vand.u32 %v750, 4294901760
  %3221 = vmatpush.msra.mxu0 %v3220
  %v3222 = vand.u32 %v749, 4294901760
  %3223 = vmatpush.msra.mxu0 %v3222
  %v3224 = vand.u32 %v748, 4294901760
  %3225 = vmatpush.msra.mxu0 %v3224
  %v3226 = vand.u32 %v747, 4294901760
  %3227 = vmatpush.msra.mxu0 %v3226
  %v3228 = vand.u32 %v746, 4294901760
  %3229 = vmatpush.msra.mxu0 %v3228
  %v3230 = vand.u32 %v745, 4294901760
  %3231 = vmatpush.msra.mxu0 %v3230
  %v3232 = vand.u32 %v744, 4294901760
  %3233 = vmatpush.msra.mxu0 %v3232
  %v3234 = vand.u32 %v743, 4294901760
  %3235 = vmatpush.msra.mxu0 %v3234
  %v3236 = vand.u32 %v742, 4294901760
  %3237 = vmatpush.msra.mxu0 %v3236
  %v3238 = vand.u32 %v741, 4294901760
  %3239 = vmatpush.msra.mxu0 %v3238
  %v3240 = vand.u32 %v740, 4294901760
  %3241 = vmatpush.msra.mxu0 %v3240
  %v3242 = vand.u32 %v739, 4294901760
  %3243 = vmatpush.msra.mxu0 %v3242
  %v3244 = vand.u32 %v738, 4294901760
  %3245 = vmatpush.msra.mxu0 %v3244
  %v3246 = vand.u32 %v2650, 4294901760
  %v3247 = vsub.f32 %v2650, %v3246
  %v3248 = vand.u32 %v3247, 4294901760
  %3249 = vmatmul.f32.gmra.mxu0 %v3248
  %v3250 = vpop.f32.mrf.mxu0
  %v3251 = vadd.f32 %v3212, %v3250
  %3252 = vdwg.mxu0
  %v3253 = vand.u32 %v753, 4294901760
  %v3254 = vsub.f32 %v753, %v3253
  %v3255 = vand.u32 %v3254, 4294901760
  %3256 = vmatpush.msra.mxu0 %v3255
  %v3257 = vand.u32 %v752, 4294901760
  %v3258 = vsub.f32 %v752, %v3257
  %v3259 = vand.u32 %v3258, 4294901760
  %3260 = vmatpush.msra.mxu0 %v3259
  %v3261 = vand.u32 %v751, 4294901760
  %v3262 = vsub.f32 %v751, %v3261
  %v3263 = vand.u32 %v3262, 4294901760
  %3264 = vmatpush.msra.mxu0 %v3263
  %v3265 = vand.u32 %v750, 4294901760
  %v3266 = vsub.f32 %v750, %v3265
  %v3267 = vand.u32 %v3266, 4294901760
  %3268 = vmatpush.msra.mxu0 %v3267
  %v3269 = vand.u32 %v749, 4294901760
  %v3270 = vsub.f32 %v749, %v3269
  %v3271 = vand.u32 %v3270, 4294901760
  %3272 = vmatpush.msra.mxu0 %v3271
  %v3273 = vand.u32 %v748, 4294901760
  %v3274 = vsub.f32 %v748, %v3273
  %v3275 = vand.u32 %v3274, 4294901760
  %3276 = vmatpush.msra.mxu0 %v3275
  %v3277 = vand.u32 %v747, 4294901760
  %v3278 = vsub.f32 %v747, %v3277
  %v3279 = vand.u32 %v3278, 4294901760
  %3280 = vmatpush.msra.mxu0 %v3279
  %v3281 = vand.u32 %v746, 4294901760
  %v3282 = vsub.f32 %v746, %v3281
  %v3283 = vand.u32 %v3282, 4294901760
  %3284 = vmatpush.msra.mxu0 %v3283
  %v3285 = vand.u32 %v745, 4294901760
  %v3286 = vsub.f32 %v745, %v3285
  %v3287 = vand.u32 %v3286, 4294901760
  %3288 = vmatpush.msra.mxu0 %v3287
  %v3289 = vand.u32 %v744, 4294901760
  %v3290 = vsub.f32 %v744, %v3289
  %v3291 = vand.u32 %v3290, 4294901760
  %3292 = vmatpush.msra.mxu0 %v3291
  %v3293 = vand.u32 %v743, 4294901760
  %v3294 = vsub.f32 %v743, %v3293
  %v3295 = vand.u32 %v3294, 4294901760
  %3296 = vmatpush.msra.mxu0 %v3295
  %v3297 = vand.u32 %v742, 4294901760
  %v3298 = vsub.f32 %v742, %v3297
  %v3299 = vand.u32 %v3298, 4294901760
  %3300 = vmatpush.msra.mxu0 %v3299
  %v3301 = vand.u32 %v741, 4294901760
  %v3302 = vsub.f32 %v741, %v3301
  %v3303 = vand.u32 %v3302, 4294901760
  %3304 = vmatpush.msra.mxu0 %v3303
  %v3305 = vand.u32 %v740, 4294901760
  %v3306 = vsub.f32 %v740, %v3305
  %v3307 = vand.u32 %v3306, 4294901760
  %3308 = vmatpush.msra.mxu0 %v3307
  %v3309 = vand.u32 %v739, 4294901760
  %v3310 = vsub.f32 %v739, %v3309
  %v3311 = vand.u32 %v3310, 4294901760
  %3312 = vmatpush.msra.mxu0 %v3311
  %v3313 = vand.u32 %v738, 4294901760
  %v3314 = vsub.f32 %v738, %v3313
  %v3315 = vand.u32 %v3314, 4294901760
  %3316 = vmatpush.msra.mxu0 %v3315
  %v3317 = vand.u32 %v2650, 4294901760
  %3318 = vmatmul.f32.gmra.mxu0 %v3317
  %v3319 = vpop.f32.mrf.mxu0
  %v3320 = vadd.f32 %v3251, %v3319
  %3321 = vdwg.mxu0
  %v3322 = vand.u32 %v753, 4294901760
  %3323 = vmatpush.msra.mxu0 %v3322
  %v3324 = vand.u32 %v752, 4294901760
  %3325 = vmatpush.msra.mxu0 %v3324
  %v3326 = vand.u32 %v751, 4294901760
  %3327 = vmatpush.msra.mxu0 %v3326
  %v3328 = vand.u32 %v750, 4294901760
  %3329 = vmatpush.msra.mxu0 %v3328
  %v3330 = vand.u32 %v749, 4294901760
  %3331 = vmatpush.msra.mxu0 %v3330
  %v3332 = vand.u32 %v748, 4294901760
  %3333 = vmatpush.msra.mxu0 %v3332
  %v3334 = vand.u32 %v747, 4294901760
  %3335 = vmatpush.msra.mxu0 %v3334
  %v3336 = vand.u32 %v746, 4294901760
  %3337 = vmatpush.msra.mxu0 %v3336
  %v3338 = vand.u32 %v745, 4294901760
  %3339 = vmatpush.msra.mxu0 %v3338
  %v3340 = vand.u32 %v744, 4294901760
  %3341 = vmatpush.msra.mxu0 %v3340
  %v3342 = vand.u32 %v743, 4294901760
  %3343 = vmatpush.msra.mxu0 %v3342
  %v3344 = vand.u32 %v742, 4294901760
  %3345 = vmatpush.msra.mxu0 %v3344
  %v3346 = vand.u32 %v741, 4294901760
  %3347 = vmatpush.msra.mxu0 %v3346
  %v3348 = vand.u32 %v740, 4294901760
  %3349 = vmatpush.msra.mxu0 %v3348
  %v3350 = vand.u32 %v739, 4294901760
  %3351 = vmatpush.msra.mxu0 %v3350
  %v3352 = vand.u32 %v738, 4294901760
  %3353 = vmatpush.msra.mxu0 %v3352
  %v3354 = vand.u32 %v2650, 4294901760
  %3355 = vmatmul.f32.gmra.mxu0 %v3354
  %v3356 = vpop.f32.mrf.mxu0
  %v3357 = vadd.f32 %v3320, %v3356
  %3358 = vdwg.mxu0
  %v3359 = vmul.f32 %v3357, %v3014
  %3360 = vadd.xlane.f32.xlu0 %v3359
  %v3361 = vpop.xlane.xlu0 %3360
  %v3362 = vadd.f32 %v3017, %v3361
  %v3363 = vmul.f32 %v3006, %v3362
  %v3364 = vadd.f32 %v2643, %v3363
  %vm3365 = vcmp.gt.f32.partialorder %v3006, 0.0
  %v3366 = vsel %vm3365, 1, 0
  %3367 = vset.pattern.permute.xlu0 0
  %3368 = vperm.xlu0 %3367, %v3366
  %v3369 = vpop.permute.xlu0 %3368
  %vm3370 = vcmp.eq.s32.totalorder %v3369, 1
  %v3371 = vsel %vm3370, %v3014, %v2650
  %3372 = vmax.xlane.f32.xlu0 %v3002
  %v3373 = vpop.xlane.xlu0 %3372
  %v3374 = vsub.f32 %v3002, %v3373
  %v3375 = vmul.f32 %v3374, 1.442695
  %v3376 = vpow.pop %v3375
  %v3377 = vand.u32 %v822, 4294901760
  %3378 = vmatpush.msra.mxu0 %v3377
  %v3379 = vand.u32 %v820, 4294901760
  %3380 = vmatpush.msra.mxu0 %v3379
  %v3381 = vand.u32 %v818, 4294901760
  %3382 = vmatpush.msra.mxu0 %v3381
  %v3383 = vand.u32 %v816, 4294901760
  %3384 = vmatpush.msra.mxu0 %v3383
  %v3385 = vand.u32 %v814, 4294901760
  %3386 = vmatpush.msra.mxu0 %v3385
  %v3387 = vand.u32 %v812, 4294901760
  %3388 = vmatpush.msra.mxu0 %v3387
  %v3389 = vand.u32 %v810, 4294901760
  %3390 = vmatpush.msra.mxu0 %v3389
  %v3391 = vand.u32 %v808, 4294901760
  %3392 = vmatpush.msra.mxu0 %v3391
  %v3393 = vand.u32 %v806, 4294901760
  %3394 = vmatpush.msra.mxu0 %v3393
  %v3395 = vand.u32 %v804, 4294901760
  %3396 = vmatpush.msra.mxu0 %v3395
  %v3397 = vand.u32 %v802, 4294901760
  %3398 = vmatpush.msra.mxu0 %v3397
  %v3399 = vand.u32 %v800, 4294901760
  %3400 = vmatpush.msra.mxu0 %v3399
  %v3401 = vand.u32 %v798, 4294901760
  %3402 = vmatpush.msra.mxu0 %v3401
  %v3403 = vand.u32 %v796, 4294901760
  %3404 = vmatpush.msra.mxu0 %v3403
  %v3405 = vand.u32 %v794, 4294901760
  %3406 = vmatpush.msra.mxu0 %v3405
  %v3407 = vand.u32 %v792, 4294901760
  %3408 = vmatpush.msra.mxu0 %v3407
  %v3409 = vand.u32 %v3376, 4294901760
  %v3410 = vsub.f32 %v3376, %v3409
  %v3411 = vand.u32 %v3410, 4294901760
  %v3412 = vsub.f32 %v3410, %v3411
  %v3413 = vand.u32 %v3412, 4294901760
  %3414 = vmatmul.f32.gmra.mxu0 %v3413
  %v3415 = vpop.f32.mrf.mxu0
  %v3416 = vadd.f32 0.0, %v3415
  %3417 = vdwg.mxu0
  %v3418 = vand.u32 %v822, 4294901760
  %v3419 = vsub.f32 %v822, %v3418
  %v3420 = vand.u32 %v3419, 4294901760
  %v3421 = vsub.f32 %v3419, %v3420
  %v3422 = vand.u32 %v3421, 4294901760
  %3423 = vmatpush.msra.mxu0 %v3422
  %v3424 = vand.u32 %v820, 4294901760
  %v3425 = vsub.f32 %v820, %v3424
  %v3426 = vand.u32 %v3425, 4294901760
  %v3427 = vsub.f32 %v3425, %v3426
  %v3428 = vand.u32 %v3427, 4294901760
  %3429 = vmatpush.msra.mxu0 %v3428
  %v3430 = vand.u32 %v818, 4294901760
  %v3431 = vsub.f32 %v818, %v3430
  %v3432 = vand.u32 %v3431, 4294901760
  %v3433 = vsub.f32 %v3431, %v3432
  %v3434 = vand.u32 %v3433, 4294901760
  %3435 = vmatpush.msra.mxu0 %v3434
  %v3436 = vand.u32 %v816, 4294901760
  %v3437 = vsub.f32 %v816, %v3436
  %v3438 = vand.u32 %v3437, 4294901760
  %v3439 = vsub.f32 %v3437, %v3438
  %v3440 = vand.u32 %v3439, 4294901760
  %3441 = vmatpush.msra.mxu0 %v3440
  %v3442 = vand.u32 %v814, 4294901760
  %v3443 = vsub.f32 %v814, %v3442
  %v3444 = vand.u32 %v3443, 4294901760
  %v3445 = vsub.f32 %v3443, %v3444
  %v3446 = vand.u32 %v3445, 4294901760
  %3447 = vmatpush.msra.mxu0 %v3446
  %v3448 = vand.u32 %v812, 4294901760
  %v3449 = vsub.f32 %v812, %v3448
  %v3450 = vand.u32 %v3449, 4294901760
  %v3451 = vsub.f32 %v3449, %v3450
  %v3452 = vand.u32 %v3451, 4294901760
  %3453 = vmatpush.msra.mxu0 %v3452
  %v3454 = vand.u32 %v810, 4294901760
  %v3455 = vsub.f32 %v810, %v3454
  %v3456 = vand.u32 %v3455, 4294901760
  %v3457 = vsub.f32 %v3455, %v3456
  %v3458 = vand.u32 %v3457, 4294901760
  %3459 = vmatpush.msra.mxu0 %v3458
  %v3460 = vand.u32 %v808, 4294901760
  %v3461 = vsub.f32 %v808, %v3460
  %v3462 = vand.u32 %v3461, 4294901760
  %v3463 = vsub.f32 %v3461, %v3462
  %v3464 = vand.u32 %v3463, 4294901760
  %3465 = vmatpush.msra.mxu0 %v3464
  %v3466 = vand.u32 %v806, 4294901760
  %v3467 = vsub.f32 %v806, %v3466
  %v3468 = vand.u32 %v3467, 4294901760
  %v3469 = vsub.f32 %v3467, %v3468
  %v3470 = vand.u32 %v3469, 4294901760
  %3471 = vmatpush.msra.mxu0 %v3470
  %v3472 = vand.u32 %v804, 4294901760
  %v3473 = vsub.f32 %v804, %v3472
  %v3474 = vand.u32 %v3473, 4294901760
  %v3475 = vsub.f32 %v3473, %v3474
  %v3476 = vand.u32 %v3475, 4294901760
  %3477 = vmatpush.msra.mxu0 %v3476
  %v3478 = vand.u32 %v802, 4294901760
  %v3479 = vsub.f32 %v802, %v3478
  %v3480 = vand.u32 %v3479, 4294901760
  %v3481 = vsub.f32 %v3479, %v3480
  %v3482 = vand.u32 %v3481, 4294901760
  %3483 = vmatpush.msra.mxu0 %v3482
  %v3484 = vand.u32 %v800, 4294901760
  %v3485 = vsub.f32 %v800, %v3484
  %v3486 = vand.u32 %v3485, 4294901760
  %v3487 = vsub.f32 %v3485, %v3486
  %v3488 = vand.u32 %v3487, 4294901760
  %3489 = vmatpush.msra.mxu0 %v3488
  %v3490 = vand.u32 %v798, 4294901760
  %v3491 = vsub.f32 %v798, %v3490
  %v3492 = vand.u32 %v3491, 4294901760
  %v3493 = vsub.f32 %v3491, %v3492
  %v3494 = vand.u32 %v3493, 4294901760
  %3495 = vmatpush.msra.mxu0 %v3494
  %v3496 = vand.u32 %v796, 4294901760
  %v3497 = vsub.f32 %v796, %v3496
  %v3498 = vand.u32 %v3497, 4294901760
  %v3499 = vsub.f32 %v3497, %v3498
  %v3500 = vand.u32 %v3499, 4294901760
  %3501 = vmatpush.msra.mxu0 %v3500
  %v3502 = vand.u32 %v794, 4294901760
  %v3503 = vsub.f32 %v794, %v3502
  %v3504 = vand.u32 %v3503, 4294901760
  %v3505 = vsub.f32 %v3503, %v3504
  %v3506 = vand.u32 %v3505, 4294901760
  %3507 = vmatpush.msra.mxu0 %v3506
  %v3508 = vand.u32 %v792, 4294901760
  %v3509 = vsub.f32 %v792, %v3508
  %v3510 = vand.u32 %v3509, 4294901760
  %v3511 = vsub.f32 %v3509, %v3510
  %v3512 = vand.u32 %v3511, 4294901760
  %3513 = vmatpush.msra.mxu0 %v3512
  %v3514 = vand.u32 %v3376, 4294901760
  %3515 = vmatmul.f32.gmra.mxu0 %v3514
  %v3516 = vpop.f32.mrf.mxu0
  %v3517 = vadd.f32 %v3416, %v3516
  %3518 = vdwg.mxu0
  %v3519 = vand.u32 %v822, 4294901760
  %v3520 = vsub.f32 %v822, %v3519
  %3521 = vmatpush.msra.mxu0 %v3520
  %v3522 = vand.u32 %v820, 4294901760
  %v3523 = vsub.f32 %v820, %v3522
  %3524 = vmatpush.msra.mxu0 %v3523
  %v3525 = vand.u32 %v818, 4294901760
  %v3526 = vsub.f32 %v818, %v3525
  %3527 = vmatpush.msra.mxu0 %v3526
  %v3528 = vand.u32 %v816, 4294901760
  %v3529 = vsub.f32 %v816, %v3528
  %3530 = vmatpush.msra.mxu0 %v3529
  %v3531 = vand.u32 %v814, 4294901760
  %v3532 = vsub.f32 %v814, %v3531
  %3533 = vmatpush.msra.mxu0 %v3532
  %v3534 = vand.u32 %v812, 4294901760
  %v3535 = vsub.f32 %v812, %v3534
  %3536 = vmatpush.msra.mxu0 %v3535
  %v3537 = vand.u32 %v810, 4294901760
  %v3538 = vsub.f32 %v810, %v3537
  %3539 = vmatpush.msra.mxu0 %v3538
  %v3540 = vand.u32 %v808, 4294901760
  %v3541 = vsub.f32 %v808, %v3540
  %3542 = vmatpush.msra.mxu0 %v3541
  %v3543 = vand.u32 %v806, 4294901760
  %v3544 = vsub.f32 %v806, %v3543
  %3545 = vmatpush.msra.mxu0 %v3544
  %v3546 = vand.u32 %v804, 4294901760
  %v3547 = vsub.f32 %v804, %v3546
  %3548 = vmatpush.msra.mxu0 %v3547
  %v3549 = vand.u32 %v802, 4294901760
  %v3550 = vsub.f32 %v802, %v3549
  %3551 = vmatpush.msra.mxu0 %v3550
  %v3552 = vand.u32 %v800, 4294901760
  %v3553 = vsub.f32 %v800, %v3552
  %3554 = vmatpush.msra.mxu0 %v3553
  %v3555 = vand.u32 %v798, 4294901760
  %v3556 = vsub.f32 %v798, %v3555
  %3557 = vmatpush.msra.mxu0 %v3556
  %v3558 = vand.u32 %v796, 4294901760
  %v3559 = vsub.f32 %v796, %v3558
  %3560 = vmatpush.msra.mxu0 %v3559
  %v3561 = vand.u32 %v794, 4294901760
  %v3562 = vsub.f32 %v794, %v3561
  %3563 = vmatpush.msra.mxu0 %v3562
  %v3564 = vand.u32 %v792, 4294901760
  %v3565 = vsub.f32 %v792, %v3564
  %3566 = vmatpush.msra.mxu0 %v3565
  %v3567 = vand.u32 %v3376, 4294901760
  %v3568 = vsub.f32 %v3376, %v3567
  %3569 = vmatmul.f32.gmra.mxu0 %v3568
  %v3570 = vpop.f32.mrf.mxu0
  %v3571 = vadd.f32 %v3517, %v3570
  %3572 = vdwg.mxu0
  %v3573 = vand.u32 %v822, 4294901760
  %3574 = vmatpush.msra.mxu0 %v3573
  %v3575 = vand.u32 %v820, 4294901760
  %3576 = vmatpush.msra.mxu0 %v3575
  %v3577 = vand.u32 %v818, 4294901760
  %3578 = vmatpush.msra.mxu0 %v3577
  %v3579 = vand.u32 %v816, 4294901760
  %3580 = vmatpush.msra.mxu0 %v3579
  %v3581 = vand.u32 %v814, 4294901760
  %3582 = vmatpush.msra.mxu0 %v3581
  %v3583 = vand.u32 %v812, 4294901760
  %3584 = vmatpush.msra.mxu0 %v3583
  %v3585 = vand.u32 %v810, 4294901760
  %3586 = vmatpush.msra.mxu0 %v3585
  %v3587 = vand.u32 %v808, 4294901760
  %3588 = vmatpush.msra.mxu0 %v3587
  %v3589 = vand.u32 %v806, 4294901760
  %3590 = vmatpush.msra.mxu0 %v3589
  %v3591 = vand.u32 %v804, 4294901760
  %3592 = vmatpush.msra.mxu0 %v3591
  %v3593 = vand.u32 %v802, 4294901760
  %3594 = vmatpush.msra.mxu0 %v3593
  %v3595 = vand.u32 %v800, 4294901760
  %3596 = vmatpush.msra.mxu0 %v3595
  %v3597 = vand.u32 %v798, 4294901760
  %3598 = vmatpush.msra.mxu0 %v3597
  %v3599 = vand.u32 %v796, 4294901760
  %3600 = vmatpush.msra.mxu0 %v3599
  %v3601 = vand.u32 %v794, 4294901760
  %3602 = vmatpush.msra.mxu0 %v3601
  %v3603 = vand.u32 %v792, 4294901760
  %3604 = vmatpush.msra.mxu0 %v3603
  %v3605 = vand.u32 %v3376, 4294901760
  %v3606 = vsub.f32 %v3376, %v3605
  %v3607 = vand.u32 %v3606, 4294901760
  %3608 = vmatmul.f32.gmra.mxu0 %v3607
  %v3609 = vpop.f32.mrf.mxu0
  %v3610 = vadd.f32 %v3571, %v3609
  %3611 = vdwg.mxu0
  %v3612 = vand.u32 %v822, 4294901760
  %v3613 = vsub.f32 %v822, %v3612
  %v3614 = vand.u32 %v3613, 4294901760
  %3615 = vmatpush.msra.mxu0 %v3614
  %v3616 = vand.u32 %v820, 4294901760
  %v3617 = vsub.f32 %v820, %v3616
  %v3618 = vand.u32 %v3617, 4294901760
  %3619 = vmatpush.msra.mxu0 %v3618
  %v3620 = vand.u32 %v818, 4294901760
  %v3621 = vsub.f32 %v818, %v3620
  %v3622 = vand.u32 %v3621, 4294901760
  %3623 = vmatpush.msra.mxu0 %v3622
  %v3624 = vand.u32 %v816, 4294901760
  %v3625 = vsub.f32 %v816, %v3624
  %v3626 = vand.u32 %v3625, 4294901760
  %3627 = vmatpush.msra.mxu0 %v3626
  %v3628 = vand.u32 %v814, 4294901760
  %v3629 = vsub.f32 %v814, %v3628
  %v3630 = vand.u32 %v3629, 4294901760
  %3631 = vmatpush.msra.mxu0 %v3630
  %v3632 = vand.u32 %v812, 4294901760
  %v3633 = vsub.f32 %v812, %v3632
  %v3634 = vand.u32 %v3633, 4294901760
  %3635 = vmatpush.msra.mxu0 %v3634
  %v3636 = vand.u32 %v810, 4294901760
  %v3637 = vsub.f32 %v810, %v3636
  %v3638 = vand.u32 %v3637, 4294901760
  %3639 = vmatpush.msra.mxu0 %v3638
  %v3640 = vand.u32 %v808, 4294901760
  %v3641 = vsub.f32 %v808, %v3640
  %v3642 = vand.u32 %v3641, 4294901760
  %3643 = vmatpush.msra.mxu0 %v3642
  %v3644 = vand.u32 %v806, 4294901760
  %v3645 = vsub.f32 %v806, %v3644
  %v3646 = vand.u32 %v3645, 4294901760
  %3647 = vmatpush.msra.mxu0 %v3646
  %v3648 = vand.u32 %v804, 4294901760
  %v3649 = vsub.f32 %v804, %v3648
  %v3650 = vand.u32 %v3649, 4294901760
  %3651 = vmatpush.msra.mxu0 %v3650
  %v3652 = vand.u32 %v802, 4294901760
  %v3653 = vsub.f32 %v802, %v3652
  %v3654 = vand.u32 %v3653, 4294901760
  %3655 = vmatpush.msra.mxu0 %v3654
  %v3656 = vand.u32 %v800, 4294901760
  %v3657 = vsub.f32 %v800, %v3656
  %v3658 = vand.u32 %v3657, 4294901760
  %3659 = vmatpush.msra.mxu0 %v3658
  %v3660 = vand.u32 %v798, 4294901760
  %v3661 = vsub.f32 %v798, %v3660
  %v3662 = vand.u32 %v3661, 4294901760
  %3663 = vmatpush.msra.mxu0 %v3662
  %v3664 = vand.u32 %v796, 4294901760
  %v3665 = vsub.f32 %v796, %v3664
  %v3666 = vand.u32 %v3665, 4294901760
  %3667 = vmatpush.msra.mxu0 %v3666
  %v3668 = vand.u32 %v794, 4294901760
  %v3669 = vsub.f32 %v794, %v3668
  %v3670 = vand.u32 %v3669, 4294901760
  %3671 = vmatpush.msra.mxu0 %v3670
  %v3672 = vand.u32 %v792, 4294901760
  %v3673 = vsub.f32 %v792, %v3672
  %v3674 = vand.u32 %v3673, 4294901760
  %3675 = vmatpush.msra.mxu0 %v3674
  %v3676 = vand.u32 %v3376, 4294901760
  %3677 = vmatmul.f32.gmra.mxu0 %v3676
  %v3678 = vpop.f32.mrf.mxu0
  %v3679 = vadd.f32 %v3610, %v3678
  %3680 = vdwg.mxu0
  %v3681 = vand.u32 %v822, 4294901760
  %3682 = vmatpush.msra.mxu0 %v3681
  %v3683 = vand.u32 %v820, 4294901760
  %3684 = vmatpush.msra.mxu0 %v3683
  %v3685 = vand.u32 %v818, 4294901760
  %3686 = vmatpush.msra.mxu0 %v3685
  %v3687 = vand.u32 %v816, 4294901760
  %3688 = vmatpush.msra.mxu0 %v3687
  %v3689 = vand.u32 %v814, 4294901760
  %3690 = vmatpush.msra.mxu0 %v3689
  %v3691 = vand.u32 %v812, 4294901760
  %3692 = vmatpush.msra.mxu0 %v3691
  %v3693 = vand.u32 %v810, 4294901760
  %3694 = vmatpush.msra.mxu0 %v3693
  %v3695 = vand.u32 %v808, 4294901760
  %3696 = vmatpush.msra.mxu0 %v3695
  %v3697 = vand.u32 %v806, 4294901760
  %3698 = vmatpush.msra.mxu0 %v3697
  %v3699 = vand.u32 %v804, 4294901760
  %3700 = vmatpush.msra.mxu0 %v3699
  %v3701 = vand.u32 %v802, 4294901760
  %3702 = vmatpush.msra.mxu0 %v3701
  %v3703 = vand.u32 %v800, 4294901760
  %3704 = vmatpush.msra.mxu0 %v3703
  %v3705 = vand.u32 %v798, 4294901760
  %3706 = vmatpush.msra.mxu0 %v3705
  %v3707 = vand.u32 %v796, 4294901760
  %3708 = vmatpush.msra.mxu0 %v3707
  %v3709 = vand.u32 %v794, 4294901760
  %3710 = vmatpush.msra.mxu0 %v3709
  %v3711 = vand.u32 %v792, 4294901760
  %3712 = vmatpush.msra.mxu0 %v3711
  %v3713 = vand.u32 %v3376, 4294901760
  %3714 = vmatmul.f32.gmra.mxu0 %v3713
  %v3715 = vpop.f32.mrf.mxu0
  %v3716 = vadd.f32 %v3679, %v3715
  %3717 = vdwg.mxu0
  %v3718 = vlog2.pop %v3716
  %v3719 = vmul.f32 %v3718, 0.6931472
  %v3720 = vadd.f32 %v3719, %v3373
  %v3721 = vadd.f32 %v3720, %v774
  %v3722 = vadd.f32 %v3721, %v3004
  %v3723 = vsel %vm3370, %v3722, %v3002
  %s3724 = scalar_lea.vmem [#allocation2], 40
  %v3725 = vld [vmem:[%s3724] sm:$0xff]
  %s3726 = scalar_lea.vmem %s2, 40
  %v3727 = vld [vmem:[%s3726] sm:$0xff]
  %s3728 = scalar_lea.vmem %s1, 40
  %v3729 = vld [vmem:[%s3728] sm:$0xff]
  %3730 = vset.pattern.permute.xlu0 0
  %3731 = vperm.xlu0 %3730, %v3729
  %v3732 = vpop.permute.xlu0 %3731
  %vm3733 = vcmp.eq.s32.totalorder %v824, %v3732
  %v3734 = vsel %vm3733, 1, 0
  %v3735 = vcvt.s32.f32 %v3734
  %v3736 = vmul.f32 %v3725, %v3735
  %3737 = vadd.xlane.f32.xlu0 %v3736
  %v3738 = vpop.xlane.xlu0 %3737
  %v3739 = vand.u32 %v753, 4294901760
  %3740 = vmatpush.msra.mxu0 %v3739
  %v3741 = vand.u32 %v752, 4294901760
  %3742 = vmatpush.msra.mxu0 %v3741
  %v3743 = vand.u32 %v751, 4294901760
  %3744 = vmatpush.msra.mxu0 %v3743
  %v3745 = vand.u32 %v750, 4294901760
  %3746 = vmatpush.msra.mxu0 %v3745
  %v3747 = vand.u32 %v749, 4294901760
  %3748 = vmatpush.msra.mxu0 %v3747
  %v3749 = vand.u32 %v748, 4294901760
  %3750 = vmatpush.msra.mxu0 %v3749
  %v3751 = vand.u32 %v747, 4294901760
  %3752 = vmatpush.msra.mxu0 %v3751
  %v3753 = vand.u32 %v746, 4294901760
  %3754 = vmatpush.msra.mxu0 %v3753
  %v3755 = vand.u32 %v745, 4294901760
  %3756 = vmatpush.msra.mxu0 %v3755
  %v3757 = vand.u32 %v744, 4294901760
  %3758 = vmatpush.msra.mxu0 %v3757
  %v3759 = vand.u32 %v743, 4294901760
  %3760 = vmatpush.msra.mxu0 %v3759
  %v3761 = vand.u32 %v742, 4294901760
  %3762 = vmatpush.msra.mxu0 %v3761
  %v3763 = vand.u32 %v741, 4294901760
  %3764 = vmatpush.msra.mxu0 %v3763
  %v3765 = vand.u32 %v740, 4294901760
  %3766 = vmatpush.msra.mxu0 %v3765
  %v3767 = vand.u32 %v739, 4294901760
  %3768 = vmatpush.msra.mxu0 %v3767
  %v3769 = vand.u32 %v738, 4294901760
  %3770 = vmatpush.msra.mxu0 %v3769
  %v3771 = vand.u32 %v3371, 4294901760
  %v3772 = vsub.f32 %v3371, %v3771
  %v3773 = vand.u32 %v3772, 4294901760
  %v3774 = vsub.f32 %v3772, %v3773
  %v3775 = vand.u32 %v3774, 4294901760
  %3776 = vmatmul.f32.gmra.mxu0 %v3775
  %v3777 = vpop.f32.mrf.mxu0
  %v3778 = vadd.f32 0.0, %v3777
  %3779 = vdwg.mxu0
  %v3780 = vand.u32 %v753, 4294901760
  %v3781 = vsub.f32 %v753, %v3780
  %v3782 = vand.u32 %v3781, 4294901760
  %v3783 = vsub.f32 %v3781, %v3782
  %v3784 = vand.u32 %v3783, 4294901760
  %3785 = vmatpush.msra.mxu0 %v3784
  %v3786 = vand.u32 %v752, 4294901760
  %v3787 = vsub.f32 %v752, %v3786
  %v3788 = vand.u32 %v3787, 4294901760
  %v3789 = vsub.f32 %v3787, %v3788
  %v3790 = vand.u32 %v3789, 4294901760
  %3791 = vmatpush.msra.mxu0 %v3790
  %v3792 = vand.u32 %v751, 4294901760
  %v3793 = vsub.f32 %v751, %v3792
  %v3794 = vand.u32 %v3793, 4294901760
  %v3795 = vsub.f32 %v3793, %v3794
  %v3796 = vand.u32 %v3795, 4294901760
  %3797 = vmatpush.msra.mxu0 %v3796
  %v3798 = vand.u32 %v750, 4294901760
  %v3799 = vsub.f32 %v750, %v3798
  %v3800 = vand.u32 %v3799, 4294901760
  %v3801 = vsub.f32 %v3799, %v3800
  %v3802 = vand.u32 %v3801, 4294901760
  %3803 = vmatpush.msra.mxu0 %v3802
  %v3804 = vand.u32 %v749, 4294901760
  %v3805 = vsub.f32 %v749, %v3804
  %v3806 = vand.u32 %v3805, 4294901760
  %v3807 = vsub.f32 %v3805, %v3806
  %v3808 = vand.u32 %v3807, 4294901760
  %3809 = vmatpush.msra.mxu0 %v3808
  %v3810 = vand.u32 %v748, 4294901760
  %v3811 = vsub.f32 %v748, %v3810
  %v3812 = vand.u32 %v3811, 4294901760
  %v3813 = vsub.f32 %v3811, %v3812
  %v3814 = vand.u32 %v3813, 4294901760
  %3815 = vmatpush.msra.mxu0 %v3814
  %v3816 = vand.u32 %v747, 4294901760
  %v3817 = vsub.f32 %v747, %v3816
  %v3818 = vand.u32 %v3817, 4294901760
  %v3819 = vsub.f32 %v3817, %v3818
  %v3820 = vand.u32 %v3819, 4294901760
  %3821 = vmatpush.msra.mxu0 %v3820
  %v3822 = vand.u32 %v746, 4294901760
  %v3823 = vsub.f32 %v746, %v3822
  %v3824 = vand.u32 %v3823, 4294901760
  %v3825 = vsub.f32 %v3823, %v3824
  %v3826 = vand.u32 %v3825, 4294901760
  %3827 = vmatpush.msra.mxu0 %v3826
  %v3828 = vand.u32 %v745, 4294901760
  %v3829 = vsub.f32 %v745, %v3828
  %v3830 = vand.u32 %v3829, 4294901760
  %v3831 = vsub.f32 %v3829, %v3830
  %v3832 = vand.u32 %v3831, 4294901760
  %3833 = vmatpush.msra.mxu0 %v3832
  %v3834 = vand.u32 %v744, 4294901760
  %v3835 = vsub.f32 %v744, %v3834
  %v3836 = vand.u32 %v3835, 4294901760
  %v3837 = vsub.f32 %v3835, %v3836
  %v3838 = vand.u32 %v3837, 4294901760
  %3839 = vmatpush.msra.mxu0 %v3838
  %v3840 = vand.u32 %v743, 4294901760
  %v3841 = vsub.f32 %v743, %v3840
  %v3842 = vand.u32 %v3841, 4294901760
  %v3843 = vsub.f32 %v3841, %v3842
  %v3844 = vand.u32 %v3843, 4294901760
  %3845 = vmatpush.msra.mxu0 %v3844
  %v3846 = vand.u32 %v742, 4294901760
  %v3847 = vsub.f32 %v742, %v3846
  %v3848 = vand.u32 %v3847, 4294901760
  %v3849 = vsub.f32 %v3847, %v3848
  %v3850 = vand.u32 %v3849, 4294901760
  %3851 = vmatpush.msra.mxu0 %v3850
  %v3852 = vand.u32 %v741, 4294901760
  %v3853 = vsub.f32 %v741, %v3852
  %v3854 = vand.u32 %v3853, 4294901760
  %v3855 = vsub.f32 %v3853, %v3854
  %v3856 = vand.u32 %v3855, 4294901760
  %3857 = vmatpush.msra.mxu0 %v3856
  %v3858 = vand.u32 %v740, 4294901760
  %v3859 = vsub.f32 %v740, %v3858
  %v3860 = vand.u32 %v3859, 4294901760
  %v3861 = vsub.f32 %v3859, %v3860
  %v3862 = vand.u32 %v3861, 4294901760
  %3863 = vmatpush.msra.mxu0 %v3862
  %v3864 = vand.u32 %v739, 4294901760
  %v3865 = vsub.f32 %v739, %v3864
  %v3866 = vand.u32 %v3865, 4294901760
  %v3867 = vsub.f32 %v3865, %v3866
  %v3868 = vand.u32 %v3867, 4294901760
  %3869 = vmatpush.msra.mxu0 %v3868
  %v3870 = vand.u32 %v738, 4294901760
  %v3871 = vsub.f32 %v738, %v3870
  %v3872 = vand.u32 %v3871, 4294901760
  %v3873 = vsub.f32 %v3871, %v3872
  %v3874 = vand.u32 %v3873, 4294901760
  %3875 = vmatpush.msra.mxu0 %v3874
  %v3876 = vand.u32 %v3371, 4294901760
  %3877 = vmatmul.f32.gmra.mxu0 %v3876
  %v3878 = vpop.f32.mrf.mxu0
  %v3879 = vadd.f32 %v3778, %v3878
  %3880 = vdwg.mxu0
  %v3881 = vand.u32 %v753, 4294901760
  %v3882 = vsub.f32 %v753, %v3881
  %3883 = vmatpush.msra.mxu0 %v3882
  %v3884 = vand.u32 %v752, 4294901760
  %v3885 = vsub.f32 %v752, %v3884
  %3886 = vmatpush.msra.mxu0 %v3885
  %v3887 = vand.u32 %v751, 4294901760
  %v3888 = vsub.f32 %v751, %v3887
  %3889 = vmatpush.msra.mxu0 %v3888
  %v3890 = vand.u32 %v750, 4294901760
  %v3891 = vsub.f32 %v750, %v3890
  %3892 = vmatpush.msra.mxu0 %v3891
  %v3893 = vand.u32 %v749, 4294901760
  %v3894 = vsub.f32 %v749, %v3893
  %3895 = vmatpush.msra.mxu0 %v3894
  %v3896 = vand.u32 %v748, 4294901760
  %v3897 = vsub.f32 %v748, %v3896
  %3898 = vmatpush.msra.mxu0 %v3897
  %v3899 = vand.u32 %v747, 4294901760
  %v3900 = vsub.f32 %v747, %v3899
  %3901 = vmatpush.msra.mxu0 %v3900
  %v3902 = vand.u32 %v746, 4294901760
  %v3903 = vsub.f32 %v746, %v3902
  %3904 = vmatpush.msra.mxu0 %v3903
  %v3905 = vand.u32 %v745, 4294901760
  %v3906 = vsub.f32 %v745, %v3905
  %3907 = vmatpush.msra.mxu0 %v3906
  %v3908 = vand.u32 %v744, 4294901760
  %v3909 = vsub.f32 %v744, %v3908
  %3910 = vmatpush.msra.mxu0 %v3909
  %v3911 = vand.u32 %v743, 4294901760
  %v3912 = vsub.f32 %v743, %v3911
  %3913 = vmatpush.msra.mxu0 %v3912
  %v3914 = vand.u32 %v742, 4294901760
  %v3915 = vsub.f32 %v742, %v3914
  %3916 = vmatpush.msra.mxu0 %v3915
  %v3917 = vand.u32 %v741, 4294901760
  %v3918 = vsub.f32 %v741, %v3917
  %3919 = vmatpush.msra.mxu0 %v3918
  %v3920 = vand.u32 %v740, 4294901760
  %v3921 = vsub.f32 %v740, %v3920
  %3922 = vmatpush.msra.mxu0 %v3921
  %v3923 = vand.u32 %v739, 4294901760
  %v3924 = vsub.f32 %v739, %v3923
  %3925 = vmatpush.msra.mxu0 %v3924
  %v3926 = vand.u32 %v738, 4294901760
  %v3927 = vsub.f32 %v738, %v3926
  %3928 = vmatpush.msra.mxu0 %v3927
  %v3929 = vand.u32 %v3371, 4294901760
  %v3930 = vsub.f32 %v3371, %v3929
  %3931 = vmatmul.f32.gmra.mxu0 %v3930
  %v3932 = vpop.f32.mrf.mxu0
  %v3933 = vadd.f32 %v3879, %v3932
  %3934 = vdwg.mxu0
  %v3935 = vand.u32 %v753, 4294901760
  %3936 = vmatpush.msra.mxu0 %v3935
  %v3937 = vand.u32 %v752, 4294901760
  %3938 = vmatpush.msra.mxu0 %v3937
  %v3939 = vand.u32 %v751, 4294901760
  %3940 = vmatpush.msra.mxu0 %v3939
  %v3941 = vand.u32 %v750, 4294901760
  %3942 = vmatpush.msra.mxu0 %v3941
  %v3943 = vand.u32 %v749, 4294901760
  %3944 = vmatpush.msra.mxu0 %v3943
  %v3945 = vand.u32 %v748, 4294901760
  %3946 = vmatpush.msra.mxu0 %v3945
  %v3947 = vand.u32 %v747, 4294901760
  %3948 = vmatpush.msra.mxu0 %v3947
  %v3949 = vand.u32 %v746, 4294901760
  %3950 = vmatpush.msra.mxu0 %v3949
  %v3951 = vand.u32 %v745, 4294901760
  %3952 = vmatpush.msra.mxu0 %v3951
  %v3953 = vand.u32 %v744, 4294901760
  %3954 = vmatpush.msra.mxu0 %v3953
  %v3955 = vand.u32 %v743, 4294901760
  %3956 = vmatpush.msra.mxu0 %v3955
  %v3957 = vand.u32 %v742, 4294901760
  %3958 = vmatpush.msra.mxu0 %v3957
  %v3959 = vand.u32 %v741, 4294901760
  %3960 = vmatpush.msra.mxu0 %v3959
  %v3961 = vand.u32 %v740, 4294901760
  %3962 = vmatpush.msra.mxu0 %v3961
  %v3963 = vand.u32 %v739, 4294901760
  %3964 = vmatpush.msra.mxu0 %v3963
  %v3965 = vand.u32 %v738, 4294901760
  %3966 = vmatpush.msra.mxu0 %v3965
  %v3967 = vand.u32 %v3371, 4294901760
  %v3968 = vsub.f32 %v3371, %v3967
  %v3969 = vand.u32 %v3968, 4294901760
  %3970 = vmatmul.f32.gmra.mxu0 %v3969
  %v3971 = vpop.f32.mrf.mxu0
  %v3972 = vadd.f32 %v3933, %v3971
  %3973 = vdwg.mxu0
  %v3974 = vand.u32 %v753, 4294901760
  %v3975 = vsub.f32 %v753, %v3974
  %v3976 = vand.u32 %v3975, 4294901760
  %3977 = vmatpush.msra.mxu0 %v3976
  %v3978 = vand.u32 %v752, 4294901760
  %v3979 = vsub.f32 %v752, %v3978
  %v3980 = vand.u32 %v3979, 4294901760
  %3981 = vmatpush.msra.mxu0 %v3980
  %v3982 = vand.u32 %v751, 4294901760
  %v3983 = vsub.f32 %v751, %v3982
  %v3984 = vand.u32 %v3983, 4294901760
  %3985 = vmatpush.msra.mxu0 %v3984
  %v3986 = vand.u32 %v750, 4294901760
  %v3987 = vsub.f32 %v750, %v3986
  %v3988 = vand.u32 %v3987, 4294901760
  %3989 = vmatpush.msra.mxu0 %v3988
  %v3990 = vand.u32 %v749, 4294901760
  %v3991 = vsub.f32 %v749, %v3990
  %v3992 = vand.u32 %v3991, 4294901760
  %3993 = vmatpush.msra.mxu0 %v3992
  %v3994 = vand.u32 %v748, 4294901760
  %v3995 = vsub.f32 %v748, %v3994
  %v3996 = vand.u32 %v3995, 4294901760
  %3997 = vmatpush.msra.mxu0 %v3996
  %v3998 = vand.u32 %v747, 4294901760
  %v3999 = vsub.f32 %v747, %v3998
  %v4000 = vand.u32 %v3999, 4294901760
  %4001 = vmatpush.msra.mxu0 %v4000
  %v4002 = vand.u32 %v746, 4294901760
  %v4003 = vsub.f32 %v746, %v4002
  %v4004 = vand.u32 %v4003, 4294901760
  %4005 = vmatpush.msra.mxu0 %v4004
  %v4006 = vand.u32 %v745, 4294901760
  %v4007 = vsub.f32 %v745, %v4006
  %v4008 = vand.u32 %v4007, 4294901760
  %4009 = vmatpush.msra.mxu0 %v4008
  %v4010 = vand.u32 %v744, 4294901760
  %v4011 = vsub.f32 %v744, %v4010
  %v4012 = vand.u32 %v4011, 4294901760
  %4013 = vmatpush.msra.mxu0 %v4012
  %v4014 = vand.u32 %v743, 4294901760
  %v4015 = vsub.f32 %v743, %v4014
  %v4016 = vand.u32 %v4015, 4294901760
  %4017 = vmatpush.msra.mxu0 %v4016
  %v4018 = vand.u32 %v742, 4294901760
  %v4019 = vsub.f32 %v742, %v4018
  %v4020 = vand.u32 %v4019, 4294901760
  %4021 = vmatpush.msra.mxu0 %v4020
  %v4022 = vand.u32 %v741, 4294901760
  %v4023 = vsub.f32 %v741, %v4022
  %v4024 = vand.u32 %v4023, 4294901760
  %4025 = vmatpush.msra.mxu0 %v4024
  %v4026 = vand.u32 %v740, 4294901760
  %v4027 = vsub.f32 %v740, %v4026
  %v4028 = vand.u32 %v4027, 4294901760
  %4029 = vmatpush.msra.mxu0 %v4028
  %v4030 = vand.u32 %v739, 4294901760
  %v4031 = vsub.f32 %v739, %v4030
  %v4032 = vand.u32 %v4031, 4294901760
  %4033 = vmatpush.msra.mxu0 %v4032
  %v4034 = vand.u32 %v738, 4294901760
  %v4035 = vsub.f32 %v738, %v4034
  %v4036 = vand.u32 %v4035, 4294901760
  %4037 = vmatpush.msra.mxu0 %v4036
  %v4038 = vand.u32 %v3371, 4294901760
  %4039 = vmatmul.f32.gmra.mxu0 %v4038
  %v4040 = vpop.f32.mrf.mxu0
  %v4041 = vadd.f32 %v3972, %v4040
  %4042 = vdwg.mxu0
  %v4043 = vand.u32 %v753, 4294901760
  %4044 = vmatpush.msra.mxu0 %v4043
  %v4045 = vand.u32 %v752, 4294901760
  %4046 = vmatpush.msra.mxu0 %v4045
  %v4047 = vand.u32 %v751, 4294901760
  %4048 = vmatpush.msra.mxu0 %v4047
  %v4049 = vand.u32 %v750, 4294901760
  %4050 = vmatpush.msra.mxu0 %v4049
  %v4051 = vand.u32 %v749, 4294901760
  %4052 = vmatpush.msra.mxu0 %v4051
  %v4053 = vand.u32 %v748, 4294901760
  %4054 = vmatpush.msra.mxu0 %v4053
  %v4055 = vand.u32 %v747, 4294901760
  %4056 = vmatpush.msra.mxu0 %v4055
  %v4057 = vand.u32 %v746, 4294901760
  %4058 = vmatpush.msra.mxu0 %v4057
  %v4059 = vand.u32 %v745, 4294901760
  %4060 = vmatpush.msra.mxu0 %v4059
  %v4061 = vand.u32 %v744, 4294901760
  %4062 = vmatpush.msra.mxu0 %v4061
  %v4063 = vand.u32 %v743, 4294901760
  %4064 = vmatpush.msra.mxu0 %v4063
  %v4065 = vand.u32 %v742, 4294901760
  %4066 = vmatpush.msra.mxu0 %v4065
  %v4067 = vand.u32 %v741, 4294901760
  %4068 = vmatpush.msra.mxu0 %v4067
  %v4069 = vand.u32 %v740, 4294901760
  %4070 = vmatpush.msra.mxu0 %v4069
  %v4071 = vand.u32 %v739, 4294901760
  %4072 = vmatpush.msra.mxu0 %v4071
  %v4073 = vand.u32 %v738, 4294901760
  %4074 = vmatpush.msra.mxu0 %v4073
  %v4075 = vand.u32 %v3371, 4294901760
  %4076 = vmatmul.f32.gmra.mxu0 %v4075
  %v4077 = vpop.f32.mrf.mxu0
  %v4078 = vadd.f32 %v4041, %v4077
  %4079 = vdwg.mxu0
  %v4080 = vmul.f32 %v4078, %v3735
  %4081 = vadd.xlane.f32.xlu0 %v4080
  %v4082 = vpop.xlane.xlu0 %4081
  %v4083 = vadd.f32 %v3738, %v4082
  %v4084 = vmul.f32 %v3727, %v4083
  %v4085 = vadd.f32 %v3364, %v4084
  %vm4086 = vcmp.gt.f32.partialorder %v3727, 0.0
  %v4087 = vsel %vm4086, 1, 0
  %4088 = vset.pattern.permute.xlu0 0
  %4089 = vperm.xlu0 %4088, %v4087
  %v4090 = vpop.permute.xlu0 %4089
  %vm4091 = vcmp.eq.s32.totalorder %v4090, 1
  %v4092 = vsel %vm4091, %v3735, %v3371
  %4093 = vmax.xlane.f32.xlu0 %v3723
  %v4094 = vpop.xlane.xlu0 %4093
  %v4095 = vsub.f32 %v3723, %v4094
  %v4096 = vmul.f32 %v4095, 1.442695
  %v4097 = vpow.pop %v4096
  %v4098 = vand.u32 %v822, 4294901760
  %4099 = vmatpush.msra.mxu0 %v4098
  %v4100 = vand.u32 %v820, 4294901760
  %4101 = vmatpush.msra.mxu0 %v4100
  %v4102 = vand.u32 %v818, 4294901760
  %4103 = vmatpush.msra.mxu0 %v4102
  %v4104 = vand.u32 %v816, 4294901760
  %4105 = vmatpush.msra.mxu0 %v4104
  %v4106 = vand.u32 %v814, 4294901760
  %4107 = vmatpush.msra.mxu0 %v4106
  %v4108 = vand.u32 %v812, 4294901760
  %4109 = vmatpush.msra.mxu0 %v4108
  %v4110 = vand.u32 %v810, 4294901760
  %4111 = vmatpush.msra.mxu0 %v4110
  %v4112 = vand.u32 %v808, 4294901760
  %4113 = vmatpush.msra.mxu0 %v4112
  %v4114 = vand.u32 %v806, 4294901760
  %4115 = vmatpush.msra.mxu0 %v4114
  %v4116 = vand.u32 %v804, 4294901760
  %4117 = vmatpush.msra.mxu0 %v4116
  %v4118 = vand.u32 %v802, 4294901760
  %4119 = vmatpush.msra.mxu0 %v4118
  %v4120 = vand.u32 %v800, 4294901760
  %4121 = vmatpush.msra.mxu0 %v4120
  %v4122 = vand.u32 %v798, 4294901760
  %4123 = vmatpush.msra.mxu0 %v4122
  %v4124 = vand.u32 %v796, 4294901760
  %4125 = vmatpush.msra.mxu0 %v4124
  %v4126 = vand.u32 %v794, 4294901760
  %4127 = vmatpush.msra.mxu0 %v4126
  %v4128 = vand.u32 %v792, 4294901760
  %4129 = vmatpush.msra.mxu0 %v4128
  %v4130 = vand.u32 %v4097, 4294901760
  %v4131 = vsub.f32 %v4097, %v4130
  %v4132 = vand.u32 %v4131, 4294901760
  %v4133 = vsub.f32 %v4131, %v4132
  %v4134 = vand.u32 %v4133, 4294901760
  %4135 = vmatmul.f32.gmra.mxu0 %v4134
  %v4136 = vpop.f32.mrf.mxu0
  %v4137 = vadd.f32 0.0, %v4136
  %4138 = vdwg.mxu0
  %v4139 = vand.u32 %v822, 4294901760
  %v4140 = vsub.f32 %v822, %v4139
  %v4141 = vand.u32 %v4140, 4294901760
  %v4142 = vsub.f32 %v4140, %v4141
  %v4143 = vand.u32 %v4142, 4294901760
  %4144 = vmatpush.msra.mxu0 %v4143
  %v4145 = vand.u32 %v820, 4294901760
  %v4146 = vsub.f32 %v820, %v4145
  %v4147 = vand.u32 %v4146, 4294901760
  %v4148 = vsub.f32 %v4146, %v4147
  %v4149 = vand.u32 %v4148, 4294901760
  %4150 = vmatpush.msra.mxu0 %v4149
  %v4151 = vand.u32 %v818, 4294901760
  %v4152 = vsub.f32 %v818, %v4151
  %v4153 = vand.u32 %v4152, 4294901760
  %v4154 = vsub.f32 %v4152, %v4153
  %v4155 = vand.u32 %v4154, 4294901760
  %4156 = vmatpush.msra.mxu0 %v4155
  %v4157 = vand.u32 %v816, 4294901760
  %v4158 = vsub.f32 %v816, %v4157
  %v4159 = vand.u32 %v4158, 4294901760
  %v4160 = vsub.f32 %v4158, %v4159
  %v4161 = vand.u32 %v4160, 4294901760
  %4162 = vmatpush.msra.mxu0 %v4161
  %v4163 = vand.u32 %v814, 4294901760
  %v4164 = vsub.f32 %v814, %v4163
  %v4165 = vand.u32 %v4164, 4294901760
  %v4166 = vsub.f32 %v4164, %v4165
  %v4167 = vand.u32 %v4166, 4294901760
  %4168 = vmatpush.msra.mxu0 %v4167
  %v4169 = vand.u32 %v812, 4294901760
  %v4170 = vsub.f32 %v812, %v4169
  %v4171 = vand.u32 %v4170, 4294901760
  %v4172 = vsub.f32 %v4170, %v4171
  %v4173 = vand.u32 %v4172, 4294901760
  %4174 = vmatpush.msra.mxu0 %v4173
  %v4175 = vand.u32 %v810, 4294901760
  %v4176 = vsub.f32 %v810, %v4175
  %v4177 = vand.u32 %v4176, 4294901760
  %v4178 = vsub.f32 %v4176, %v4177
  %v4179 = vand.u32 %v4178, 4294901760
  %4180 = vmatpush.msra.mxu0 %v4179
  %v4181 = vand.u32 %v808, 4294901760
  %v4182 = vsub.f32 %v808, %v4181
  %v4183 = vand.u32 %v4182, 4294901760
  %v4184 = vsub.f32 %v4182, %v4183
  %v4185 = vand.u32 %v4184, 4294901760
  %4186 = vmatpush.msra.mxu0 %v4185
  %v4187 = vand.u32 %v806, 4294901760
  %v4188 = vsub.f32 %v806, %v4187
  %v4189 = vand.u32 %v4188, 4294901760
  %v4190 = vsub.f32 %v4188, %v4189
  %v4191 = vand.u32 %v4190, 4294901760
  %4192 = vmatpush.msra.mxu0 %v4191
  %v4193 = vand.u32 %v804, 4294901760
  %v4194 = vsub.f32 %v804, %v4193
  %v4195 = vand.u32 %v4194, 4294901760
  %v4196 = vsub.f32 %v4194, %v4195
  %v4197 = vand.u32 %v4196, 4294901760
  %4198 = vmatpush.msra.mxu0 %v4197
  %v4199 = vand.u32 %v802, 4294901760
  %v4200 = vsub.f32 %v802, %v4199
  %v4201 = vand.u32 %v4200, 4294901760
  %v4202 = vsub.f32 %v4200, %v4201
  %v4203 = vand.u32 %v4202, 4294901760
  %4204 = vmatpush.msra.mxu0 %v4203
  %v4205 = vand.u32 %v800, 4294901760
  %v4206 = vsub.f32 %v800, %v4205
  %v4207 = vand.u32 %v4206, 4294901760
  %v4208 = vsub.f32 %v4206, %v4207
  %v4209 = vand.u32 %v4208, 4294901760
  %4210 = vmatpush.msra.mxu0 %v4209
  %v4211 = vand.u32 %v798, 4294901760
  %v4212 = vsub.f32 %v798, %v4211
  %v4213 = vand.u32 %v4212, 4294901760
  %v4214 = vsub.f32 %v4212, %v4213
  %v4215 = vand.u32 %v4214, 4294901760
  %4216 = vmatpush.msra.mxu0 %v4215
  %v4217 = vand.u32 %v796, 4294901760
  %v4218 = vsub.f32 %v796, %v4217
  %v4219 = vand.u32 %v4218, 4294901760
  %v4220 = vsub.f32 %v4218, %v4219
  %v4221 = vand.u32 %v4220, 4294901760
  %4222 = vmatpush.msra.mxu0 %v4221
  %v4223 = vand.u32 %v794, 4294901760
  %v4224 = vsub.f32 %v794, %v4223
  %v4225 = vand.u32 %v4224, 4294901760
  %v4226 = vsub.f32 %v4224, %v4225
  %v4227 = vand.u32 %v4226, 4294901760
  %4228 = vmatpush.msra.mxu0 %v4227
  %v4229 = vand.u32 %v792, 4294901760
  %v4230 = vsub.f32 %v792, %v4229
  %v4231 = vand.u32 %v4230, 4294901760
  %v4232 = vsub.f32 %v4230, %v4231
  %v4233 = vand.u32 %v4232, 4294901760
  %4234 = vmatpush.msra.mxu0 %v4233
  %v4235 = vand.u32 %v4097, 4294901760
  %4236 = vmatmul.f32.gmra.mxu0 %v4235
  %v4237 = vpop.f32.mrf.mxu0
  %v4238 = vadd.f32 %v4137, %v4237
  %4239 = vdwg.mxu0
  %v4240 = vand.u32 %v822, 4294901760
  %v4241 = vsub.f32 %v822, %v4240
  %4242 = vmatpush.msra.mxu0 %v4241
  %v4243 = vand.u32 %v820, 4294901760
  %v4244 = vsub.f32 %v820, %v4243
  %4245 = vmatpush.msra.mxu0 %v4244
  %v4246 = vand.u32 %v818, 4294901760
  %v4247 = vsub.f32 %v818, %v4246
  %4248 = vmatpush.msra.mxu0 %v4247
  %v4249 = vand.u32 %v816, 4294901760
  %v4250 = vsub.f32 %v816, %v4249
  %4251 = vmatpush.msra.mxu0 %v4250
  %v4252 = vand.u32 %v814, 4294901760
  %v4253 = vsub.f32 %v814, %v4252
  %4254 = vmatpush.msra.mxu0 %v4253
  %v4255 = vand.u32 %v812, 4294901760
  %v4256 = vsub.f32 %v812, %v4255
  %4257 = vmatpush.msra.mxu0 %v4256
  %v4258 = vand.u32 %v810, 4294901760
  %v4259 = vsub.f32 %v810, %v4258
  %4260 = vmatpush.msra.mxu0 %v4259
  %v4261 = vand.u32 %v808, 4294901760
  %v4262 = vsub.f32 %v808, %v4261
  %4263 = vmatpush.msra.mxu0 %v4262
  %v4264 = vand.u32 %v806, 4294901760
  %v4265 = vsub.f32 %v806, %v4264
  %4266 = vmatpush.msra.mxu0 %v4265
  %v4267 = vand.u32 %v804, 4294901760
  %v4268 = vsub.f32 %v804, %v4267
  %4269 = vmatpush.msra.mxu0 %v4268
  %v4270 = vand.u32 %v802, 4294901760
  %v4271 = vsub.f32 %v802, %v4270
  %4272 = vmatpush.msra.mxu0 %v4271
  %v4273 = vand.u32 %v800, 4294901760
  %v4274 = vsub.f32 %v800, %v4273
  %4275 = vmatpush.msra.mxu0 %v4274
  %v4276 = vand.u32 %v798, 4294901760
  %v4277 = vsub.f32 %v798, %v4276
  %4278 = vmatpush.msra.mxu0 %v4277
  %v4279 = vand.u32 %v796, 4294901760
  %v4280 = vsub.f32 %v796, %v4279
  %4281 = vmatpush.msra.mxu0 %v4280
  %v4282 = vand.u32 %v794, 4294901760
  %v4283 = vsub.f32 %v794, %v4282
  %4284 = vmatpush.msra.mxu0 %v4283
  %v4285 = vand.u32 %v792, 4294901760
  %v4286 = vsub.f32 %v792, %v4285
  %4287 = vmatpush.msra.mxu0 %v4286
  %v4288 = vand.u32 %v4097, 4294901760
  %v4289 = vsub.f32 %v4097, %v4288
  %4290 = vmatmul.f32.gmra.mxu0 %v4289
  %v4291 = vpop.f32.mrf.mxu0
  %v4292 = vadd.f32 %v4238, %v4291
  %4293 = vdwg.mxu0
  %v4294 = vand.u32 %v822, 4294901760
  %4295 = vmatpush.msra.mxu0 %v4294
  %v4296 = vand.u32 %v820, 4294901760
  %4297 = vmatpush.msra.mxu0 %v4296
  %v4298 = vand.u32 %v818, 4294901760
  %4299 = vmatpush.msra.mxu0 %v4298
  %v4300 = vand.u32 %v816, 4294901760
  %4301 = vmatpush.msra.mxu0 %v4300
  %v4302 = vand.u32 %v814, 4294901760
  %4303 = vmatpush.msra.mxu0 %v4302
  %v4304 = vand.u32 %v812, 4294901760
  %4305 = vmatpush.msra.mxu0 %v4304
  %v4306 = vand.u32 %v810, 4294901760
  %4307 = vmatpush.msra.mxu0 %v4306
  %v4308 = vand.u32 %v808, 4294901760
  %4309 = vmatpush.msra.mxu0 %v4308
  %v4310 = vand.u32 %v806, 4294901760
  %4311 = vmatpush.msra.mxu0 %v4310
  %v4312 = vand.u32 %v804, 4294901760
  %4313 = vmatpush.msra.mxu0 %v4312
  %v4314 = vand.u32 %v802, 4294901760
  %4315 = vmatpush.msra.mxu0 %v4314
  %v4316 = vand.u32 %v800, 4294901760
  %4317 = vmatpush.msra.mxu0 %v4316
  %v4318 = vand.u32 %v798, 4294901760
  %4319 = vmatpush.msra.mxu0 %v4318
  %v4320 = vand.u32 %v796, 4294901760
  %4321 = vmatpush.msra.mxu0 %v4320
  %v4322 = vand.u32 %v794, 4294901760
  %4323 = vmatpush.msra.mxu0 %v4322
  %v4324 = vand.u32 %v792, 4294901760
  %4325 = vmatpush.msra.mxu0 %v4324
  %v4326 = vand.u32 %v4097, 4294901760
  %v4327 = vsub.f32 %v4097, %v4326
  %v4328 = vand.u32 %v4327, 4294901760
  %4329 = vmatmul.f32.gmra.mxu0 %v4328
  %v4330 = vpop.f32.mrf.mxu0
  %v4331 = vadd.f32 %v4292, %v4330
  %4332 = vdwg.mxu0
  %v4333 = vand.u32 %v822, 4294901760
  %v4334 = vsub.f32 %v822, %v4333
  %v4335 = vand.u32 %v4334, 4294901760
  %4336 = vmatpush.msra.mxu0 %v4335
  %v4337 = vand.u32 %v820, 4294901760
  %v4338 = vsub.f32 %v820, %v4337
  %v4339 = vand.u32 %v4338, 4294901760
  %4340 = vmatpush.msra.mxu0 %v4339
  %v4341 = vand.u32 %v818, 4294901760
  %v4342 = vsub.f32 %v818, %v4341
  %v4343 = vand.u32 %v4342, 4294901760
  %4344 = vmatpush.msra.mxu0 %v4343
  %v4345 = vand.u32 %v816, 4294901760
  %v4346 = vsub.f32 %v816, %v4345
  %v4347 = vand.u32 %v4346, 4294901760
  %4348 = vmatpush.msra.mxu0 %v4347
  %v4349 = vand.u32 %v814, 4294901760
  %v4350 = vsub.f32 %v814, %v4349
  %v4351 = vand.u32 %v4350, 4294901760
  %4352 = vmatpush.msra.mxu0 %v4351
  %v4353 = vand.u32 %v812, 4294901760
  %v4354 = vsub.f32 %v812, %v4353
  %v4355 = vand.u32 %v4354, 4294901760
  %4356 = vmatpush.msra.mxu0 %v4355
  %v4357 = vand.u32 %v810, 4294901760
  %v4358 = vsub.f32 %v810, %v4357
  %v4359 = vand.u32 %v4358, 4294901760
  %4360 = vmatpush.msra.mxu0 %v4359
  %v4361 = vand.u32 %v808, 4294901760
  %v4362 = vsub.f32 %v808, %v4361
  %v4363 = vand.u32 %v4362, 4294901760
  %4364 = vmatpush.msra.mxu0 %v4363
  %v4365 = vand.u32 %v806, 4294901760
  %v4366 = vsub.f32 %v806, %v4365
  %v4367 = vand.u32 %v4366, 4294901760
  %4368 = vmatpush.msra.mxu0 %v4367
  %v4369 = vand.u32 %v804, 4294901760
  %v4370 = vsub.f32 %v804, %v4369
  %v4371 = vand.u32 %v4370, 4294901760
  %4372 = vmatpush.msra.mxu0 %v4371
  %v4373 = vand.u32 %v802, 4294901760
  %v4374 = vsub.f32 %v802, %v4373
  %v4375 = vand.u32 %v4374, 4294901760
  %4376 = vmatpush.msra.mxu0 %v4375
  %v4377 = vand.u32 %v800, 4294901760
  %v4378 = vsub.f32 %v800, %v4377
  %v4379 = vand.u32 %v4378, 4294901760
  %4380 = vmatpush.msra.mxu0 %v4379
  %v4381 = vand.u32 %v798, 4294901760
  %v4382 = vsub.f32 %v798, %v4381
  %v4383 = vand.u32 %v4382, 4294901760
  %4384 = vmatpush.msra.mxu0 %v4383
  %v4385 = vand.u32 %v796, 4294901760
  %v4386 = vsub.f32 %v796, %v4385
  %v4387 = vand.u32 %v4386, 4294901760
  %4388 = vmatpush.msra.mxu0 %v4387
  %v4389 = vand.u32 %v794, 4294901760
  %v4390 = vsub.f32 %v794, %v4389
  %v4391 = vand.u32 %v4390, 4294901760
  %4392 = vmatpush.msra.mxu0 %v4391
  %v4393 = vand.u32 %v792, 4294901760
  %v4394 = vsub.f32 %v792, %v4393
  %v4395 = vand.u32 %v4394, 4294901760
  %4396 = vmatpush.msra.mxu0 %v4395
  %v4397 = vand.u32 %v4097, 4294901760
  %4398 = vmatmul.f32.gmra.mxu0 %v4397
  %v4399 = vpop.f32.mrf.mxu0
  %v4400 = vadd.f32 %v4331, %v4399
  %4401 = vdwg.mxu0
  %v4402 = vand.u32 %v822, 4294901760
  %4403 = vmatpush.msra.mxu0 %v4402
  %v4404 = vand.u32 %v820, 4294901760
  %4405 = vmatpush.msra.mxu0 %v4404
  %v4406 = vand.u32 %v818, 4294901760
  %4407 = vmatpush.msra.mxu0 %v4406
  %v4408 = vand.u32 %v816, 4294901760
  %4409 = vmatpush.msra.mxu0 %v4408
  %v4410 = vand.u32 %v814, 4294901760
  %4411 = vmatpush.msra.mxu0 %v4410
  %v4412 = vand.u32 %v812, 4294901760
  %4413 = vmatpush.msra.mxu0 %v4412
  %v4414 = vand.u32 %v810, 4294901760
  %4415 = vmatpush.msra.mxu0 %v4414
  %v4416 = vand.u32 %v808, 4294901760
  %4417 = vmatpush.msra.mxu0 %v4416
  %v4418 = vand.u32 %v806, 4294901760
  %4419 = vmatpush.msra.mxu0 %v4418
  %v4420 = vand.u32 %v804, 4294901760
  %4421 = vmatpush.msra.mxu0 %v4420
  %v4422 = vand.u32 %v802, 4294901760
  %4423 = vmatpush.msra.mxu0 %v4422
  %v4424 = vand.u32 %v800, 4294901760
  %4425 = vmatpush.msra.mxu0 %v4424
  %v4426 = vand.u32 %v798, 4294901760
  %4427 = vmatpush.msra.mxu0 %v4426
  %v4428 = vand.u32 %v796, 4294901760
  %4429 = vmatpush.msra.mxu0 %v4428
  %v4430 = vand.u32 %v794, 4294901760
  %4431 = vmatpush.msra.mxu0 %v4430
  %v4432 = vand.u32 %v792, 4294901760
  %4433 = vmatpush.msra.mxu0 %v4432
  %v4434 = vand.u32 %v4097, 4294901760
  %4435 = vmatmul.f32.gmra.mxu0 %v4434
  %v4436 = vpop.f32.mrf.mxu0
  %v4437 = vadd.f32 %v4400, %v4436
  %4438 = vdwg.mxu0
  %v4439 = vlog2.pop %v4437
  %v4440 = vmul.f32 %v4439, 0.6931472
  %v4441 = vadd.f32 %v4440, %v4094
  %v4442 = vadd.f32 %v4441, %v774
  %v4443 = vadd.f32 %v4442, %v3725
  %v4444 = vsel %vm4091, %v4443, %v3723
  %s4445 = scalar_lea.vmem [#allocation2], 48
  %v4446 = vld [vmem:[%s4445] sm:$0xff]
  %s4447 = scalar_lea.vmem %s2, 48
  %v4448 = vld [vmem:[%s4447] sm:$0xff]
  %s4449 = scalar_lea.vmem %s1, 48
  %v4450 = vld [vmem:[%s4449] sm:$0xff]
  %4451 = vset.pattern.permute.xlu0 0
  %4452 = vperm.xlu0 %4451, %v4450
  %v4453 = vpop.permute.xlu0 %4452
  %vm4454 = vcmp.eq.s32.totalorder %v824, %v4453
  %v4455 = vsel %vm4454, 1, 0
  %v4456 = vcvt.s32.f32 %v4455
  %v4457 = vmul.f32 %v4446, %v4456
  %4458 = vadd.xlane.f32.xlu0 %v4457
  %v4459 = vpop.xlane.xlu0 %4458
  %v4460 = vand.u32 %v753, 4294901760
  %4461 = vmatpush.msra.mxu0 %v4460
  %v4462 = vand.u32 %v752, 4294901760
  %4463 = vmatpush.msra.mxu0 %v4462
  %v4464 = vand.u32 %v751, 4294901760
  %4465 = vmatpush.msra.mxu0 %v4464
  %v4466 = vand.u32 %v750, 4294901760
  %4467 = vmatpush.msra.mxu0 %v4466
  %v4468 = vand.u32 %v749, 4294901760
  %4469 = vmatpush.msra.mxu0 %v4468
  %v4470 = vand.u32 %v748, 4294901760
  %4471 = vmatpush.msra.mxu0 %v4470
  %v4472 = vand.u32 %v747, 4294901760
  %4473 = vmatpush.msra.mxu0 %v4472
  %v4474 = vand.u32 %v746, 4294901760
  %4475 = vmatpush.msra.mxu0 %v4474
  %v4476 = vand.u32 %v745, 4294901760
  %4477 = vmatpush.msra.mxu0 %v4476
  %v4478 = vand.u32 %v744, 4294901760
  %4479 = vmatpush.msra.mxu0 %v4478
  %v4480 = vand.u32 %v743, 4294901760
  %4481 = vmatpush.msra.mxu0 %v4480
  %v4482 = vand.u32 %v742, 4294901760
  %4483 = vmatpush.msra.mxu0 %v4482
  %v4484 = vand.u32 %v741, 4294901760
  %4485 = vmatpush.msra.mxu0 %v4484
  %v4486 = vand.u32 %v740, 4294901760
  %4487 = vmatpush.msra.mxu0 %v4486
  %v4488 = vand.u32 %v739, 4294901760
  %4489 = vmatpush.msra.mxu0 %v4488
  %v4490 = vand.u32 %v738, 4294901760
  %4491 = vmatpush.msra.mxu0 %v4490
  %v4492 = vand.u32 %v4092, 4294901760
  %v4493 = vsub.f32 %v4092, %v4492
  %v4494 = vand.u32 %v4493, 4294901760
  %v4495 = vsub.f32 %v4493, %v4494
  %v4496 = vand.u32 %v4495, 4294901760
  %4497 = vmatmul.f32.gmra.mxu0 %v4496
  %v4498 = vpop.f32.mrf.mxu0
  %v4499 = vadd.f32 0.0, %v4498
  %4500 = vdwg.mxu0
  %v4501 = vand.u32 %v753, 4294901760
  %v4502 = vsub.f32 %v753, %v4501
  %v4503 = vand.u32 %v4502, 4294901760
  %v4504 = vsub.f32 %v4502, %v4503
  %v4505 = vand.u32 %v4504, 4294901760
  %4506 = vmatpush.msra.mxu0 %v4505
  %v4507 = vand.u32 %v752, 4294901760
  %v4508 = vsub.f32 %v752, %v4507
  %v4509 = vand.u32 %v4508, 4294901760
  %v4510 = vsub.f32 %v4508, %v4509
  %v4511 = vand.u32 %v4510, 4294901760
  %4512 = vmatpush.msra.mxu0 %v4511
  %v4513 = vand.u32 %v751, 4294901760
  %v4514 = vsub.f32 %v751, %v4513
  %v4515 = vand.u32 %v4514, 4294901760
  %v4516 = vsub.f32 %v4514, %v4515
  %v4517 = vand.u32 %v4516, 4294901760
  %4518 = vmatpush.msra.mxu0 %v4517
  %v4519 = vand.u32 %v750, 4294901760
  %v4520 = vsub.f32 %v750, %v4519
  %v4521 = vand.u32 %v4520, 4294901760
  %v4522 = vsub.f32 %v4520, %v4521
  %v4523 = vand.u32 %v4522, 4294901760
  %4524 = vmatpush.msra.mxu0 %v4523
  %v4525 = vand.u32 %v749, 4294901760
  %v4526 = vsub.f32 %v749, %v4525
  %v4527 = vand.u32 %v4526, 4294901760
  %v4528 = vsub.f32 %v4526, %v4527
  %v4529 = vand.u32 %v4528, 4294901760
  %4530 = vmatpush.msra.mxu0 %v4529
  %v4531 = vand.u32 %v748, 4294901760
  %v4532 = vsub.f32 %v748, %v4531
  %v4533 = vand.u32 %v4532, 4294901760
  %v4534 = vsub.f32 %v4532, %v4533
  %v4535 = vand.u32 %v4534, 4294901760
  %4536 = vmatpush.msra.mxu0 %v4535
  %v4537 = vand.u32 %v747, 4294901760
  %v4538 = vsub.f32 %v747, %v4537
  %v4539 = vand.u32 %v4538, 4294901760
  %v4540 = vsub.f32 %v4538, %v4539
  %v4541 = vand.u32 %v4540, 4294901760
  %4542 = vmatpush.msra.mxu0 %v4541
  %v4543 = vand.u32 %v746, 4294901760
  %v4544 = vsub.f32 %v746, %v4543
  %v4545 = vand.u32 %v4544, 4294901760
  %v4546 = vsub.f32 %v4544, %v4545
  %v4547 = vand.u32 %v4546, 4294901760
  %4548 = vmatpush.msra.mxu0 %v4547
  %v4549 = vand.u32 %v745, 4294901760
  %v4550 = vsub.f32 %v745, %v4549
  %v4551 = vand.u32 %v4550, 4294901760
  %v4552 = vsub.f32 %v4550, %v4551
  %v4553 = vand.u32 %v4552, 4294901760
  %4554 = vmatpush.msra.mxu0 %v4553
  %v4555 = vand.u32 %v744, 4294901760
  %v4556 = vsub.f32 %v744, %v4555
  %v4557 = vand.u32 %v4556, 4294901760
  %v4558 = vsub.f32 %v4556, %v4557
  %v4559 = vand.u32 %v4558, 4294901760
  %4560 = vmatpush.msra.mxu0 %v4559
  %v4561 = vand.u32 %v743, 4294901760
  %v4562 = vsub.f32 %v743, %v4561
  %v4563 = vand.u32 %v4562, 4294901760
  %v4564 = vsub.f32 %v4562, %v4563
  %v4565 = vand.u32 %v4564, 4294901760
  %4566 = vmatpush.msra.mxu0 %v4565
  %v4567 = vand.u32 %v742, 4294901760
  %v4568 = vsub.f32 %v742, %v4567
  %v4569 = vand.u32 %v4568, 4294901760
  %v4570 = vsub.f32 %v4568, %v4569
  %v4571 = vand.u32 %v4570, 4294901760
  %4572 = vmatpush.msra.mxu0 %v4571
  %v4573 = vand.u32 %v741, 4294901760
  %v4574 = vsub.f32 %v741, %v4573
  %v4575 = vand.u32 %v4574, 4294901760
  %v4576 = vsub.f32 %v4574, %v4575
  %v4577 = vand.u32 %v4576, 4294901760
  %4578 = vmatpush.msra.mxu0 %v4577
  %v4579 = vand.u32 %v740, 4294901760
  %v4580 = vsub.f32 %v740, %v4579
  %v4581 = vand.u32 %v4580, 4294901760
  %v4582 = vsub.f32 %v4580, %v4581
  %v4583 = vand.u32 %v4582, 4294901760
  %4584 = vmatpush.msra.mxu0 %v4583
  %v4585 = vand.u32 %v739, 4294901760
  %v4586 = vsub.f32 %v739, %v4585
  %v4587 = vand.u32 %v4586, 4294901760
  %v4588 = vsub.f32 %v4586, %v4587
  %v4589 = vand.u32 %v4588, 4294901760
  %4590 = vmatpush.msra.mxu0 %v4589
  %v4591 = vand.u32 %v738, 4294901760
  %v4592 = vsub.f32 %v738, %v4591
  %v4593 = vand.u32 %v4592, 4294901760
  %v4594 = vsub.f32 %v4592, %v4593
  %v4595 = vand.u32 %v4594, 4294901760
  %4596 = vmatpush.msra.mxu0 %v4595
  %v4597 = vand.u32 %v4092, 4294901760
  %4598 = vmatmul.f32.gmra.mxu0 %v4597
  %v4599 = vpop.f32.mrf.mxu0
  %v4600 = vadd.f32 %v4499, %v4599
  %4601 = vdwg.mxu0
  %v4602 = vand.u32 %v753, 4294901760
  %v4603 = vsub.f32 %v753, %v4602
  %4604 = vmatpush.msra.mxu0 %v4603
  %v4605 = vand.u32 %v752, 4294901760
  %v4606 = vsub.f32 %v752, %v4605
  %4607 = vmatpush.msra.mxu0 %v4606
  %v4608 = vand.u32 %v751, 4294901760
  %v4609 = vsub.f32 %v751, %v4608
  %4610 = vmatpush.msra.mxu0 %v4609
  %v4611 = vand.u32 %v750, 4294901760
  %v4612 = vsub.f32 %v750, %v4611
  %4613 = vmatpush.msra.mxu0 %v4612
  %v4614 = vand.u32 %v749, 4294901760
  %v4615 = vsub.f32 %v749, %v4614
  %4616 = vmatpush.msra.mxu0 %v4615
  %v4617 = vand.u32 %v748, 4294901760
  %v4618 = vsub.f32 %v748, %v4617
  %4619 = vmatpush.msra.mxu0 %v4618
  %v4620 = vand.u32 %v747, 4294901760
  %v4621 = vsub.f32 %v747, %v4620
  %4622 = vmatpush.msra.mxu0 %v4621
  %v4623 = vand.u32 %v746, 4294901760
  %v4624 = vsub.f32 %v746, %v4623
  %4625 = vmatpush.msra.mxu0 %v4624
  %v4626 = vand.u32 %v745, 4294901760
  %v4627 = vsub.f32 %v745, %v4626
  %4628 = vmatpush.msra.mxu0 %v4627
  %v4629 = vand.u32 %v744, 4294901760
  %v4630 = vsub.f32 %v744, %v4629
  %4631 = vmatpush.msra.mxu0 %v4630
  %v4632 = vand.u32 %v743, 4294901760
  %v4633 = vsub.f32 %v743, %v4632
  %4634 = vmatpush.msra.mxu0 %v4633
  %v4635 = vand.u32 %v742, 4294901760
  %v4636 = vsub.f32 %v742, %v4635
  %4637 = vmatpush.msra.mxu0 %v4636
  %v4638 = vand.u32 %v741, 4294901760
  %v4639 = vsub.f32 %v741, %v4638
  %4640 = vmatpush.msra.mxu0 %v4639
  %v4641 = vand.u32 %v740, 4294901760
  %v4642 = vsub.f32 %v740, %v4641
  %4643 = vmatpush.msra.mxu0 %v4642
  %v4644 = vand.u32 %v739, 4294901760
  %v4645 = vsub.f32 %v739, %v4644
  %4646 = vmatpush.msra.mxu0 %v4645
  %v4647 = vand.u32 %v738, 4294901760
  %v4648 = vsub.f32 %v738, %v4647
  %4649 = vmatpush.msra.mxu0 %v4648
  %v4650 = vand.u32 %v4092, 4294901760
  %v4651 = vsub.f32 %v4092, %v4650
  %4652 = vmatmul.f32.gmra.mxu0 %v4651
  %v4653 = vpop.f32.mrf.mxu0
  %v4654 = vadd.f32 %v4600, %v4653
  %4655 = vdwg.mxu0
  %v4656 = vand.u32 %v753, 4294901760
  %4657 = vmatpush.msra.mxu0 %v4656
  %v4658 = vand.u32 %v752, 4294901760
  %4659 = vmatpush.msra.mxu0 %v4658
  %v4660 = vand.u32 %v751, 4294901760
  %4661 = vmatpush.msra.mxu0 %v4660
  %v4662 = vand.u32 %v750, 4294901760
  %4663 = vmatpush.msra.mxu0 %v4662
  %v4664 = vand.u32 %v749, 4294901760
  %4665 = vmatpush.msra.mxu0 %v4664
  %v4666 = vand.u32 %v748, 4294901760
  %4667 = vmatpush.msra.mxu0 %v4666
  %v4668 = vand.u32 %v747, 4294901760
  %4669 = vmatpush.msra.mxu0 %v4668
  %v4670 = vand.u32 %v746, 4294901760
  %4671 = vmatpush.msra.mxu0 %v4670
  %v4672 = vand.u32 %v745, 4294901760
  %4673 = vmatpush.msra.mxu0 %v4672
  %v4674 = vand.u32 %v744, 4294901760
  %4675 = vmatpush.msra.mxu0 %v4674
  %v4676 = vand.u32 %v743, 4294901760
  %4677 = vmatpush.msra.mxu0 %v4676
  %v4678 = vand.u32 %v742, 4294901760
  %4679 = vmatpush.msra.mxu0 %v4678
  %v4680 = vand.u32 %v741, 4294901760
  %4681 = vmatpush.msra.mxu0 %v4680
  %v4682 = vand.u32 %v740, 4294901760
  %4683 = vmatpush.msra.mxu0 %v4682
  %v4684 = vand.u32 %v739, 4294901760
  %4685 = vmatpush.msra.mxu0 %v4684
  %v4686 = vand.u32 %v738, 4294901760
  %4687 = vmatpush.msra.mxu0 %v4686
  %v4688 = vand.u32 %v4092, 4294901760
  %v4689 = vsub.f32 %v4092, %v4688
  %v4690 = vand.u32 %v4689, 4294901760
  %4691 = vmatmul.f32.gmra.mxu0 %v4690
  %v4692 = vpop.f32.mrf.mxu0
  %v4693 = vadd.f32 %v4654, %v4692
  %4694 = vdwg.mxu0
  %v4695 = vand.u32 %v753, 4294901760
  %v4696 = vsub.f32 %v753, %v4695
  %v4697 = vand.u32 %v4696, 4294901760
  %4698 = vmatpush.msra.mxu0 %v4697
  %v4699 = vand.u32 %v752, 4294901760
  %v4700 = vsub.f32 %v752, %v4699
  %v4701 = vand.u32 %v4700, 4294901760
  %4702 = vmatpush.msra.mxu0 %v4701
  %v4703 = vand.u32 %v751, 4294901760
  %v4704 = vsub.f32 %v751, %v4703
  %v4705 = vand.u32 %v4704, 4294901760
  %4706 = vmatpush.msra.mxu0 %v4705
  %v4707 = vand.u32 %v750, 4294901760
  %v4708 = vsub.f32 %v750, %v4707
  %v4709 = vand.u32 %v4708, 4294901760
  %4710 = vmatpush.msra.mxu0 %v4709
  %v4711 = vand.u32 %v749, 4294901760
  %v4712 = vsub.f32 %v749, %v4711
  %v4713 = vand.u32 %v4712, 4294901760
  %4714 = vmatpush.msra.mxu0 %v4713
  %v4715 = vand.u32 %v748, 4294901760
  %v4716 = vsub.f32 %v748, %v4715
  %v4717 = vand.u32 %v4716, 4294901760
  %4718 = vmatpush.msra.mxu0 %v4717
  %v4719 = vand.u32 %v747, 4294901760
  %v4720 = vsub.f32 %v747, %v4719
  %v4721 = vand.u32 %v4720, 4294901760
  %4722 = vmatpush.msra.mxu0 %v4721
  %v4723 = vand.u32 %v746, 4294901760
  %v4724 = vsub.f32 %v746, %v4723
  %v4725 = vand.u32 %v4724, 4294901760
  %4726 = vmatpush.msra.mxu0 %v4725
  %v4727 = vand.u32 %v745, 4294901760
  %v4728 = vsub.f32 %v745, %v4727
  %v4729 = vand.u32 %v4728, 4294901760
  %4730 = vmatpush.msra.mxu0 %v4729
  %v4731 = vand.u32 %v744, 4294901760
  %v4732 = vsub.f32 %v744, %v4731
  %v4733 = vand.u32 %v4732, 4294901760
  %4734 = vmatpush.msra.mxu0 %v4733
  %v4735 = vand.u32 %v743, 4294901760
  %v4736 = vsub.f32 %v743, %v4735
  %v4737 = vand.u32 %v4736, 4294901760
  %4738 = vmatpush.msra.mxu0 %v4737
  %v4739 = vand.u32 %v742, 4294901760
  %v4740 = vsub.f32 %v742, %v4739
  %v4741 = vand.u32 %v4740, 4294901760
  %4742 = vmatpush.msra.mxu0 %v4741
  %v4743 = vand.u32 %v741, 4294901760
  %v4744 = vsub.f32 %v741, %v4743
  %v4745 = vand.u32 %v4744, 4294901760
  %4746 = vmatpush.msra.mxu0 %v4745
  %v4747 = vand.u32 %v740, 4294901760
  %v4748 = vsub.f32 %v740, %v4747
  %v4749 = vand.u32 %v4748, 4294901760
  %4750 = vmatpush.msra.mxu0 %v4749
  %v4751 = vand.u32 %v739, 4294901760
  %v4752 = vsub.f32 %v739, %v4751
  %v4753 = vand.u32 %v4752, 4294901760
  %4754 = vmatpush.msra.mxu0 %v4753
  %v4755 = vand.u32 %v738, 4294901760
  %v4756 = vsub.f32 %v738, %v4755
  %v4757 = vand.u32 %v4756, 4294901760
  %4758 = vmatpush.msra.mxu0 %v4757
  %v4759 = vand.u32 %v4092, 4294901760
  %4760 = vmatmul.f32.gmra.mxu0 %v4759
  %v4761 = vpop.f32.mrf.mxu0
  %v4762 = vadd.f32 %v4693, %v4761
  %4763 = vdwg.mxu0
  %v4764 = vand.u32 %v753, 4294901760
  %4765 = vmatpush.msra.mxu0 %v4764
  %v4766 = vand.u32 %v752, 4294901760
  %4767 = vmatpush.msra.mxu0 %v4766
  %v4768 = vand.u32 %v751, 4294901760
  %4769 = vmatpush.msra.mxu0 %v4768
  %v4770 = vand.u32 %v750, 4294901760
  %4771 = vmatpush.msra.mxu0 %v4770
  %v4772 = vand.u32 %v749, 4294901760
  %4773 = vmatpush.msra.mxu0 %v4772
  %v4774 = vand.u32 %v748, 4294901760
  %4775 = vmatpush.msra.mxu0 %v4774
  %v4776 = vand.u32 %v747, 4294901760
  %4777 = vmatpush.msra.mxu0 %v4776
  %v4778 = vand.u32 %v746, 4294901760
  %4779 = vmatpush.msra.mxu0 %v4778
  %v4780 = vand.u32 %v745, 4294901760
  %4781 = vmatpush.msra.mxu0 %v4780
  %v4782 = vand.u32 %v744, 4294901760
  %4783 = vmatpush.msra.mxu0 %v4782
  %v4784 = vand.u32 %v743, 4294901760
  %4785 = vmatpush.msra.mxu0 %v4784
  %v4786 = vand.u32 %v742, 4294901760
  %4787 = vmatpush.msra.mxu0 %v4786
  %v4788 = vand.u32 %v741, 4294901760
  %4789 = vmatpush.msra.mxu0 %v4788
  %v4790 = vand.u32 %v740, 4294901760
  %4791 = vmatpush.msra.mxu0 %v4790
  %v4792 = vand.u32 %v739, 4294901760
  %4793 = vmatpush.msra.mxu0 %v4792
  %v4794 = vand.u32 %v738, 4294901760
  %4795 = vmatpush.msra.mxu0 %v4794
  %v4796 = vand.u32 %v4092, 4294901760
  %4797 = vmatmul.f32.gmra.mxu0 %v4796
  %v4798 = vpop.f32.mrf.mxu0
  %v4799 = vadd.f32 %v4762, %v4798
  %4800 = vdwg.mxu0
  %v4801 = vmul.f32 %v4799, %v4456
  %4802 = vadd.xlane.f32.xlu0 %v4801
  %v4803 = vpop.xlane.xlu0 %4802
  %v4804 = vadd.f32 %v4459, %v4803
  %v4805 = vmul.f32 %v4448, %v4804
  %v4806 = vadd.f32 %v4085, %v4805
  %vm4807 = vcmp.gt.f32.partialorder %v4448, 0.0
  %v4808 = vsel %vm4807, 1, 0
  %4809 = vset.pattern.permute.xlu0 0
  %4810 = vperm.xlu0 %4809, %v4808
  %v4811 = vpop.permute.xlu0 %4810
  %vm4812 = vcmp.eq.s32.totalorder %v4811, 1
  %v4813 = vsel %vm4812, %v4456, %v4092
  %4814 = vmax.xlane.f32.xlu0 %v4444
  %v4815 = vpop.xlane.xlu0 %4814
  %v4816 = vsub.f32 %v4444, %v4815
  %v4817 = vmul.f32 %v4816, 1.442695
  %v4818 = vpow.pop %v4817
  %v4819 = vand.u32 %v822, 4294901760
  %4820 = vmatpush.msra.mxu0 %v4819
  %v4821 = vand.u32 %v820, 4294901760
  %4822 = vmatpush.msra.mxu0 %v4821
  %v4823 = vand.u32 %v818, 4294901760
  %4824 = vmatpush.msra.mxu0 %v4823
  %v4825 = vand.u32 %v816, 4294901760
  %4826 = vmatpush.msra.mxu0 %v4825
  %v4827 = vand.u32 %v814, 4294901760
  %4828 = vmatpush.msra.mxu0 %v4827
  %v4829 = vand.u32 %v812, 4294901760
  %4830 = vmatpush.msra.mxu0 %v4829
  %v4831 = vand.u32 %v810, 4294901760
  %4832 = vmatpush.msra.mxu0 %v4831
  %v4833 = vand.u32 %v808, 4294901760
  %4834 = vmatpush.msra.mxu0 %v4833
  %v4835 = vand.u32 %v806, 4294901760
  %4836 = vmatpush.msra.mxu0 %v4835
  %v4837 = vand.u32 %v804, 4294901760
  %4838 = vmatpush.msra.mxu0 %v4837
  %v4839 = vand.u32 %v802, 4294901760
  %4840 = vmatpush.msra.mxu0 %v4839
  %v4841 = vand.u32 %v800, 4294901760
  %4842 = vmatpush.msra.mxu0 %v4841
  %v4843 = vand.u32 %v798, 4294901760
  %4844 = vmatpush.msra.mxu0 %v4843
  %v4845 = vand.u32 %v796, 4294901760
  %4846 = vmatpush.msra.mxu0 %v4845
  %v4847 = vand.u32 %v794, 4294901760
  %4848 = vmatpush.msra.mxu0 %v4847
  %v4849 = vand.u32 %v792, 4294901760
  %4850 = vmatpush.msra.mxu0 %v4849
  %v4851 = vand.u32 %v4818, 4294901760
  %v4852 = vsub.f32 %v4818, %v4851
  %v4853 = vand.u32 %v4852, 4294901760
  %v4854 = vsub.f32 %v4852, %v4853
  %v4855 = vand.u32 %v4854, 4294901760
  %4856 = vmatmul.f32.gmra.mxu0 %v4855
  %v4857 = vpop.f32.mrf.mxu0
  %v4858 = vadd.f32 0.0, %v4857
  %4859 = vdwg.mxu0
  %v4860 = vand.u32 %v822, 4294901760
  %v4861 = vsub.f32 %v822, %v4860
  %v4862 = vand.u32 %v4861, 4294901760
  %v4863 = vsub.f32 %v4861, %v4862
  %v4864 = vand.u32 %v4863, 4294901760
  %4865 = vmatpush.msra.mxu0 %v4864
  %v4866 = vand.u32 %v820, 4294901760
  %v4867 = vsub.f32 %v820, %v4866
  %v4868 = vand.u32 %v4867, 4294901760
  %v4869 = vsub.f32 %v4867, %v4868
  %v4870 = vand.u32 %v4869, 4294901760
  %4871 = vmatpush.msra.mxu0 %v4870
  %v4872 = vand.u32 %v818, 4294901760
  %v4873 = vsub.f32 %v818, %v4872
  %v4874 = vand.u32 %v4873, 4294901760
  %v4875 = vsub.f32 %v4873, %v4874
  %v4876 = vand.u32 %v4875, 4294901760
  %4877 = vmatpush.msra.mxu0 %v4876
  %v4878 = vand.u32 %v816, 4294901760
  %v4879 = vsub.f32 %v816, %v4878
  %v4880 = vand.u32 %v4879, 4294901760
  %v4881 = vsub.f32 %v4879, %v4880
  %v4882 = vand.u32 %v4881, 4294901760
  %4883 = vmatpush.msra.mxu0 %v4882
  %v4884 = vand.u32 %v814, 4294901760
  %v4885 = vsub.f32 %v814, %v4884
  %v4886 = vand.u32 %v4885, 4294901760
  %v4887 = vsub.f32 %v4885, %v4886
  %v4888 = vand.u32 %v4887, 4294901760
  %4889 = vmatpush.msra.mxu0 %v4888
  %v4890 = vand.u32 %v812, 4294901760
  %v4891 = vsub.f32 %v812, %v4890
  %v4892 = vand.u32 %v4891, 4294901760
  %v4893 = vsub.f32 %v4891, %v4892
  %v4894 = vand.u32 %v4893, 4294901760
  %4895 = vmatpush.msra.mxu0 %v4894
  %v4896 = vand.u32 %v810, 4294901760
  %v4897 = vsub.f32 %v810, %v4896
  %v4898 = vand.u32 %v4897, 4294901760
  %v4899 = vsub.f32 %v4897, %v4898
  %v4900 = vand.u32 %v4899, 4294901760
  %4901 = vmatpush.msra.mxu0 %v4900
  %v4902 = vand.u32 %v808, 4294901760
  %v4903 = vsub.f32 %v808, %v4902
  %v4904 = vand.u32 %v4903, 4294901760
  %v4905 = vsub.f32 %v4903, %v4904
  %v4906 = vand.u32 %v4905, 4294901760
  %4907 = vmatpush.msra.mxu0 %v4906
  %v4908 = vand.u32 %v806, 4294901760
  %v4909 = vsub.f32 %v806, %v4908
  %v4910 = vand.u32 %v4909, 4294901760
  %v4911 = vsub.f32 %v4909, %v4910
  %v4912 = vand.u32 %v4911, 4294901760
  %4913 = vmatpush.msra.mxu0 %v4912
  %v4914 = vand.u32 %v804, 4294901760
  %v4915 = vsub.f32 %v804, %v4914
  %v4916 = vand.u32 %v4915, 4294901760
  %v4917 = vsub.f32 %v4915, %v4916
  %v4918 = vand.u32 %v4917, 4294901760
  %4919 = vmatpush.msra.mxu0 %v4918
  %v4920 = vand.u32 %v802, 4294901760
  %v4921 = vsub.f32 %v802, %v4920
  %v4922 = vand.u32 %v4921, 4294901760
  %v4923 = vsub.f32 %v4921, %v4922
  %v4924 = vand.u32 %v4923, 4294901760
  %4925 = vmatpush.msra.mxu0 %v4924
  %v4926 = vand.u32 %v800, 4294901760
  %v4927 = vsub.f32 %v800, %v4926
  %v4928 = vand.u32 %v4927, 4294901760
  %v4929 = vsub.f32 %v4927, %v4928
  %v4930 = vand.u32 %v4929, 4294901760
  %4931 = vmatpush.msra.mxu0 %v4930
  %v4932 = vand.u32 %v798, 4294901760
  %v4933 = vsub.f32 %v798, %v4932
  %v4934 = vand.u32 %v4933, 4294901760
  %v4935 = vsub.f32 %v4933, %v4934
  %v4936 = vand.u32 %v4935, 4294901760
  %4937 = vmatpush.msra.mxu0 %v4936
  %v4938 = vand.u32 %v796, 4294901760
  %v4939 = vsub.f32 %v796, %v4938
  %v4940 = vand.u32 %v4939, 4294901760
  %v4941 = vsub.f32 %v4939, %v4940
  %v4942 = vand.u32 %v4941, 4294901760
  %4943 = vmatpush.msra.mxu0 %v4942
  %v4944 = vand.u32 %v794, 4294901760
  %v4945 = vsub.f32 %v794, %v4944
  %v4946 = vand.u32 %v4945, 4294901760
  %v4947 = vsub.f32 %v4945, %v4946
  %v4948 = vand.u32 %v4947, 4294901760
  %4949 = vmatpush.msra.mxu0 %v4948
  %v4950 = vand.u32 %v792, 4294901760
  %v4951 = vsub.f32 %v792, %v4950
  %v4952 = vand.u32 %v4951, 4294901760
  %v4953 = vsub.f32 %v4951, %v4952
  %v4954 = vand.u32 %v4953, 4294901760
  %4955 = vmatpush.msra.mxu0 %v4954
  %v4956 = vand.u32 %v4818, 4294901760
  %4957 = vmatmul.f32.gmra.mxu0 %v4956
  %v4958 = vpop.f32.mrf.mxu0
  %v4959 = vadd.f32 %v4858, %v4958
  %4960 = vdwg.mxu0
  %v4961 = vand.u32 %v822, 4294901760
  %v4962 = vsub.f32 %v822, %v4961
  %4963 = vmatpush.msra.mxu0 %v4962
  %v4964 = vand.u32 %v820, 4294901760
  %v4965 = vsub.f32 %v820, %v4964
  %4966 = vmatpush.msra.mxu0 %v4965
  %v4967 = vand.u32 %v818, 4294901760
  %v4968 = vsub.f32 %v818, %v4967
  %4969 = vmatpush.msra.mxu0 %v4968
  %v4970 = vand.u32 %v816, 4294901760
  %v4971 = vsub.f32 %v816, %v4970
  %4972 = vmatpush.msra.mxu0 %v4971
  %v4973 = vand.u32 %v814, 4294901760
  %v4974 = vsub.f32 %v814, %v4973
  %4975 = vmatpush.msra.mxu0 %v4974
  %v4976 = vand.u32 %v812, 4294901760
  %v4977 = vsub.f32 %v812, %v4976
  %4978 = vmatpush.msra.mxu0 %v4977
  %v4979 = vand.u32 %v810, 4294901760
  %v4980 = vsub.f32 %v810, %v4979
  %4981 = vmatpush.msra.mxu0 %v4980
  %v4982 = vand.u32 %v808, 4294901760
  %v4983 = vsub.f32 %v808, %v4982
  %4984 = vmatpush.msra.mxu0 %v4983
  %v4985 = vand.u32 %v806, 4294901760
  %v4986 = vsub.f32 %v806, %v4985
  %4987 = vmatpush.msra.mxu0 %v4986
  %v4988 = vand.u32 %v804, 4294901760
  %v4989 = vsub.f32 %v804, %v4988
  %4990 = vmatpush.msra.mxu0 %v4989
  %v4991 = vand.u32 %v802, 4294901760
  %v4992 = vsub.f32 %v802, %v4991
  %4993 = vmatpush.msra.mxu0 %v4992
  %v4994 = vand.u32 %v800, 4294901760
  %v4995 = vsub.f32 %v800, %v4994
  %4996 = vmatpush.msra.mxu0 %v4995
  %v4997 = vand.u32 %v798, 4294901760
  %v4998 = vsub.f32 %v798, %v4997
  %4999 = vmatpush.msra.mxu0 %v4998
  %v5000 = vand.u32 %v796, 4294901760
  %v5001 = vsub.f32 %v796, %v5000
  %5002 = vmatpush.msra.mxu0 %v5001
  %v5003 = vand.u32 %v794, 4294901760
  %v5004 = vsub.f32 %v794, %v5003
  %5005 = vmatpush.msra.mxu0 %v5004
  %v5006 = vand.u32 %v792, 4294901760
  %v5007 = vsub.f32 %v792, %v5006
  %5008 = vmatpush.msra.mxu0 %v5007
  %v5009 = vand.u32 %v4818, 4294901760
  %v5010 = vsub.f32 %v4818, %v5009
  %5011 = vmatmul.f32.gmra.mxu0 %v5010
  %v5012 = vpop.f32.mrf.mxu0
  %v5013 = vadd.f32 %v4959, %v5012
  %5014 = vdwg.mxu0
  %v5015 = vand.u32 %v822, 4294901760
  %5016 = vmatpush.msra.mxu0 %v5015
  %v5017 = vand.u32 %v820, 4294901760
  %5018 = vmatpush.msra.mxu0 %v5017
  %v5019 = vand.u32 %v818, 4294901760
  %5020 = vmatpush.msra.mxu0 %v5019
  %v5021 = vand.u32 %v816, 4294901760
  %5022 = vmatpush.msra.mxu0 %v5021
  %v5023 = vand.u32 %v814, 4294901760
  %5024 = vmatpush.msra.mxu0 %v5023
  %v5025 = vand.u32 %v812, 4294901760
  %5026 = vmatpush.msra.mxu0 %v5025
  %v5027 = vand.u32 %v810, 4294901760
  %5028 = vmatpush.msra.mxu0 %v5027
  %v5029 = vand.u32 %v808, 4294901760
  %5030 = vmatpush.msra.mxu0 %v5029
  %v5031 = vand.u32 %v806, 4294901760
  %5032 = vmatpush.msra.mxu0 %v5031
  %v5033 = vand.u32 %v804, 4294901760
  %5034 = vmatpush.msra.mxu0 %v5033
  %v5035 = vand.u32 %v802, 4294901760
  %5036 = vmatpush.msra.mxu0 %v5035
  %v5037 = vand.u32 %v800, 4294901760
  %5038 = vmatpush.msra.mxu0 %v5037
  %v5039 = vand.u32 %v798, 4294901760
  %5040 = vmatpush.msra.mxu0 %v5039
  %v5041 = vand.u32 %v796, 4294901760
  %5042 = vmatpush.msra.mxu0 %v5041
  %v5043 = vand.u32 %v794, 4294901760
  %5044 = vmatpush.msra.mxu0 %v5043
  %v5045 = vand.u32 %v792, 4294901760
  %5046 = vmatpush.msra.mxu0 %v5045
  %v5047 = vand.u32 %v4818, 4294901760
  %v5048 = vsub.f32 %v4818, %v5047
  %v5049 = vand.u32 %v5048, 4294901760
  %5050 = vmatmul.f32.gmra.mxu0 %v5049
  %v5051 = vpop.f32.mrf.mxu0
  %v5052 = vadd.f32 %v5013, %v5051
  %5053 = vdwg.mxu0
  %v5054 = vand.u32 %v822, 4294901760
  %v5055 = vsub.f32 %v822, %v5054
  %v5056 = vand.u32 %v5055, 4294901760
  %5057 = vmatpush.msra.mxu0 %v5056
  %v5058 = vand.u32 %v820, 4294901760
  %v5059 = vsub.f32 %v820, %v5058
  %v5060 = vand.u32 %v5059, 4294901760
  %5061 = vmatpush.msra.mxu0 %v5060
  %v5062 = vand.u32 %v818, 4294901760
  %v5063 = vsub.f32 %v818, %v5062
  %v5064 = vand.u32 %v5063, 4294901760
  %5065 = vmatpush.msra.mxu0 %v5064
  %v5066 = vand.u32 %v816, 4294901760
  %v5067 = vsub.f32 %v816, %v5066
  %v5068 = vand.u32 %v5067, 4294901760
  %5069 = vmatpush.msra.mxu0 %v5068
  %v5070 = vand.u32 %v814, 4294901760
  %v5071 = vsub.f32 %v814, %v5070
  %v5072 = vand.u32 %v5071, 4294901760
  %5073 = vmatpush.msra.mxu0 %v5072
  %v5074 = vand.u32 %v812, 4294901760
  %v5075 = vsub.f32 %v812, %v5074
  %v5076 = vand.u32 %v5075, 4294901760
  %5077 = vmatpush.msra.mxu0 %v5076
  %v5078 = vand.u32 %v810, 4294901760
  %v5079 = vsub.f32 %v810, %v5078
  %v5080 = vand.u32 %v5079, 4294901760
  %5081 = vmatpush.msra.mxu0 %v5080
  %v5082 = vand.u32 %v808, 4294901760
  %v5083 = vsub.f32 %v808, %v5082
  %v5084 = vand.u32 %v5083, 4294901760
  %5085 = vmatpush.msra.mxu0 %v5084
  %v5086 = vand.u32 %v806, 4294901760
  %v5087 = vsub.f32 %v806, %v5086
  %v5088 = vand.u32 %v5087, 4294901760
  %5089 = vmatpush.msra.mxu0 %v5088
  %v5090 = vand.u32 %v804, 4294901760
  %v5091 = vsub.f32 %v804, %v5090
  %v5092 = vand.u32 %v5091, 4294901760
  %5093 = vmatpush.msra.mxu0 %v5092
  %v5094 = vand.u32 %v802, 4294901760
  %v5095 = vsub.f32 %v802, %v5094
  %v5096 = vand.u32 %v5095, 4294901760
  %5097 = vmatpush.msra.mxu0 %v5096
  %v5098 = vand.u32 %v800, 4294901760
  %v5099 = vsub.f32 %v800, %v5098
  %v5100 = vand.u32 %v5099, 4294901760
  %5101 = vmatpush.msra.mxu0 %v5100
  %v5102 = vand.u32 %v798, 4294901760
  %v5103 = vsub.f32 %v798, %v5102
  %v5104 = vand.u32 %v5103, 4294901760
  %5105 = vmatpush.msra.mxu0 %v5104
  %v5106 = vand.u32 %v796, 4294901760
  %v5107 = vsub.f32 %v796, %v5106
  %v5108 = vand.u32 %v5107, 4294901760
  %5109 = vmatpush.msra.mxu0 %v5108
  %v5110 = vand.u32 %v794, 4294901760
  %v5111 = vsub.f32 %v794, %v5110
  %v5112 = vand.u32 %v5111, 4294901760
  %5113 = vmatpush.msra.mxu0 %v5112
  %v5114 = vand.u32 %v792, 4294901760
  %v5115 = vsub.f32 %v792, %v5114
  %v5116 = vand.u32 %v5115, 4294901760
  %5117 = vmatpush.msra.mxu0 %v5116
  %v5118 = vand.u32 %v4818, 4294901760
  %5119 = vmatmul.f32.gmra.mxu0 %v5118
  %v5120 = vpop.f32.mrf.mxu0
  %v5121 = vadd.f32 %v5052, %v5120
  %5122 = vdwg.mxu0
  %v5123 = vand.u32 %v822, 4294901760
  %5124 = vmatpush.msra.mxu0 %v5123
  %v5125 = vand.u32 %v820, 4294901760
  %5126 = vmatpush.msra.mxu0 %v5125
  %v5127 = vand.u32 %v818, 4294901760
  %5128 = vmatpush.msra.mxu0 %v5127
  %v5129 = vand.u32 %v816, 4294901760
  %5130 = vmatpush.msra.mxu0 %v5129
  %v5131 = vand.u32 %v814, 4294901760
  %5132 = vmatpush.msra.mxu0 %v5131
  %v5133 = vand.u32 %v812, 4294901760
  %5134 = vmatpush.msra.mxu0 %v5133
  %v5135 = vand.u32 %v810, 4294901760
  %5136 = vmatpush.msra.mxu0 %v5135
  %v5137 = vand.u32 %v808, 4294901760
  %5138 = vmatpush.msra.mxu0 %v5137
  %v5139 = vand.u32 %v806, 4294901760
  %5140 = vmatpush.msra.mxu0 %v5139
  %v5141 = vand.u32 %v804, 4294901760
  %5142 = vmatpush.msra.mxu0 %v5141
  %v5143 = vand.u32 %v802, 4294901760
  %5144 = vmatpush.msra.mxu0 %v5143
  %v5145 = vand.u32 %v800, 4294901760
  %5146 = vmatpush.msra.mxu0 %v5145
  %v5147 = vand.u32 %v798, 4294901760
  %5148 = vmatpush.msra.mxu0 %v5147
  %v5149 = vand.u32 %v796, 4294901760
  %5150 = vmatpush.msra.mxu0 %v5149
  %v5151 = vand.u32 %v794, 4294901760
  %5152 = vmatpush.msra.mxu0 %v5151
  %v5153 = vand.u32 %v792, 4294901760
  %5154 = vmatpush.msra.mxu0 %v5153
  %v5155 = vand.u32 %v4818, 4294901760
  %5156 = vmatmul.f32.gmra.mxu0 %v5155
  %v5157 = vpop.f32.mrf.mxu0
  %v5158 = vadd.f32 %v5121, %v5157
  %5159 = vdwg.mxu0
  %v5160 = vlog2.pop %v5158
  %v5161 = vmul.f32 %v5160, 0.6931472
  %v5162 = vadd.f32 %v5161, %v4815
  %v5163 = vadd.f32 %v5162, %v774
  %v5164 = vadd.f32 %v5163, %v4446
  %v5165 = vsel %vm4812, %v5164, %v4444
  %s5166 = scalar_lea.vmem [#allocation2], 56
  %v5167 = vld [vmem:[%s5166] sm:$0xff]
  %s5168 = scalar_lea.vmem %s2, 56
  %v5169 = vld [vmem:[%s5168] sm:$0xff]
  %s5170 = scalar_lea.vmem %s1, 56
  %v5171 = vld [vmem:[%s5170] sm:$0xff]
  %5172 = vset.pattern.permute.xlu0 0
  %5173 = vperm.xlu0 %5172, %v5171
  %v5174 = vpop.permute.xlu0 %5173
  %vm5175 = vcmp.eq.s32.totalorder %v824, %v5174
  %v5176 = vsel %vm5175, 1, 0
  %v5177 = vcvt.s32.f32 %v5176
  %v5178 = vmul.f32 %v5167, %v5177
  %5179 = vadd.xlane.f32.xlu0 %v5178
  %v5180 = vpop.xlane.xlu0 %5179
  %v5181 = vand.u32 %v753, 4294901760
  %5182 = vmatpush.msra.mxu0 %v5181
  %v5183 = vand.u32 %v752, 4294901760
  %5184 = vmatpush.msra.mxu0 %v5183
  %v5185 = vand.u32 %v751, 4294901760
  %5186 = vmatpush.msra.mxu0 %v5185
  %v5187 = vand.u32 %v750, 4294901760
  %5188 = vmatpush.msra.mxu0 %v5187
  %v5189 = vand.u32 %v749, 4294901760
  %5190 = vmatpush.msra.mxu0 %v5189
  %v5191 = vand.u32 %v748, 4294901760
  %5192 = vmatpush.msra.mxu0 %v5191
  %v5193 = vand.u32 %v747, 4294901760
  %5194 = vmatpush.msra.mxu0 %v5193
  %v5195 = vand.u32 %v746, 4294901760
  %5196 = vmatpush.msra.mxu0 %v5195
  %v5197 = vand.u32 %v745, 4294901760
  %5198 = vmatpush.msra.mxu0 %v5197
  %v5199 = vand.u32 %v744, 4294901760
  %5200 = vmatpush.msra.mxu0 %v5199
  %v5201 = vand.u32 %v743, 4294901760
  %5202 = vmatpush.msra.mxu0 %v5201
  %v5203 = vand.u32 %v742, 4294901760
  %5204 = vmatpush.msra.mxu0 %v5203
  %v5205 = vand.u32 %v741, 4294901760
  %5206 = vmatpush.msra.mxu0 %v5205
  %v5207 = vand.u32 %v740, 4294901760
  %5208 = vmatpush.msra.mxu0 %v5207
  %v5209 = vand.u32 %v739, 4294901760
  %5210 = vmatpush.msra.mxu0 %v5209
  %v5211 = vand.u32 %v738, 4294901760
  %5212 = vmatpush.msra.mxu0 %v5211
  %v5213 = vand.u32 %v4813, 4294901760
  %v5214 = vsub.f32 %v4813, %v5213
  %v5215 = vand.u32 %v5214, 4294901760
  %v5216 = vsub.f32 %v5214, %v5215
  %v5217 = vand.u32 %v5216, 4294901760
  %5218 = vmatmul.f32.gmra.mxu0 %v5217
  %v5219 = vpop.f32.mrf.mxu0
  %v5220 = vadd.f32 0.0, %v5219
  %5221 = vdwg.mxu0
  %v5222 = vand.u32 %v753, 4294901760
  %v5223 = vsub.f32 %v753, %v5222
  %v5224 = vand.u32 %v5223, 4294901760
  %v5225 = vsub.f32 %v5223, %v5224
  %v5226 = vand.u32 %v5225, 4294901760
  %5227 = vmatpush.msra.mxu0 %v5226
  %v5228 = vand.u32 %v752, 4294901760
  %v5229 = vsub.f32 %v752, %v5228
  %v5230 = vand.u32 %v5229, 4294901760
  %v5231 = vsub.f32 %v5229, %v5230
  %v5232 = vand.u32 %v5231, 4294901760
  %5233 = vmatpush.msra.mxu0 %v5232
  %v5234 = vand.u32 %v751, 4294901760
  %v5235 = vsub.f32 %v751, %v5234
  %v5236 = vand.u32 %v5235, 4294901760
  %v5237 = vsub.f32 %v5235, %v5236
  %v5238 = vand.u32 %v5237, 4294901760
  %5239 = vmatpush.msra.mxu0 %v5238
  %v5240 = vand.u32 %v750, 4294901760
  %v5241 = vsub.f32 %v750, %v5240
  %v5242 = vand.u32 %v5241, 4294901760
  %v5243 = vsub.f32 %v5241, %v5242
  %v5244 = vand.u32 %v5243, 4294901760
  %5245 = vmatpush.msra.mxu0 %v5244
  %v5246 = vand.u32 %v749, 4294901760
  %v5247 = vsub.f32 %v749, %v5246
  %v5248 = vand.u32 %v5247, 4294901760
  %v5249 = vsub.f32 %v5247, %v5248
  %v5250 = vand.u32 %v5249, 4294901760
  %5251 = vmatpush.msra.mxu0 %v5250
  %v5252 = vand.u32 %v748, 4294901760
  %v5253 = vsub.f32 %v748, %v5252
  %v5254 = vand.u32 %v5253, 4294901760
  %v5255 = vsub.f32 %v5253, %v5254
  %v5256 = vand.u32 %v5255, 4294901760
  %5257 = vmatpush.msra.mxu0 %v5256
  %v5258 = vand.u32 %v747, 4294901760
  %v5259 = vsub.f32 %v747, %v5258
  %v5260 = vand.u32 %v5259, 4294901760
  %v5261 = vsub.f32 %v5259, %v5260
  %v5262 = vand.u32 %v5261, 4294901760
  %5263 = vmatpush.msra.mxu0 %v5262
  %v5264 = vand.u32 %v746, 4294901760
  %v5265 = vsub.f32 %v746, %v5264
  %v5266 = vand.u32 %v5265, 4294901760
  %v5267 = vsub.f32 %v5265, %v5266
  %v5268 = vand.u32 %v5267, 4294901760
  %5269 = vmatpush.msra.mxu0 %v5268
  %v5270 = vand.u32 %v745, 4294901760
  %v5271 = vsub.f32 %v745, %v5270
  %v5272 = vand.u32 %v5271, 4294901760
  %v5273 = vsub.f32 %v5271, %v5272
  %v5274 = vand.u32 %v5273, 4294901760
  %5275 = vmatpush.msra.mxu0 %v5274
  %v5276 = vand.u32 %v744, 4294901760
  %v5277 = vsub.f32 %v744, %v5276
  %v5278 = vand.u32 %v5277, 4294901760
  %v5279 = vsub.f32 %v5277, %v5278
  %v5280 = vand.u32 %v5279, 4294901760
  %5281 = vmatpush.msra.mxu0 %v5280
  %v5282 = vand.u32 %v743, 4294901760
  %v5283 = vsub.f32 %v743, %v5282
  %v5284 = vand.u32 %v5283, 4294901760
  %v5285 = vsub.f32 %v5283, %v5284
  %v5286 = vand.u32 %v5285, 4294901760
  %5287 = vmatpush.msra.mxu0 %v5286
  %v5288 = vand.u32 %v742, 4294901760
  %v5289 = vsub.f32 %v742, %v5288
  %v5290 = vand.u32 %v5289, 4294901760
  %v5291 = vsub.f32 %v5289, %v5290
  %v5292 = vand.u32 %v5291, 4294901760
  %5293 = vmatpush.msra.mxu0 %v5292
  %v5294 = vand.u32 %v741, 4294901760
  %v5295 = vsub.f32 %v741, %v5294
  %v5296 = vand.u32 %v5295, 4294901760
  %v5297 = vsub.f32 %v5295, %v5296
  %v5298 = vand.u32 %v5297, 4294901760
  %5299 = vmatpush.msra.mxu0 %v5298
  %v5300 = vand.u32 %v740, 4294901760
  %v5301 = vsub.f32 %v740, %v5300
  %v5302 = vand.u32 %v5301, 4294901760
  %v5303 = vsub.f32 %v5301, %v5302
  %v5304 = vand.u32 %v5303, 4294901760
  %5305 = vmatpush.msra.mxu0 %v5304
  %v5306 = vand.u32 %v739, 4294901760
  %v5307 = vsub.f32 %v739, %v5306
  %v5308 = vand.u32 %v5307, 4294901760
  %v5309 = vsub.f32 %v5307, %v5308
  %v5310 = vand.u32 %v5309, 4294901760
  %5311 = vmatpush.msra.mxu0 %v5310
  %v5312 = vand.u32 %v738, 4294901760
  %v5313 = vsub.f32 %v738, %v5312
  %v5314 = vand.u32 %v5313, 4294901760
  %v5315 = vsub.f32 %v5313, %v5314
  %v5316 = vand.u32 %v5315, 4294901760
  %5317 = vmatpush.msra.mxu0 %v5316
  %v5318 = vand.u32 %v4813, 4294901760
  %5319 = vmatmul.f32.gmra.mxu0 %v5318
  %v5320 = vpop.f32.mrf.mxu0
  %v5321 = vadd.f32 %v5220, %v5320
  %5322 = vdwg.mxu0
  %v5323 = vand.u32 %v753, 4294901760
  %v5324 = vsub.f32 %v753, %v5323
  %5325 = vmatpush.msra.mxu0 %v5324
  %v5326 = vand.u32 %v752, 4294901760
  %v5327 = vsub.f32 %v752, %v5326
  %5328 = vmatpush.msra.mxu0 %v5327
  %v5329 = vand.u32 %v751, 4294901760
  %v5330 = vsub.f32 %v751, %v5329
  %5331 = vmatpush.msra.mxu0 %v5330
  %v5332 = vand.u32 %v750, 4294901760
  %v5333 = vsub.f32 %v750, %v5332
  %5334 = vmatpush.msra.mxu0 %v5333
  %v5335 = vand.u32 %v749, 4294901760
  %v5336 = vsub.f32 %v749, %v5335
  %5337 = vmatpush.msra.mxu0 %v5336
  %v5338 = vand.u32 %v748, 4294901760
  %v5339 = vsub.f32 %v748, %v5338
  %5340 = vmatpush.msra.mxu0 %v5339
  %v5341 = vand.u32 %v747, 4294901760
  %v5342 = vsub.f32 %v747, %v5341
  %5343 = vmatpush.msra.mxu0 %v5342
  %v5344 = vand.u32 %v746, 4294901760
  %v5345 = vsub.f32 %v746, %v5344
  %5346 = vmatpush.msra.mxu0 %v5345
  %v5347 = vand.u32 %v745, 4294901760
  %v5348 = vsub.f32 %v745, %v5347
  %5349 = vmatpush.msra.mxu0 %v5348
  %v5350 = vand.u32 %v744, 4294901760
  %v5351 = vsub.f32 %v744, %v5350
  %5352 = vmatpush.msra.mxu0 %v5351
  %v5353 = vand.u32 %v743, 4294901760
  %v5354 = vsub.f32 %v743, %v5353
  %5355 = vmatpush.msra.mxu0 %v5354
  %v5356 = vand.u32 %v742, 4294901760
  %v5357 = vsub.f32 %v742, %v5356
  %5358 = vmatpush.msra.mxu0 %v5357
  %v5359 = vand.u32 %v741, 4294901760
  %v5360 = vsub.f32 %v741, %v5359
  %5361 = vmatpush.msra.mxu0 %v5360
  %v5362 = vand.u32 %v740, 4294901760
  %v5363 = vsub.f32 %v740, %v5362
  %5364 = vmatpush.msra.mxu0 %v5363
  %v5365 = vand.u32 %v739, 4294901760
  %v5366 = vsub.f32 %v739, %v5365
  %5367 = vmatpush.msra.mxu0 %v5366
  %v5368 = vand.u32 %v738, 4294901760
  %v5369 = vsub.f32 %v738, %v5368
  %5370 = vmatpush.msra.mxu0 %v5369
  %v5371 = vand.u32 %v4813, 4294901760
  %v5372 = vsub.f32 %v4813, %v5371
  %5373 = vmatmul.f32.gmra.mxu0 %v5372
  %v5374 = vpop.f32.mrf.mxu0
  %v5375 = vadd.f32 %v5321, %v5374
  %5376 = vdwg.mxu0
  %v5377 = vand.u32 %v753, 4294901760
  %5378 = vmatpush.msra.mxu0 %v5377
  %v5379 = vand.u32 %v752, 4294901760
  %5380 = vmatpush.msra.mxu0 %v5379
  %v5381 = vand.u32 %v751, 4294901760
  %5382 = vmatpush.msra.mxu0 %v5381
  %v5383 = vand.u32 %v750, 4294901760
  %5384 = vmatpush.msra.mxu0 %v5383
  %v5385 = vand.u32 %v749, 4294901760
  %5386 = vmatpush.msra.mxu0 %v5385
  %v5387 = vand.u32 %v748, 4294901760
  %5388 = vmatpush.msra.mxu0 %v5387
  %v5389 = vand.u32 %v747, 4294901760
  %5390 = vmatpush.msra.mxu0 %v5389
  %v5391 = vand.u32 %v746, 4294901760
  %5392 = vmatpush.msra.mxu0 %v5391
  %v5393 = vand.u32 %v745, 4294901760
  %5394 = vmatpush.msra.mxu0 %v5393
  %v5395 = vand.u32 %v744, 4294901760
  %5396 = vmatpush.msra.mxu0 %v5395
  %v5397 = vand.u32 %v743, 4294901760
  %5398 = vmatpush.msra.mxu0 %v5397
  %v5399 = vand.u32 %v742, 4294901760
  %5400 = vmatpush.msra.mxu0 %v5399
  %v5401 = vand.u32 %v741, 4294901760
  %5402 = vmatpush.msra.mxu0 %v5401
  %v5403 = vand.u32 %v740, 4294901760
  %5404 = vmatpush.msra.mxu0 %v5403
  %v5405 = vand.u32 %v739, 4294901760
  %5406 = vmatpush.msra.mxu0 %v5405
  %v5407 = vand.u32 %v738, 4294901760
  %5408 = vmatpush.msra.mxu0 %v5407
  %v5409 = vand.u32 %v4813, 4294901760
  %v5410 = vsub.f32 %v4813, %v5409
  %v5411 = vand.u32 %v5410, 4294901760
  %5412 = vmatmul.f32.gmra.mxu0 %v5411
  %v5413 = vpop.f32.mrf.mxu0
  %v5414 = vadd.f32 %v5375, %v5413
  %5415 = vdwg.mxu0
  %v5416 = vand.u32 %v753, 4294901760
  %v5417 = vsub.f32 %v753, %v5416
  %v5418 = vand.u32 %v5417, 4294901760
  %5419 = vmatpush.msra.mxu0 %v5418
  %v5420 = vand.u32 %v752, 4294901760
  %v5421 = vsub.f32 %v752, %v5420
  %v5422 = vand.u32 %v5421, 4294901760
  %5423 = vmatpush.msra.mxu0 %v5422
  %v5424 = vand.u32 %v751, 4294901760
  %v5425 = vsub.f32 %v751, %v5424
  %v5426 = vand.u32 %v5425, 4294901760
  %5427 = vmatpush.msra.mxu0 %v5426
  %v5428 = vand.u32 %v750, 4294901760
  %v5429 = vsub.f32 %v750, %v5428
  %v5430 = vand.u32 %v5429, 4294901760
  %5431 = vmatpush.msra.mxu0 %v5430
  %v5432 = vand.u32 %v749, 4294901760
  %v5433 = vsub.f32 %v749, %v5432
  %v5434 = vand.u32 %v5433, 4294901760
  %5435 = vmatpush.msra.mxu0 %v5434
  %v5436 = vand.u32 %v748, 4294901760
  %v5437 = vsub.f32 %v748, %v5436
  %v5438 = vand.u32 %v5437, 4294901760
  %5439 = vmatpush.msra.mxu0 %v5438
  %v5440 = vand.u32 %v747, 4294901760
  %v5441 = vsub.f32 %v747, %v5440
  %v5442 = vand.u32 %v5441, 4294901760
  %5443 = vmatpush.msra.mxu0 %v5442
  %v5444 = vand.u32 %v746, 4294901760
  %v5445 = vsub.f32 %v746, %v5444
  %v5446 = vand.u32 %v5445, 4294901760
  %5447 = vmatpush.msra.mxu0 %v5446
  %v5448 = vand.u32 %v745, 4294901760
  %v5449 = vsub.f32 %v745, %v5448
  %v5450 = vand.u32 %v5449, 4294901760
  %5451 = vmatpush.msra.mxu0 %v5450
  %v5452 = vand.u32 %v744, 4294901760
  %v5453 = vsub.f32 %v744, %v5452
  %v5454 = vand.u32 %v5453, 4294901760
  %5455 = vmatpush.msra.mxu0 %v5454
  %v5456 = vand.u32 %v743, 4294901760
  %v5457 = vsub.f32 %v743, %v5456
  %v5458 = vand.u32 %v5457, 4294901760
  %5459 = vmatpush.msra.mxu0 %v5458
  %v5460 = vand.u32 %v742, 4294901760
  %v5461 = vsub.f32 %v742, %v5460
  %v5462 = vand.u32 %v5461, 4294901760
  %5463 = vmatpush.msra.mxu0 %v5462
  %v5464 = vand.u32 %v741, 4294901760
  %v5465 = vsub.f32 %v741, %v5464
  %v5466 = vand.u32 %v5465, 4294901760
  %5467 = vmatpush.msra.mxu0 %v5466
  %v5468 = vand.u32 %v740, 4294901760
  %v5469 = vsub.f32 %v740, %v5468
  %v5470 = vand.u32 %v5469, 4294901760
  %5471 = vmatpush.msra.mxu0 %v5470
  %v5472 = vand.u32 %v739, 4294901760
  %v5473 = vsub.f32 %v739, %v5472
  %v5474 = vand.u32 %v5473, 4294901760
  %5475 = vmatpush.msra.mxu0 %v5474
  %v5476 = vand.u32 %v738, 4294901760
  %v5477 = vsub.f32 %v738, %v5476
  %v5478 = vand.u32 %v5477, 4294901760
  %5479 = vmatpush.msra.mxu0 %v5478
  %v5480 = vand.u32 %v4813, 4294901760
  %5481 = vmatmul.f32.gmra.mxu0 %v5480
  %v5482 = vpop.f32.mrf.mxu0
  %v5483 = vadd.f32 %v5414, %v5482
  %5484 = vdwg.mxu0
  %v5485 = vand.u32 %v753, 4294901760
  %5486 = vmatpush.msra.mxu0 %v5485
  %v5487 = vand.u32 %v752, 4294901760
  %5488 = vmatpush.msra.mxu0 %v5487
  %v5489 = vand.u32 %v751, 4294901760
  %5490 = vmatpush.msra.mxu0 %v5489
  %v5491 = vand.u32 %v750, 4294901760
  %5492 = vmatpush.msra.mxu0 %v5491
  %v5493 = vand.u32 %v749, 4294901760
  %5494 = vmatpush.msra.mxu0 %v5493
  %v5495 = vand.u32 %v748, 4294901760
  %5496 = vmatpush.msra.mxu0 %v5495
  %v5497 = vand.u32 %v747, 4294901760
  %5498 = vmatpush.msra.mxu0 %v5497
  %v5499 = vand.u32 %v746, 4294901760
  %5500 = vmatpush.msra.mxu0 %v5499
  %v5501 = vand.u32 %v745, 4294901760
  %5502 = vmatpush.msra.mxu0 %v5501
  %v5503 = vand.u32 %v744, 4294901760
  %5504 = vmatpush.msra.mxu0 %v5503
  %v5505 = vand.u32 %v743, 4294901760
  %5506 = vmatpush.msra.mxu0 %v5505
  %v5507 = vand.u32 %v742, 4294901760
  %5508 = vmatpush.msra.mxu0 %v5507
  %v5509 = vand.u32 %v741, 4294901760
  %5510 = vmatpush.msra.mxu0 %v5509
  %v5511 = vand.u32 %v740, 4294901760
  %5512 = vmatpush.msra.mxu0 %v5511
  %v5513 = vand.u32 %v739, 4294901760
  %5514 = vmatpush.msra.mxu0 %v5513
  %v5515 = vand.u32 %v738, 4294901760
  %5516 = vmatpush.msra.mxu0 %v5515
  %v5517 = vand.u32 %v4813, 4294901760
  %5518 = vmatmul.f32.gmra.mxu0 %v5517
  %v5519 = vpop.f32.mrf.mxu0
  %v5520 = vadd.f32 %v5483, %v5519
  %5521 = vdwg.mxu0
  %v5522 = vmul.f32 %v5520, %v5177
  %5523 = vadd.xlane.f32.xlu0 %v5522
  %v5524 = vpop.xlane.xlu0 %5523
  %v5525 = vadd.f32 %v5180, %v5524
  %v5526 = vmul.f32 %v5169, %v5525
  %v5527 = vadd.f32 %v4806, %v5526
  %vm5528 = vcmp.gt.f32.partialorder %v5169, 0.0
  %v5529 = vsel %vm5528, 1, 0
  %5530 = vset.pattern.permute.xlu0 0
  %5531 = vperm.xlu0 %5530, %v5529
  %v5532 = vpop.permute.xlu0 %5531
  %vm5533 = vcmp.eq.s32.totalorder %v5532, 1
  %v5534 = vsel %vm5533, %v5177, %v4813
  %5535 = vmax.xlane.f32.xlu0 %v5165
  %v5536 = vpop.xlane.xlu0 %5535
  %v5537 = vsub.f32 %v5165, %v5536
  %v5538 = vmul.f32 %v5537, 1.442695
  %v5539 = vpow.pop %v5538
  %v5540 = vand.u32 %v822, 4294901760
  %5541 = vmatpush.msra.mxu0 %v5540
  %v5542 = vand.u32 %v820, 4294901760
  %5543 = vmatpush.msra.mxu0 %v5542
  %v5544 = vand.u32 %v818, 4294901760
  %5545 = vmatpush.msra.mxu0 %v5544
  %v5546 = vand.u32 %v816, 4294901760
  %5547 = vmatpush.msra.mxu0 %v5546
  %v5548 = vand.u32 %v814, 4294901760
  %5549 = vmatpush.msra.mxu0 %v5548
  %v5550 = vand.u32 %v812, 4294901760
  %5551 = vmatpush.msra.mxu0 %v5550
  %v5552 = vand.u32 %v810, 4294901760
  %5553 = vmatpush.msra.mxu0 %v5552
  %v5554 = vand.u32 %v808, 4294901760
  %5555 = vmatpush.msra.mxu0 %v5554
  %v5556 = vand.u32 %v806, 4294901760
  %5557 = vmatpush.msra.mxu0 %v5556
  %v5558 = vand.u32 %v804, 4294901760
  %5559 = vmatpush.msra.mxu0 %v5558
  %v5560 = vand.u32 %v802, 4294901760
  %5561 = vmatpush.msra.mxu0 %v5560
  %v5562 = vand.u32 %v800, 4294901760
  %5563 = vmatpush.msra.mxu0 %v5562
  %v5564 = vand.u32 %v798, 4294901760
  %5565 = vmatpush.msra.mxu0 %v5564
  %v5566 = vand.u32 %v796, 4294901760
  %5567 = vmatpush.msra.mxu0 %v5566
  %v5568 = vand.u32 %v794, 4294901760
  %5569 = vmatpush.msra.mxu0 %v5568
  %v5570 = vand.u32 %v792, 4294901760
  %5571 = vmatpush.msra.mxu0 %v5570
  %v5572 = vand.u32 %v5539, 4294901760
  %v5573 = vsub.f32 %v5539, %v5572
  %v5574 = vand.u32 %v5573, 4294901760
  %v5575 = vsub.f32 %v5573, %v5574
  %v5576 = vand.u32 %v5575, 4294901760
  %5577 = vmatmul.f32.gmra.mxu0 %v5576
  %v5578 = vpop.f32.mrf.mxu0
  %v5579 = vadd.f32 0.0, %v5578
  %5580 = vdwg.mxu0
  %v5581 = vand.u32 %v822, 4294901760
  %v5582 = vsub.f32 %v822, %v5581
  %v5583 = vand.u32 %v5582, 4294901760
  %v5584 = vsub.f32 %v5582, %v5583
  %v5585 = vand.u32 %v5584, 4294901760
  %5586 = vmatpush.msra.mxu0 %v5585
  %v5587 = vand.u32 %v820, 4294901760
  %v5588 = vsub.f32 %v820, %v5587
  %v5589 = vand.u32 %v5588, 4294901760
  %v5590 = vsub.f32 %v5588, %v5589
  %v5591 = vand.u32 %v5590, 4294901760
  %5592 = vmatpush.msra.mxu0 %v5591
  %v5593 = vand.u32 %v818, 4294901760
  %v5594 = vsub.f32 %v818, %v5593
  %v5595 = vand.u32 %v5594, 4294901760
  %v5596 = vsub.f32 %v5594, %v5595
  %v5597 = vand.u32 %v5596, 4294901760
  %5598 = vmatpush.msra.mxu0 %v5597
  %v5599 = vand.u32 %v816, 4294901760
  %v5600 = vsub.f32 %v816, %v5599
  %v5601 = vand.u32 %v5600, 4294901760
  %v5602 = vsub.f32 %v5600, %v5601
  %v5603 = vand.u32 %v5602, 4294901760
  %5604 = vmatpush.msra.mxu0 %v5603
  %v5605 = vand.u32 %v814, 4294901760
  %v5606 = vsub.f32 %v814, %v5605
  %v5607 = vand.u32 %v5606, 4294901760
  %v5608 = vsub.f32 %v5606, %v5607
  %v5609 = vand.u32 %v5608, 4294901760
  %5610 = vmatpush.msra.mxu0 %v5609
  %v5611 = vand.u32 %v812, 4294901760
  %v5612 = vsub.f32 %v812, %v5611
  %v5613 = vand.u32 %v5612, 4294901760
  %v5614 = vsub.f32 %v5612, %v5613
  %v5615 = vand.u32 %v5614, 4294901760
  %5616 = vmatpush.msra.mxu0 %v5615
  %v5617 = vand.u32 %v810, 4294901760
  %v5618 = vsub.f32 %v810, %v5617
  %v5619 = vand.u32 %v5618, 4294901760
  %v5620 = vsub.f32 %v5618, %v5619
  %v5621 = vand.u32 %v5620, 4294901760
  %5622 = vmatpush.msra.mxu0 %v5621
  %v5623 = vand.u32 %v808, 4294901760
  %v5624 = vsub.f32 %v808, %v5623
  %v5625 = vand.u32 %v5624, 4294901760
  %v5626 = vsub.f32 %v5624, %v5625
  %v5627 = vand.u32 %v5626, 4294901760
  %5628 = vmatpush.msra.mxu0 %v5627
  %v5629 = vand.u32 %v806, 4294901760
  %v5630 = vsub.f32 %v806, %v5629
  %v5631 = vand.u32 %v5630, 4294901760
  %v5632 = vsub.f32 %v5630, %v5631
  %v5633 = vand.u32 %v5632, 4294901760
  %5634 = vmatpush.msra.mxu0 %v5633
  %v5635 = vand.u32 %v804, 4294901760
  %v5636 = vsub.f32 %v804, %v5635
  %v5637 = vand.u32 %v5636, 4294901760
  %v5638 = vsub.f32 %v5636, %v5637
  %v5639 = vand.u32 %v5638, 4294901760
  %5640 = vmatpush.msra.mxu0 %v5639
  %v5641 = vand.u32 %v802, 4294901760
  %v5642 = vsub.f32 %v802, %v5641
  %v5643 = vand.u32 %v5642, 4294901760
  %v5644 = vsub.f32 %v5642, %v5643
  %v5645 = vand.u32 %v5644, 4294901760
  %5646 = vmatpush.msra.mxu0 %v5645
  %v5647 = vand.u32 %v800, 4294901760
  %v5648 = vsub.f32 %v800, %v5647
  %v5649 = vand.u32 %v5648, 4294901760
  %v5650 = vsub.f32 %v5648, %v5649
  %v5651 = vand.u32 %v5650, 4294901760
  %5652 = vmatpush.msra.mxu0 %v5651
  %v5653 = vand.u32 %v798, 4294901760
  %v5654 = vsub.f32 %v798, %v5653
  %v5655 = vand.u32 %v5654, 4294901760
  %v5656 = vsub.f32 %v5654, %v5655
  %v5657 = vand.u32 %v5656, 4294901760
  %5658 = vmatpush.msra.mxu0 %v5657
  %v5659 = vand.u32 %v796, 4294901760
  %v5660 = vsub.f32 %v796, %v5659
  %v5661 = vand.u32 %v5660, 4294901760
  %v5662 = vsub.f32 %v5660, %v5661
  %v5663 = vand.u32 %v5662, 4294901760
  %5664 = vmatpush.msra.mxu0 %v5663
  %v5665 = vand.u32 %v794, 4294901760
  %v5666 = vsub.f32 %v794, %v5665
  %v5667 = vand.u32 %v5666, 4294901760
  %v5668 = vsub.f32 %v5666, %v5667
  %v5669 = vand.u32 %v5668, 4294901760
  %5670 = vmatpush.msra.mxu0 %v5669
  %v5671 = vand.u32 %v792, 4294901760
  %v5672 = vsub.f32 %v792, %v5671
  %v5673 = vand.u32 %v5672, 4294901760
  %v5674 = vsub.f32 %v5672, %v5673
  %v5675 = vand.u32 %v5674, 4294901760
  %5676 = vmatpush.msra.mxu0 %v5675
  %v5677 = vand.u32 %v5539, 4294901760
  %5678 = vmatmul.f32.gmra.mxu0 %v5677
  %v5679 = vpop.f32.mrf.mxu0
  %v5680 = vadd.f32 %v5579, %v5679
  %5681 = vdwg.mxu0
  %v5682 = vand.u32 %v822, 4294901760
  %v5683 = vsub.f32 %v822, %v5682
  %5684 = vmatpush.msra.mxu0 %v5683
  %v5685 = vand.u32 %v820, 4294901760
  %v5686 = vsub.f32 %v820, %v5685
  %5687 = vmatpush.msra.mxu0 %v5686
  %v5688 = vand.u32 %v818, 4294901760
  %v5689 = vsub.f32 %v818, %v5688
  %5690 = vmatpush.msra.mxu0 %v5689
  %v5691 = vand.u32 %v816, 4294901760
  %v5692 = vsub.f32 %v816, %v5691
  %5693 = vmatpush.msra.mxu0 %v5692
  %v5694 = vand.u32 %v814, 4294901760
  %v5695 = vsub.f32 %v814, %v5694
  %5696 = vmatpush.msra.mxu0 %v5695
  %v5697 = vand.u32 %v812, 4294901760
  %v5698 = vsub.f32 %v812, %v5697
  %5699 = vmatpush.msra.mxu0 %v5698
  %v5700 = vand.u32 %v810, 4294901760
  %v5701 = vsub.f32 %v810, %v5700
  %5702 = vmatpush.msra.mxu0 %v5701
  %v5703 = vand.u32 %v808, 4294901760
  %v5704 = vsub.f32 %v808, %v5703
  %5705 = vmatpush.msra.mxu0 %v5704
  %v5706 = vand.u32 %v806, 4294901760
  %v5707 = vsub.f32 %v806, %v5706
  %5708 = vmatpush.msra.mxu0 %v5707
  %v5709 = vand.u32 %v804, 4294901760
  %v5710 = vsub.f32 %v804, %v5709
  %5711 = vmatpush.msra.mxu0 %v5710
  %v5712 = vand.u32 %v802, 4294901760
  %v5713 = vsub.f32 %v802, %v5712
  %5714 = vmatpush.msra.mxu0 %v5713
  %v5715 = vand.u32 %v800, 4294901760
  %v5716 = vsub.f32 %v800, %v5715
  %5717 = vmatpush.msra.mxu0 %v5716
  %v5718 = vand.u32 %v798, 4294901760
  %v5719 = vsub.f32 %v798, %v5718
  %5720 = vmatpush.msra.mxu0 %v5719
  %v5721 = vand.u32 %v796, 4294901760
  %v5722 = vsub.f32 %v796, %v5721
  %5723 = vmatpush.msra.mxu0 %v5722
  %v5724 = vand.u32 %v794, 4294901760
  %v5725 = vsub.f32 %v794, %v5724
  %5726 = vmatpush.msra.mxu0 %v5725
  %v5727 = vand.u32 %v792, 4294901760
  %v5728 = vsub.f32 %v792, %v5727
  %5729 = vmatpush.msra.mxu0 %v5728
  %v5730 = vand.u32 %v5539, 4294901760
  %v5731 = vsub.f32 %v5539, %v5730
  %5732 = vmatmul.f32.gmra.mxu0 %v5731
  %v5733 = vpop.f32.mrf.mxu0
  %v5734 = vadd.f32 %v5680, %v5733
  %5735 = vdwg.mxu0
  %v5736 = vand.u32 %v822, 4294901760
  %5737 = vmatpush.msra.mxu0 %v5736
  %v5738 = vand.u32 %v820, 4294901760
  %5739 = vmatpush.msra.mxu0 %v5738
  %v5740 = vand.u32 %v818, 4294901760
  %5741 = vmatpush.msra.mxu0 %v5740
  %v5742 = vand.u32 %v816, 4294901760
  %5743 = vmatpush.msra.mxu0 %v5742
  %v5744 = vand.u32 %v814, 4294901760
  %5745 = vmatpush.msra.mxu0 %v5744
  %v5746 = vand.u32 %v812, 4294901760
  %5747 = vmatpush.msra.mxu0 %v5746
  %v5748 = vand.u32 %v810, 4294901760
  %5749 = vmatpush.msra.mxu0 %v5748
  %v5750 = vand.u32 %v808, 4294901760
  %5751 = vmatpush.msra.mxu0 %v5750
  %v5752 = vand.u32 %v806, 4294901760
  %5753 = vmatpush.msra.mxu0 %v5752
  %v5754 = vand.u32 %v804, 4294901760
  %5755 = vmatpush.msra.mxu0 %v5754
  %v5756 = vand.u32 %v802, 4294901760
  %5757 = vmatpush.msra.mxu0 %v5756
  %v5758 = vand.u32 %v800, 4294901760
  %5759 = vmatpush.msra.mxu0 %v5758
  %v5760 = vand.u32 %v798, 4294901760
  %5761 = vmatpush.msra.mxu0 %v5760
  %v5762 = vand.u32 %v796, 4294901760
  %5763 = vmatpush.msra.mxu0 %v5762
  %v5764 = vand.u32 %v794, 4294901760
  %5765 = vmatpush.msra.mxu0 %v5764
  %v5766 = vand.u32 %v792, 4294901760
  %5767 = vmatpush.msra.mxu0 %v5766
  %v5768 = vand.u32 %v5539, 4294901760
  %v5769 = vsub.f32 %v5539, %v5768
  %v5770 = vand.u32 %v5769, 4294901760
  %5771 = vmatmul.f32.gmra.mxu0 %v5770
  %v5772 = vpop.f32.mrf.mxu0
  %v5773 = vadd.f32 %v5734, %v5772
  %5774 = vdwg.mxu0
  %v5775 = vand.u32 %v822, 4294901760
  %v5776 = vsub.f32 %v822, %v5775
  %v5777 = vand.u32 %v5776, 4294901760
  %5778 = vmatpush.msra.mxu0 %v5777
  %v5779 = vand.u32 %v820, 4294901760
  %v5780 = vsub.f32 %v820, %v5779
  %v5781 = vand.u32 %v5780, 4294901760
  %5782 = vmatpush.msra.mxu0 %v5781
  %v5783 = vand.u32 %v818, 4294901760
  %v5784 = vsub.f32 %v818, %v5783
  %v5785 = vand.u32 %v5784, 4294901760
  %5786 = vmatpush.msra.mxu0 %v5785
  %v5787 = vand.u32 %v816, 4294901760
  %v5788 = vsub.f32 %v816, %v5787
  %v5789 = vand.u32 %v5788, 4294901760
  %5790 = vmatpush.msra.mxu0 %v5789
  %v5791 = vand.u32 %v814, 4294901760
  %v5792 = vsub.f32 %v814, %v5791
  %v5793 = vand.u32 %v5792, 4294901760
  %5794 = vmatpush.msra.mxu0 %v5793
  %v5795 = vand.u32 %v812, 4294901760
  %v5796 = vsub.f32 %v812, %v5795
  %v5797 = vand.u32 %v5796, 4294901760
  %5798 = vmatpush.msra.mxu0 %v5797
  %v5799 = vand.u32 %v810, 4294901760
  %v5800 = vsub.f32 %v810, %v5799
  %v5801 = vand.u32 %v5800, 4294901760
  %5802 = vmatpush.msra.mxu0 %v5801
  %v5803 = vand.u32 %v808, 4294901760
  %v5804 = vsub.f32 %v808, %v5803
  %v5805 = vand.u32 %v5804, 4294901760
  %5806 = vmatpush.msra.mxu0 %v5805
  %v5807 = vand.u32 %v806, 4294901760
  %v5808 = vsub.f32 %v806, %v5807
  %v5809 = vand.u32 %v5808, 4294901760
  %5810 = vmatpush.msra.mxu0 %v5809
  %v5811 = vand.u32 %v804, 4294901760
  %v5812 = vsub.f32 %v804, %v5811
  %v5813 = vand.u32 %v5812, 4294901760
  %5814 = vmatpush.msra.mxu0 %v5813
  %v5815 = vand.u32 %v802, 4294901760
  %v5816 = vsub.f32 %v802, %v5815
  %v5817 = vand.u32 %v5816, 4294901760
  %5818 = vmatpush.msra.mxu0 %v5817
  %v5819 = vand.u32 %v800, 4294901760
  %v5820 = vsub.f32 %v800, %v5819
  %v5821 = vand.u32 %v5820, 4294901760
  %5822 = vmatpush.msra.mxu0 %v5821
  %v5823 = vand.u32 %v798, 4294901760
  %v5824 = vsub.f32 %v798, %v5823
  %v5825 = vand.u32 %v5824, 4294901760
  %5826 = vmatpush.msra.mxu0 %v5825
  %v5827 = vand.u32 %v796, 4294901760
  %v5828 = vsub.f32 %v796, %v5827
  %v5829 = vand.u32 %v5828, 4294901760
  %5830 = vmatpush.msra.mxu0 %v5829
  %v5831 = vand.u32 %v794, 4294901760
  %v5832 = vsub.f32 %v794, %v5831
  %v5833 = vand.u32 %v5832, 4294901760
  %5834 = vmatpush.msra.mxu0 %v5833
  %v5835 = vand.u32 %v792, 4294901760
  %v5836 = vsub.f32 %v792, %v5835
  %v5837 = vand.u32 %v5836, 4294901760
  %5838 = vmatpush.msra.mxu0 %v5837
  %v5839 = vand.u32 %v5539, 4294901760
  %5840 = vmatmul.f32.gmra.mxu0 %v5839
  %v5841 = vpop.f32.mrf.mxu0
  %v5842 = vadd.f32 %v5773, %v5841
  %5843 = vdwg.mxu0
  %v5844 = vand.u32 %v822, 4294901760
  %5845 = vmatpush.msra.mxu0 %v5844
  %v5846 = vand.u32 %v820, 4294901760
  %5847 = vmatpush.msra.mxu0 %v5846
  %v5848 = vand.u32 %v818, 4294901760
  %5849 = vmatpush.msra.mxu0 %v5848
  %v5850 = vand.u32 %v816, 4294901760
  %5851 = vmatpush.msra.mxu0 %v5850
  %v5852 = vand.u32 %v814, 4294901760
  %5853 = vmatpush.msra.mxu0 %v5852
  %v5854 = vand.u32 %v812, 4294901760
  %5855 = vmatpush.msra.mxu0 %v5854
  %v5856 = vand.u32 %v810, 4294901760
  %5857 = vmatpush.msra.mxu0 %v5856
  %v5858 = vand.u32 %v808, 4294901760
  %5859 = vmatpush.msra.mxu0 %v5858
  %v5860 = vand.u32 %v806, 4294901760
  %5861 = vmatpush.msra.mxu0 %v5860
  %v5862 = vand.u32 %v804, 4294901760
  %5863 = vmatpush.msra.mxu0 %v5862
  %v5864 = vand.u32 %v802, 4294901760
  %5865 = vmatpush.msra.mxu0 %v5864
  %v5866 = vand.u32 %v800, 4294901760
  %5867 = vmatpush.msra.mxu0 %v5866
  %v5868 = vand.u32 %v798, 4294901760
  %5869 = vmatpush.msra.mxu0 %v5868
  %v5870 = vand.u32 %v796, 4294901760
  %5871 = vmatpush.msra.mxu0 %v5870
  %v5872 = vand.u32 %v794, 4294901760
  %5873 = vmatpush.msra.mxu0 %v5872
  %v5874 = vand.u32 %v792, 4294901760
  %5875 = vmatpush.msra.mxu0 %v5874
  %v5876 = vand.u32 %v5539, 4294901760
  %5877 = vmatmul.f32.gmra.mxu0 %v5876
  %v5878 = vpop.f32.mrf.mxu0
  %v5879 = vadd.f32 %v5842, %v5878
  %5880 = vdwg.mxu0
  %v5881 = vlog2.pop %v5879
  %v5882 = vmul.f32 %v5881, 0.6931472
  %v5883 = vadd.f32 %v5882, %v5536
  %v5884 = vadd.f32 %v5883, %v774
  %v5885 = vadd.f32 %v5884, %v5167
  %v5886 = vsel %vm5533, %v5885, %v5165
  %v5888 = vperm.slane %v737, 0
  %v5890 = vmul.f32 %v5534, %v5888
  %5891 = vadd.xlane.f32.xlu0 %v5890
  %v5892 = vpop.xlane.xlu0 %5891
  %v5893 = vadd.f32 %v5886, %v5888
  %5894 = vmax.xlane.f32.xlu0 %v5893
  %v5895 = vpop.xlane.xlu0 %5894
  %v5896 = vsub.f32 %v5893, %v5895
  %v5897 = vmul.f32 %v5896, 1.442695
  %v5898 = vpow.pop %v5897
  %5899 = vadd.xlane.f32.xlu0 %v5898
  %v5900 = vpop.xlane.xlu0 %5899
  %v5901 = vlog2.pop %v5900
  %v5902 = vmul.f32 %v5901, 0.6931472
  %v5903 = vadd.f32 %v5902, %v5895
  %v5904 = vadd.f32 %v5527, %v5892
  %v5905 = vsub.f32 %v5904, %v5903
  %5907 = vset.pattern.permute.xlu0 0
  %5908 = vperm.xlu0 %5907, %v5905
  %v5909 = vpop.permute.xlu0 %5908
  %5911 = vst [vmem:[%s8] sm:$0xff] %v5909
  // Predicated region
  $region34: #{crf_tagger_forward.1} parent=0 // pred_check
    _
  $region35: #{crf_tagger_forward.1} parent=0 // pred_check_branch
    %5913 = sbr.rel (0) target = $region37
  $region36: #{crf_tagger_forward.1} parent=0 // pred_region
    _
  $region37: #{crf_tagger_forward.1} parent=0 // pred_fallthru
    _
  // Predicated region
  $region38: #{crf_tagger_forward.1} parent=0 // pred_check
    _
  $region39: #{crf_tagger_forward.1} parent=0 // pred_check_branch
    %5915 = sbr.rel (0) target = $region41
  $region40: #{crf_tagger_forward.1} parent=0 // pred_region
    _
  $region41: #{crf_tagger_forward.1} parent=0 // pred_fallthru
    _

</llo_original>
